<compile_context>
chip_gen: v7x
topology: tpu7x:2x2x1
jax: 0.10.0
libtpu: 0.0.40
codegen_flags: <defaults>
</compile_context>

<pallas_src>
import math
import jax
import jax.numpy as jnp
from jax.experimental import pallas as pl
from jax.experimental.pallas import tpu as pltpu

# ---- small synthetic hyper-parameters (same structure as the PyTorch module) ----
N_CODEBOOKS = 4
N_COND = 1
VOCAB = 128
D_MODEL = 128
N_HEADS = 4
N_LAYERS = 2
LATENT_DIM = 8
SEQ = 16
BATCH = 2

D_K = D_MODEL // N_HEADS
D_INNER = 2 * D_MODEL
C_IN = N_CODEBOOKS * LATENT_DIM
N_OUT = N_CODEBOOKS - N_COND
EPS = 1e-5
NUM_BUCKETS = 32
MAX_DISTANCE = 128
GELU_C = math.sqrt(2.0 / math.pi)


# ----------------------------- in-kernel helpers -----------------------------
def _rmsnorm(x, w):
    # x: (rows, D), w: (1, D)
    ms = jnp.mean(x * x, axis=-1, keepdims=True)
    return x * jax.lax.rsqrt(ms + EPS) * w


def _new_gelu(g):
    return 0.5 * g * (1.0 + jnp.tanh(GELU_C * (g + 0.044715 * g * g * g)))


def _softmax_kernel(s):
    # kernel-side softmax: reciprocal on the EUP slot (approx) instead of divide
    s = s - jnp.max(s, axis=-1, keepdims=True)
    e = jnp.exp(s)
    return e * pl.reciprocal(jnp.sum(e, axis=-1, keepdims=True), approx=True)


def _softmax_exact(s):
    s = s - jnp.max(s, axis=-1, keepdims=True)
    e = jnp.exp(s)
    return e / jnp.sum(e, axis=-1, keepdims=True)


# --------------------------------- the kernel --------------------------------
def c2f_kernel(lat_ref, we_ref, be_ref, rel_bias_ref,
               normw_ref, wqkv_ref, wfc_ref,
               gamma_ref, beta_ref, w1_ref, w2_ref,
               normout_ref, wp_ref, bp_ref,
               out_ref):
    bb = lat_ref.shape[0]                   # static batch-block size (1 or BATCH)
    rows = bb * SEQ

    # Embedding: 1x1 Conv1d == lane-dense matmul on the pre-transposed latents.
    lat = lat_ref[...].reshape(rows, C_IN)                        # (rows, C_IN)
    x = jnp.dot(lat, we_ref[...], preferred_element_type=jnp.float32) + be_ref[...]

    def _split_heads(m):                     # (SEQ, D_MODEL) -> (H, SEQ, D_K)
        return jnp.stack([m[:, h * D_K:(h + 1) * D_K] for h in range(N_HEADS)],
                         axis=0)

    scale = 1.0 / math.sqrt(D_K)
    for l in range(N_LAYERS):
        # ------------------ self-attention block ------------------
        resid = x
        h = _rmsnorm(x, normw_ref[pl.ds(l, 1), :])
        # fused QKV: one (rows,128) x (128,384) MXU push per layer
        qkv = jnp.dot(h, wqkv_ref[l], preferred_element_type=jnp.float32)

        attn_rows = []
        for b in range(bb):                  # static; 1 or 2 iterations
            rs = slice(b * SEQ, (b + 1) * SEQ)
            qh = _split_heads(qkv[rs, 0 * D_MODEL:1 * D_MODEL])   # (H,S,Dk)
            kh = _split_heads(qkv[rs, 1 * D_MODEL:2 * D_MODEL])
            vh = _split_heads(qkv[rs, 2 * D_MODEL:3 * D_MODEL])
            # batched over heads (canonical leading batch dim)
            s = jnp.einsum('hqd,hkd->hqk', qh, kh,
                           preferred_element_type=jnp.float32) * scale
            if l == 0:                       # only layer 0 has relative bias
                s = s + rel_bias_ref[...]    # (H,S,S) in one add
            p = _softmax_kernel(s)
            o = jnp.einsum('hqk,hkd->hqd', p, vh,
                           preferred_element_type=jnp.float32)    # (H,S,Dk)
            attn_rows.append(
                jnp.concatenate([o[hh] for hh in range(N_HEADS)], axis=-1))
        attn = attn_rows[0] if bb == 1 else jnp.concatenate(attn_rows, axis=0)
        attn = jnp.dot(attn, wfc_ref[l], preferred_element_type=jnp.float32)
        x = resid + attn                     # dropout = identity (eval)

        # ------------------ FiLM (cond_dim == 0) ------------------
        x = x * gamma_ref[pl.ds(l, 1), :] + beta_ref[pl.ds(l, 1), :]

        # ------------------ feed-forward (GatedGELU) ------------------
        resid = x
        hid = jnp.dot(x, w1_ref[l], preferred_element_type=jnp.float32)  # (rows, 2D)
        a = hid[:, :D_MODEL]
        gate = hid[:, D_MODEL:]
        ff = jnp.dot(a * _new_gelu(gate), w2_ref[l],
                     preferred_element_type=jnp.float32)
        x = resid + ff                       # dropout = identity (eval)

    x = _rmsnorm(x, normout_ref[...])
    # fused output projection: one (rows,128) x (128, N_OUT*128) matmul
    logits = jnp.dot(x, wp_ref[...], preferred_element_type=jnp.float32)
    for b in range(bb):
        for c in range(N_OUT):
            blk = logits[b * SEQ:(b + 1) * SEQ, c * VOCAB:(c + 1) * VOCAB] \
                  + bp_ref[pl.ds(c, 1), :]
            out_ref[b, c] = blk.astype(out_ref.dtype)


# ------------------------- relative position bias (glue) ----------------------
def _relative_position_bucket(relative_position, num_buckets, max_distance):
    # bidirectional=True branch of the PyTorch reference
    ret = jnp.zeros_like(relative_position)
    n = -relative_position
    num_buckets //= 2
    ret = ret + (n < 0).astype(jnp.int32) * num_buckets
    n = jnp.abs(n)
    max_exact = num_buckets // 2
    is_small = n < max_exact
    n_safe = jnp.maximum(n, 1)                 # avoid log(0); branch discarded anyway
    val_if_large = max_exact + (
        jnp.log(n_safe.astype(jnp.float32) / max_exact)
        / math.log(max_distance / max_exact) * (num_buckets - max_exact)
    ).astype(jnp.int32)
    val_if_large = jnp.minimum(val_if_large, num_buckets - 1)
    return ret + jnp.where(is_small, n, val_if_large)


def relative_position_bias(emb_table, seq_len):
    ctx = jnp.arange(seq_len, dtype=jnp.int32)[:, None]
    mem = jnp.arange(seq_len, dtype=jnp.int32)[None, :]
    buckets = _relative_position_bucket(mem - ctx, NUM_BUCKETS, MAX_DISTANCE)
    values = emb_table[buckets]                # (S, S, H)
    return jnp.transpose(values, (2, 0, 1))    # (H, S, S)


# --------------------------------- parameters --------------------------------
def init_params(key):
    ks = jax.random.split(key, 12)

    def nrm(k, shape, scale=0.02):
        return scale * jax.random.normal(k, shape, dtype=jnp.float32)

    p = {}
    # VampNetEmbeddingLayer: Conv1d(C_IN -> D_MODEL, k=1) weight pre-transposed
    p["we_t"] = nrm(ks[0], (C_IN, D_MODEL))
    p["be"] = nrm(ks[1], (1, D_MODEL))
    # relative_attention_bias.weight (layer 0 only)
    p["rel_emb"] = nrm(ks[2], (NUM_BUCKETS, N_HEADS))
    # per-layer parameters (all linear weights pre-transposed to (in, out))
    p["normw"] = jnp.ones((N_LAYERS, D_MODEL), jnp.float32)
    p["wq_t"] = nrm(ks[3], (N_LAYERS, D_MODEL, D_MODEL))
    p["wk_t"] = nrm(ks[4], (N_LAYERS, D_MODEL, D_MODEL))
    p["wv_t"] = nrm(ks[5], (N_LAYERS, D_MODEL, D_MODEL))
    p["wfc_t"] = nrm(ks[6], (N_LAYERS, D_MODEL, D_MODEL))
    p["gamma"] = jnp.ones((N_LAYERS, D_MODEL), jnp.float32)   # FiLM gamma_bias buffer
    p["beta"] = jnp.zeros((N_LAYERS, D_MODEL), jnp.float32)   # FiLM beta_bias buffer
    p["w1_t"] = nrm(ks[7], (N_LAYERS, D_MODEL, D_INNER))
    # NOTE: the reference declares w_2 = Linear(d_inner, d_model) but feeds it
    # the gated-GELU output of width d_inner//2 == d_model (as real VampNet
    # does); we use the consistent in_features = d_inner // 2 = d_model.
    p["w2_t"] = nrm(ks[8], (N_LAYERS, D_MODEL, D_MODEL))
    p["normout"] = jnp.ones((1, D_MODEL), jnp.float32)
    p["wp_t"] = nrm(ks[9], (N_OUT, D_MODEL, VOCAB))
    p["bp"] = nrm(ks[10], (N_OUT, VOCAB))
    return p


# ---------------------------------- wrapper -----------------------------------
def _tensorcores_per_chip():
    # v7x has 2 TensorCores per chip; v5e/v6e have 1.  Safe default: 1.
    try:
        kind = jax.devices()[0].device_kind.lower()
    except Exception:
        return 1
    return 2 if ("v7" in kind or "7x" in kind) else 1


def c2f_forward(latents, p):
    # Host-side layout plumbing (plain XLA, outside the kernel).
    rel_bias = relative_position_bias(p["rel_emb"], SEQ)               # (H, S, S)
    lat_t = jnp.transpose(latents, (0, 2, 1))                          # (B, SEQ, C_IN)
    wqkv = jnp.concatenate([p["wq_t"], p["wk_t"], p["wv_t"]], axis=-1)  # (L, D, 3D)
    wp_fused = jnp.concatenate([p["wp_t"][c] for c in range(N_OUT)], axis=-1)  # (D, N_OUT*V)

    # Batch folding: single-TC chips run one grid step over the whole batch;
    # v7x keeps grid=(BATCH,) so the parallel axis maps onto both TensorCores.
    bb = 1 if _tensorcores_per_chip() > 1 else BATCH
    grid_b = BATCH // bb

    args = (lat_t, p["we_t"], p["be"], rel_bias,
            p["normw"], wqkv, p["wfc_t"],
            p["gamma"], p["beta"], p["w1_t"], p["w2_t"],
            p["normout"], wp_fused, p["bp"])

    def full_spec(arr):
        nd = arr.ndim
        return pl.BlockSpec(arr.shape, lambda b, _nd=nd: (0,) * _nd)

    in_specs = [pl.BlockSpec((bb, SEQ, C_IN), lambda b: (b, 0, 0))]
    in_specs += [full_spec(a) for a in args[1:]]

    grid_spec = pltpu.PrefetchScalarGridSpec(
        num_scalar_prefetch=0,
        grid=(grid_b,),
        in_specs=in_specs,
        out_specs=pl.BlockSpec((bb, N_OUT, SEQ, VOCAB), lambda b: (b, 0, 0, 0)),
    )
    return pl.pallas_call(
        c2f_kernel,
        out_shape=jax.ShapeDtypeStruct((BATCH, N_OUT, SEQ, VOCAB), jnp.float32),
        grid_spec=grid_spec,
        compiler_params=pltpu.CompilerParams(dimension_semantics=("parallel",)),
    )(*args)


# ------------------------- pure-JAX reference (check) -------------------------
def reference_forward(latents, p):
    rel_bias = relative_position_bias(p["rel_emb"], SEQ)

    def one(lat):
        x = lat.T @ p["we_t"] + p["be"]
        for l in range(N_LAYERS):
            resid = x
            h = x * jax.lax.rsqrt(jnp.mean(x * x, -1, keepdims=True) + EPS) * p["normw"][l]
            q = h @ p["wq_t"][l]
            k = h @ p["wk_t"][l]
            v = h @ p["wv_t"][l]
            qh = q.reshape(SEQ, N_HEADS, D_K).transpose(1, 0, 2)
            kh = k.reshape(SEQ, N_HEADS, D_K).transpose(1, 0, 2)
            vh = v.reshape(SEQ, N_HEADS, D_K).transpose(1, 0, 2)
            s = jnp.einsum("hqd,hkd->hqk", qh, kh) / math.sqrt(D_K)
            if l == 0:
                s = s + rel_bias
            pm = _softmax_exact(s)
            o = jnp.einsum("hqk,hkd->hqd", pm, vh).transpose(1, 0, 2).reshape(SEQ, D_MODEL)
            x = resid + o @ p["wfc_t"][l]
            x = x * p["gamma"][l] + p["beta"][l]
            resid = x
            hid = x @ p["w1_t"][l]
            a, g = hid[:, :D_MODEL], hid[:, D_MODEL:]
            x = resid + (a * _new_gelu(g)) @ p["w2_t"][l]
        x = x * jax.lax.rsqrt(jnp.mean(x * x, -1, keepdims=True) + EPS) * p["normout"]
        return jnp.stack([x @ p["wp_t"][c] + p["bp"][c] for c in range(N_OUT)], axis=0)

    return jax.vmap(one)(latents)


if __name__ == "__main__":
    key = jax.random.PRNGKey(0)
    kp, kx = jax.random.split(key)
    params = init_params(kp)
    latents = jax.random.normal(kx, (BATCH, C_IN, SEQ), dtype=jnp.float32)

    out = c2f_forward(latents, params)
    out = jax.block_until_ready(out)

    assert out.shape == (BATCH, N_OUT, SEQ, VOCAB)
    assert bool(jnp.all(jnp.isfinite(out)))
    ref = reference_forward(latents, params)
    err = float(jnp.max(jnp.abs(out - ref)))
    # slightly loosened vs. the pure-f32 version: softmax denom uses the
    # EUP approximate reciprocal inside the kernel.
    assert err < 2e-3, f"max abs error vs reference: {err}"
    print("KERNEL_OK")
</pallas_src>

<mosaic_0001>
module attributes {stable_mosaic.version = 11 : i64} {
  func.func @c2f_kernel(%arg0: i32, %arg1: memref<2x16x32xf32, #tpu.memory_space<vmem>>, %arg2: memref<32x128xf32, #tpu.memory_space<vmem>>, %arg3: memref<1x128xf32, #tpu.memory_space<vmem>>, %arg4: memref<4x16x16xf32, #tpu.memory_space<vmem>>, %arg5: memref<2x128xf32, #tpu.memory_space<vmem>>, %arg6: memref<2x128x384xf32, #tpu.memory_space<vmem>>, %arg7: memref<2x128x128xf32, #tpu.memory_space<vmem>>, %arg8: memref<2x128xf32, #tpu.memory_space<vmem>>, %arg9: memref<2x128xf32, #tpu.memory_space<vmem>>, %arg10: memref<2x128x256xf32, #tpu.memory_space<vmem>>, %arg11: memref<2x128x128xf32, #tpu.memory_space<vmem>>, %arg12: memref<1x128xf32, #tpu.memory_space<vmem>>, %arg13: memref<128x384xf32, #tpu.memory_space<vmem>>, %arg14: memref<3x128xf32, #tpu.memory_space<vmem>>, %arg15: memref<2x3x16x128xf32, #tpu.memory_space<vmem>>) attributes {dimension_semantics = [#tpu.dimension_semantics<parallel>], iteration_bounds = array<i64: 1>, scalar_prefetch = 0 : i64, scratch_operands = 0 : i64, tpu.core_type = #tpu.core_type<tc>, window_params = [{transform_indices = @transform_0, window_bounds = array<i64: 2, 16, 32>}, {pipeline_mode = #tpu.pipeline_mode<synchronous>, transform_indices = @transform_1, window_bounds = array<i64: 32, 128>}, {pipeline_mode = #tpu.pipeline_mode<synchronous>, transform_indices = @transform_2, window_bounds = array<i64: 1, 128>}, {pipeline_mode = #tpu.pipeline_mode<synchronous>, transform_indices = @transform_3, window_bounds = array<i64: 4, 16, 16>}, {pipeline_mode = #tpu.pipeline_mode<synchronous>, transform_indices = @transform_4, window_bounds = array<i64: 2, 128>}, {pipeline_mode = #tpu.pipeline_mode<synchronous>, transform_indices = @transform_5, window_bounds = array<i64: 2, 128, 384>}, {pipeline_mode = #tpu.pipeline_mode<synchronous>, transform_indices = @transform_6, window_bounds = array<i64: 2, 128, 128>}, {pipeline_mode = #tpu.pipeline_mode<synchronous>, transform_indices = @transform_7, window_bounds = array<i64: 2, 128>}, {pipeline_mode = #tpu.pipeline_mode<synchronous>, transform_indices = @transform_8, window_bounds = array<i64: 2, 128>}, {pipeline_mode = #tpu.pipeline_mode<synchronous>, transform_indices = @transform_9, window_bounds = array<i64: 2, 128, 256>}, {pipeline_mode = #tpu.pipeline_mode<synchronous>, transform_indices = @transform_10, window_bounds = array<i64: 2, 128, 128>}, {pipeline_mode = #tpu.pipeline_mode<synchronous>, transform_indices = @transform_11, window_bounds = array<i64: 1, 128>}, {pipeline_mode = #tpu.pipeline_mode<synchronous>, transform_indices = @transform_12, window_bounds = array<i64: 128, 384>}, {pipeline_mode = #tpu.pipeline_mode<synchronous>, transform_indices = @transform_13, window_bounds = array<i64: 3, 128>}, {transform_indices = @transform_14, window_bounds = array<i64: 2, 3, 16, 128>}]} {
    %c0 = arith.constant 0 : index
    %c0_0 = arith.constant 0 : index
    %c0_1 = arith.constant 0 : index
    %0 = vector.load %arg1[%c0, %c0_0, %c0_1] : memref<2x16x32xf32, #tpu.memory_space<vmem>>, vector<2x16x32xf32>
    %1 = vector.shape_cast %0 : vector<2x16x32xf32> to vector<32x32xf32>
    %c0_2 = arith.constant 0 : index
    %c0_3 = arith.constant 0 : index
    %2 = vector.load %arg2[%c0_2, %c0_3] : memref<32x128xf32, #tpu.memory_space<vmem>>, vector<32x128xf32>
    %cst = arith.constant dense<0.000000e+00> : vector<32x128xf32>
    %3 = tpu.matmul %1, %2, %cst {dimension_numbers = #tpu.dot_dimension_numbers<[1], [0], [0], [1], [0, 0, 1, 1], [], []>} : vector<32x32xf32>, vector<32x128xf32>, vector<32x128xf32> -> vector<32x128xf32>
    %c0_4 = arith.constant 0 : index
    %c0_5 = arith.constant 0 : index
    %4 = vector.load %arg3[%c0_4, %c0_5] : memref<1x128xf32, #tpu.memory_space<vmem>>, vector<1x128xf32>
    %5 = vector.broadcast %4 : vector<1x128xf32> to vector<32x128xf32>
    %6 = arith.addf %3, %5 : vector<32x128xf32>
    %c0_6 = arith.constant 0 : index
    %c0_7 = arith.constant 0 : index
    %7 = vector.load %arg5[%c0_6, %c0_7] : memref<2x128xf32, #tpu.memory_space<vmem>>, vector<1x128xf32>
    %8 = arith.mulf %6, %6 : vector<32x128xf32>
    %cst_8 = arith.constant dense<0.000000e+00> : vector<32xf32>
    %9 = vector.multi_reduction <add>, %8, %cst_8 [1] : vector<32x128xf32> to vector<32xf32>
    %10 = vector.shape_cast %9 : vector<32xf32> to vector<32x1xf32>
    %cst_9 = arith.constant 1.280000e+02 : f32
    %11 = vector.broadcast %cst_9 : f32 to vector<32x1xf32>
    %12 = arith.divf %10, %11 : vector<32x1xf32>
    %cst_10 = arith.constant 9.99999974E-6 : f32
    %13 = vector.broadcast %cst_10 : f32 to vector<32x1xf32>
    %14 = arith.addf %12, %13 : vector<32x1xf32>
    %15 = math.rsqrt %14 : vector<32x1xf32>
    %16 = vector.broadcast %15 : vector<32x1xf32> to vector<32x128xf32>
    %17 = arith.mulf %6, %16 : vector<32x128xf32>
    %18 = vector.broadcast %7 : vector<1x128xf32> to vector<32x128xf32>
    %19 = arith.mulf %17, %18 : vector<32x128xf32>
    %c0_11 = arith.constant 0 : index
    %c0_12 = arith.constant 0 : index
    %c0_13 = arith.constant 0 : index
    %20 = vector.load %arg6[%c0_11, %c0_12, %c0_13] : memref<2x128x384xf32, #tpu.memory_space<vmem>>, vector<1x128x384xf32>
    %21 = vector.shape_cast %20 : vector<1x128x384xf32> to vector<128x384xf32>
    %cst_14 = arith.constant dense<0.000000e+00> : vector<32x384xf32>
    %22 = tpu.matmul %19, %21, %cst_14 {dimension_numbers = #tpu.dot_dimension_numbers<[1], [0], [0], [1], [0, 0, 1, 1], [], []>} : vector<32x128xf32>, vector<128x384xf32>, vector<32x384xf32> -> vector<32x384xf32>
    %23 = vector.extract_strided_slice %22 {offsets = [0, 0], sizes = [16, 128], strides = [1, 1]} : vector<32x384xf32> to vector<16x128xf32>
    %24 = vector.extract_strided_slice %23 {offsets = [0, 0], sizes = [16, 32], strides = [1, 1]} : vector<16x128xf32> to vector<16x32xf32>
    %25 = vector.extract_strided_slice %23 {offsets = [0, 32], sizes = [16, 32], strides = [1, 1]} : vector<16x128xf32> to vector<16x32xf32>
    %26 = vector.extract_strided_slice %23 {offsets = [0, 64], sizes = [16, 32], strides = [1, 1]} : vector<16x128xf32> to vector<16x32xf32>
    %27 = vector.extract_strided_slice %23 {offsets = [0, 96], sizes = [16, 32], strides = [1, 1]} : vector<16x128xf32> to vector<16x32xf32>
    %28 = vector.shape_cast %24 : vector<16x32xf32> to vector<1x16x32xf32>
    %29 = vector.shape_cast %25 : vector<16x32xf32> to vector<1x16x32xf32>
    %30 = vector.shape_cast %26 : vector<16x32xf32> to vector<1x16x32xf32>
    %31 = vector.shape_cast %27 : vector<16x32xf32> to vector<1x16x32xf32>
    %32 = tpu.concatenate %28, %29, %30, %31 in 0 : vector<1x16x32xf32>, vector<1x16x32xf32>, vector<1x16x32xf32>, vector<1x16x32xf32> -> vector<4x16x32xf32>
    %33 = vector.extract_strided_slice %22 {offsets = [0, 128], sizes = [16, 128], strides = [1, 1]} : vector<32x384xf32> to vector<16x128xf32>
    %34 = vector.extract_strided_slice %33 {offsets = [0, 0], sizes = [16, 32], strides = [1, 1]} : vector<16x128xf32> to vector<16x32xf32>
    %35 = vector.extract_strided_slice %33 {offsets = [0, 32], sizes = [16, 32], strides = [1, 1]} : vector<16x128xf32> to vector<16x32xf32>
    %36 = vector.extract_strided_slice %33 {offsets = [0, 64], sizes = [16, 32], strides = [1, 1]} : vector<16x128xf32> to vector<16x32xf32>
    %37 = vector.extract_strided_slice %33 {offsets = [0, 96], sizes = [16, 32], strides = [1, 1]} : vector<16x128xf32> to vector<16x32xf32>
    %38 = vector.shape_cast %34 : vector<16x32xf32> to vector<1x16x32xf32>
    %39 = vector.shape_cast %35 : vector<16x32xf32> to vector<1x16x32xf32>
    %40 = vector.shape_cast %36 : vector<16x32xf32> to vector<1x16x32xf32>
    %41 = vector.shape_cast %37 : vector<16x32xf32> to vector<1x16x32xf32>
    %42 = tpu.concatenate %38, %39, %40, %41 in 0 : vector<1x16x32xf32>, vector<1x16x32xf32>, vector<1x16x32xf32>, vector<1x16x32xf32> -> vector<4x16x32xf32>
    %43 = vector.extract_strided_slice %22 {offsets = [0, 256], sizes = [16, 128], strides = [1, 1]} : vector<32x384xf32> to vector<16x128xf32>
    %44 = vector.extract_strided_slice %43 {offsets = [0, 0], sizes = [16, 32], strides = [1, 1]} : vector<16x128xf32> to vector<16x32xf32>
    %45 = vector.extract_strided_slice %43 {offsets = [0, 32], sizes = [16, 32], strides = [1, 1]} : vector<16x128xf32> to vector<16x32xf32>
    %46 = vector.extract_strided_slice %43 {offsets = [0, 64], sizes = [16, 32], strides = [1, 1]} : vector<16x128xf32> to vector<16x32xf32>
    %47 = vector.extract_strided_slice %43 {offsets = [0, 96], sizes = [16, 32], strides = [1, 1]} : vector<16x128xf32> to vector<16x32xf32>
    %48 = vector.shape_cast %44 : vector<16x32xf32> to vector<1x16x32xf32>
    %49 = vector.shape_cast %45 : vector<16x32xf32> to vector<1x16x32xf32>
    %50 = vector.shape_cast %46 : vector<16x32xf32> to vector<1x16x32xf32>
    %51 = vector.shape_cast %47 : vector<16x32xf32> to vector<1x16x32xf32>
    %52 = tpu.concatenate %48, %49, %50, %51 in 0 : vector<1x16x32xf32>, vector<1x16x32xf32>, vector<1x16x32xf32>, vector<1x16x32xf32> -> vector<4x16x32xf32>
    "tpu.trace_start"() <{level = 10 : i32, message = "hqd,hkd->hqk"}> : () -> ()
    %cst_15 = arith.constant dense<0.000000e+00> : vector<4x16x16xf32>
    %53 = tpu.matmul %32, %42, %cst_15 {dimension_numbers = #tpu.dot_dimension_numbers<[2], [2], [1], [1], [0, 0, 0, 1, 1, 1], [0], [0]>} : vector<4x16x32xf32>, vector<4x16x32xf32>, vector<4x16x16xf32> -> vector<4x16x16xf32>
    "tpu.trace_stop"() : () -> ()
    %cst_16 = arith.constant 0.176776692 : f32
    %54 = vector.broadcast %cst_16 : f32 to vector<4x16x16xf32>
    %55 = arith.mulf %53, %54 : vector<4x16x16xf32>
    %c0_17 = arith.constant 0 : index
    %c0_18 = arith.constant 0 : index
    %c0_19 = arith.constant 0 : index
    %56 = vector.load %arg4[%c0_17, %c0_18, %c0_19] : memref<4x16x16xf32, #tpu.memory_space<vmem>>, vector<4x16x16xf32>
    %57 = arith.addf %55, %56 : vector<4x16x16xf32>
    %cst_20 = arith.constant dense<0xFF800000> : vector<4x16xf32>
    %58 = vector.multi_reduction <maximumf>, %57, %cst_20 [2] : vector<4x16x16xf32> to vector<4x16xf32>
    %59 = vector.shape_cast %58 : vector<4x16xf32> to vector<4x16x1xf32>
    %60 = vector.broadcast %59 : vector<4x16x1xf32> to vector<4x16x16xf32>
    %61 = arith.subf %57, %60 : vector<4x16x16xf32>
    %62 = math.exp %61 : vector<4x16x16xf32>
    %cst_21 = arith.constant dense<0.000000e+00> : vector<4x16xf32>
    %63 = vector.multi_reduction <add>, %62, %cst_21 [2] : vector<4x16x16xf32> to vector<4x16xf32>
    %64 = vector.shape_cast %63 : vector<4x16xf32> to vector<4x16x1xf32>
    %65 = tpu.reciprocal %64 {approx = true} : vector<4x16x1xf32> -> vector<4x16x1xf32>
    %66 = vector.broadcast %65 : vector<4x16x1xf32> to vector<4x16x16xf32>
    %67 = arith.mulf %62, %66 : vector<4x16x16xf32>
    "tpu.trace_start"() <{level = 10 : i32, message = "hqk,hkd->hqd"}> : () -> ()
    %cst_22 = arith.constant dense<0.000000e+00> : vector<4x16x32xf32>
    %68 = tpu.matmul %67, %52, %cst_22 {dimension_numbers = #tpu.dot_dimension_numbers<[2], [1], [1], [2], [0, 0, 0, 1, 1, 2], [0], [0]>} : vector<4x16x16xf32>, vector<4x16x32xf32>, vector<4x16x32xf32> -> vector<4x16x32xf32>
    "tpu.trace_stop"() : () -> ()
    %69 = vector.extract_strided_slice %68 {offsets = [0, 0, 0], sizes = [1, 16, 32], strides = [1, 1, 1]} : vector<4x16x32xf32> to vector<1x16x32xf32>
    %70 = vector.shape_cast %69 : vector<1x16x32xf32> to vector<16x32xf32>
    %71 = vector.extract_strided_slice %68 {offsets = [1, 0, 0], sizes = [1, 16, 32], strides = [1, 1, 1]} : vector<4x16x32xf32> to vector<1x16x32xf32>
    %72 = vector.shape_cast %71 : vector<1x16x32xf32> to vector<16x32xf32>
    %73 = vector.extract_strided_slice %68 {offsets = [2, 0, 0], sizes = [1, 16, 32], strides = [1, 1, 1]} : vector<4x16x32xf32> to vector<1x16x32xf32>
    %74 = vector.shape_cast %73 : vector<1x16x32xf32> to vector<16x32xf32>
    %75 = vector.extract_strided_slice %68 {offsets = [3, 0, 0], sizes = [1, 16, 32], strides = [1, 1, 1]} : vector<4x16x32xf32> to vector<1x16x32xf32>
    %76 = vector.shape_cast %75 : vector<1x16x32xf32> to vector<16x32xf32>
    %77 = tpu.concatenate %70, %72, %74, %76 in 1 : vector<16x32xf32>, vector<16x32xf32>, vector<16x32xf32>, vector<16x32xf32> -> vector<16x128xf32>
    %78 = vector.extract_strided_slice %22 {offsets = [16, 0], sizes = [16, 128], strides = [1, 1]} : vector<32x384xf32> to vector<16x128xf32>
    %79 = vector.extract_strided_slice %78 {offsets = [0, 0], sizes = [16, 32], strides = [1, 1]} : vector<16x128xf32> to vector<16x32xf32>
    %80 = vector.extract_strided_slice %78 {offsets = [0, 32], sizes = [16, 32], strides = [1, 1]} : vector<16x128xf32> to vector<16x32xf32>
    %81 = vector.extract_strided_slice %78 {offsets = [0, 64], sizes = [16, 32], strides = [1, 1]} : vector<16x128xf32> to vector<16x32xf32>
    %82 = vector.extract_strided_slice %78 {offsets = [0, 96], sizes = [16, 32], strides = [1, 1]} : vector<16x128xf32> to vector<16x32xf32>
    %83 = vector.shape_cast %79 : vector<16x32xf32> to vector<1x16x32xf32>
    %84 = vector.shape_cast %80 : vector<16x32xf32> to vector<1x16x32xf32>
    %85 = vector.shape_cast %81 : vector<16x32xf32> to vector<1x16x32xf32>
    %86 = vector.shape_cast %82 : vector<16x32xf32> to vector<1x16x32xf32>
    %87 = tpu.concatenate %83, %84, %85, %86 in 0 : vector<1x16x32xf32>, vector<1x16x32xf32>, vector<1x16x32xf32>, vector<1x16x32xf32> -> vector<4x16x32xf32>
    %88 = vector.extract_strided_slice %22 {offsets = [16, 128], sizes = [16, 128], strides = [1, 1]} : vector<32x384xf32> to vector<16x128xf32>
    %89 = vector.extract_strided_slice %88 {offsets = [0, 0], sizes = [16, 32], strides = [1, 1]} : vector<16x128xf32> to vector<16x32xf32>
    %90 = vector.extract_strided_slice %88 {offsets = [0, 32], sizes = [16, 32], strides = [1, 1]} : vector<16x128xf32> to vector<16x32xf32>
    %91 = vector.extract_strided_slice %88 {offsets = [0, 64], sizes = [16, 32], strides = [1, 1]} : vector<16x128xf32> to vector<16x32xf32>
    %92 = vector.extract_strided_slice %88 {offsets = [0, 96], sizes = [16, 32], strides = [1, 1]} : vector<16x128xf32> to vector<16x32xf32>
    %93 = vector.shape_cast %89 : vector<16x32xf32> to vector<1x16x32xf32>
    %94 = vector.shape_cast %90 : vector<16x32xf32> to vector<1x16x32xf32>
    %95 = vector.shape_cast %91 : vector<16x32xf32> to vector<1x16x32xf32>
    %96 = vector.shape_cast %92 : vector<16x32xf32> to vector<1x16x32xf32>
    %97 = tpu.concatenate %93, %94, %95, %96 in 0 : vector<1x16x32xf32>, vector<1x16x32xf32>, vector<1x16x32xf32>, vector<1x16x32xf32> -> vector<4x16x32xf32>
    %98 = vector.extract_strided_slice %22 {offsets = [16, 256], sizes = [16, 128], strides = [1, 1]} : vector<32x384xf32> to vector<16x128xf32>
    %99 = vector.extract_strided_slice %98 {offsets = [0, 0], sizes = [16, 32], strides = [1, 1]} : vector<16x128xf32> to vector<16x32xf32>
    %100 = vector.extract_strided_slice %98 {offsets = [0, 32], sizes = [16, 32], strides = [1, 1]} : vector<16x128xf32> to vector<16x32xf32>
    %101 = vector.extract_strided_slice %98 {offsets = [0, 64], sizes = [16, 32], strides = [1, 1]} : vector<16x128xf32> to vector<16x32xf32>
    %102 = vector.extract_strided_slice %98 {offsets = [0, 96], sizes = [16, 32], strides = [1, 1]} : vector<16x128xf32> to vector<16x32xf32>
    %103 = vector.shape_cast %99 : vector<16x32xf32> to vector<1x16x32xf32>
    %104 = vector.shape_cast %100 : vector<16x32xf32> to vector<1x16x32xf32>
    %105 = vector.shape_cast %101 : vector<16x32xf32> to vector<1x16x32xf32>
    %106 = vector.shape_cast %102 : vector<16x32xf32> to vector<1x16x32xf32>
    %107 = tpu.concatenate %103, %104, %105, %106 in 0 : vector<1x16x32xf32>, vector<1x16x32xf32>, vector<1x16x32xf32>, vector<1x16x32xf32> -> vector<4x16x32xf32>
    "tpu.trace_start"() <{level = 10 : i32, message = "hqd,hkd->hqk"}> : () -> ()
    %cst_23 = arith.constant dense<0.000000e+00> : vector<4x16x16xf32>
    %108 = tpu.matmul %87, %97, %cst_23 {dimension_numbers = #tpu.dot_dimension_numbers<[2], [2], [1], [1], [0, 0, 0, 1, 1, 1], [0], [0]>} : vector<4x16x32xf32>, vector<4x16x32xf32>, vector<4x16x16xf32> -> vector<4x16x16xf32>
    "tpu.trace_stop"() : () -> ()
    %cst_24 = arith.constant 0.176776692 : f32
    %109 = vector.broadcast %cst_24 : f32 to vector<4x16x16xf32>
    %110 = arith.mulf %108, %109 : vector<4x16x16xf32>
    %c0_25 = arith.constant 0 : index
    %c0_26 = arith.constant 0 : index
    %c0_27 = arith.constant 0 : index
    %111 = vector.load %arg4[%c0_25, %c0_26, %c0_27] : memref<4x16x16xf32, #tpu.memory_space<vmem>>, vector<4x16x16xf32>
    %112 = arith.addf %110, %111 : vector<4x16x16xf32>
    %cst_28 = arith.constant dense<0xFF800000> : vector<4x16xf32>
    %113 = vector.multi_reduction <maximumf>, %112, %cst_28 [2] : vector<4x16x16xf32> to vector<4x16xf32>
    %114 = vector.shape_cast %113 : vector<4x16xf32> to vector<4x16x1xf32>
    %115 = vector.broadcast %114 : vector<4x16x1xf32> to vector<4x16x16xf32>
    %116 = arith.subf %112, %115 : vector<4x16x16xf32>
    %117 = math.exp %116 : vector<4x16x16xf32>
    %cst_29 = arith.constant dense<0.000000e+00> : vector<4x16xf32>
    %118 = vector.multi_reduction <add>, %117, %cst_29 [2] : vector<4x16x16xf32> to vector<4x16xf32>
    %119 = vector.shape_cast %118 : vector<4x16xf32> to vector<4x16x1xf32>
    %120 = tpu.reciprocal %119 {approx = true} : vector<4x16x1xf32> -> vector<4x16x1xf32>
    %121 = vector.broadcast %120 : vector<4x16x1xf32> to vector<4x16x16xf32>
    %122 = arith.mulf %117, %121 : vector<4x16x16xf32>
    "tpu.trace_start"() <{level = 10 : i32, message = "hqk,hkd->hqd"}> : () -> ()
    %cst_30 = arith.constant dense<0.000000e+00> : vector<4x16x32xf32>
    %123 = tpu.matmul %122, %107, %cst_30 {dimension_numbers = #tpu.dot_dimension_numbers<[2], [1], [1], [2], [0, 0, 0, 1, 1, 2], [0], [0]>} : vector<4x16x16xf32>, vector<4x16x32xf32>, vector<4x16x32xf32> -> vector<4x16x32xf32>
    "tpu.trace_stop"() : () -> ()
    %124 = vector.extract_strided_slice %123 {offsets = [0, 0, 0], sizes = [1, 16, 32], strides = [1, 1, 1]} : vector<4x16x32xf32> to vector<1x16x32xf32>
    %125 = vector.shape_cast %124 : vector<1x16x32xf32> to vector<16x32xf32>
    %126 = vector.extract_strided_slice %123 {offsets = [1, 0, 0], sizes = [1, 16, 32], strides = [1, 1, 1]} : vector<4x16x32xf32> to vector<1x16x32xf32>
    %127 = vector.shape_cast %126 : vector<1x16x32xf32> to vector<16x32xf32>
    %128 = vector.extract_strided_slice %123 {offsets = [2, 0, 0], sizes = [1, 16, 32], strides = [1, 1, 1]} : vector<4x16x32xf32> to vector<1x16x32xf32>
    %129 = vector.shape_cast %128 : vector<1x16x32xf32> to vector<16x32xf32>
    %130 = vector.extract_strided_slice %123 {offsets = [3, 0, 0], sizes = [1, 16, 32], strides = [1, 1, 1]} : vector<4x16x32xf32> to vector<1x16x32xf32>
    %131 = vector.shape_cast %130 : vector<1x16x32xf32> to vector<16x32xf32>
    %132 = tpu.concatenate %125, %127, %129, %131 in 1 : vector<16x32xf32>, vector<16x32xf32>, vector<16x32xf32>, vector<16x32xf32> -> vector<16x128xf32>
    %133 = tpu.concatenate %77, %132 in 0 : vector<16x128xf32>, vector<16x128xf32> -> vector<32x128xf32>
    %c0_31 = arith.constant 0 : index
    %c0_32 = arith.constant 0 : index
    %c0_33 = arith.constant 0 : index
    %134 = vector.load %arg7[%c0_31, %c0_32, %c0_33] : memref<2x128x128xf32, #tpu.memory_space<vmem>>, vector<1x128x128xf32>
    %135 = vector.shape_cast %134 : vector<1x128x128xf32> to vector<128x128xf32>
    %cst_34 = arith.constant dense<0.000000e+00> : vector<32x128xf32>
    %136 = tpu.matmul %133, %135, %cst_34 {dimension_numbers = #tpu.dot_dimension_numbers<[1], [0], [0], [1], [0, 0, 1, 1], [], []>} : vector<32x128xf32>, vector<128x128xf32>, vector<32x128xf32> -> vector<32x128xf32>
    %137 = arith.addf %6, %136 : vector<32x128xf32>
    %c0_35 = arith.constant 0 : index
    %c0_36 = arith.constant 0 : index
    %138 = vector.load %arg8[%c0_35, %c0_36] : memref<2x128xf32, #tpu.memory_space<vmem>>, vector<1x128xf32>
    %139 = vector.broadcast %138 : vector<1x128xf32> to vector<32x128xf32>
    %140 = arith.mulf %137, %139 : vector<32x128xf32>
    %c0_37 = arith.constant 0 : index
    %c0_38 = arith.constant 0 : index
    %141 = vector.load %arg9[%c0_37, %c0_38] : memref<2x128xf32, #tpu.memory_space<vmem>>, vector<1x128xf32>
    %142 = vector.broadcast %141 : vector<1x128xf32> to vector<32x128xf32>
    %143 = arith.addf %140, %142 : vector<32x128xf32>
    %c0_39 = arith.constant 0 : index
    %c0_40 = arith.constant 0 : index
    %c0_41 = arith.constant 0 : index
    %144 = vector.load %arg10[%c0_39, %c0_40, %c0_41] : memref<2x128x256xf32, #tpu.memory_space<vmem>>, vector<1x128x256xf32>
    %145 = vector.shape_cast %144 : vector<1x128x256xf32> to vector<128x256xf32>
    %cst_42 = arith.constant dense<0.000000e+00> : vector<32x256xf32>
    %146 = tpu.matmul %143, %145, %cst_42 {dimension_numbers = #tpu.dot_dimension_numbers<[1], [0], [0], [1], [0, 0, 1, 1], [], []>} : vector<32x128xf32>, vector<128x256xf32>, vector<32x256xf32> -> vector<32x256xf32>
    %147 = vector.extract_strided_slice %146 {offsets = [0, 0], sizes = [32, 128], strides = [1, 1]} : vector<32x256xf32> to vector<32x128xf32>
    %148 = vector.extract_strided_slice %146 {offsets = [0, 128], sizes = [32, 128], strides = [1, 1]} : vector<32x256xf32> to vector<32x128xf32>
    %cst_43 = arith.constant 5.000000e-01 : f32
    %149 = vector.broadcast %cst_43 : f32 to vector<32x128xf32>
    %150 = arith.mulf %149, %148 : vector<32x128xf32>
    %cst_44 = arith.constant 4.471500e-02 : f32
    %151 = vector.broadcast %cst_44 : f32 to vector<32x128xf32>
    %152 = arith.mulf %151, %148 : vector<32x128xf32>
    %153 = arith.mulf %152, %148 : vector<32x128xf32>
    %154 = arith.mulf %153, %148 : vector<32x128xf32>
    %155 = arith.addf %148, %154 : vector<32x128xf32>
    %cst_45 = arith.constant 0.797884583 : f32
    %156 = vector.broadcast %cst_45 : f32 to vector<32x128xf32>
    %157 = arith.mulf %156, %155 : vector<32x128xf32>
    %158 = math.tanh %157 : vector<32x128xf32>
    %cst_46 = arith.constant 1.000000e+00 : f32
    %159 = vector.broadcast %cst_46 : f32 to vector<32x128xf32>
    %160 = arith.addf %159, %158 : vector<32x128xf32>
    %161 = arith.mulf %150, %160 : vector<32x128xf32>
    %162 = arith.mulf %147, %161 : vector<32x128xf32>
    %c0_47 = arith.constant 0 : index
    %c0_48 = arith.constant 0 : index
    %c0_49 = arith.constant 0 : index
    %163 = vector.load %arg11[%c0_47, %c0_48, %c0_49] : memref<2x128x128xf32, #tpu.memory_space<vmem>>, vector<1x128x128xf32>
    %164 = vector.shape_cast %163 : vector<1x128x128xf32> to vector<128x128xf32>
    %cst_50 = arith.constant dense<0.000000e+00> : vector<32x128xf32>
    %165 = tpu.matmul %162, %164, %cst_50 {dimension_numbers = #tpu.dot_dimension_numbers<[1], [0], [0], [1], [0, 0, 1, 1], [], []>} : vector<32x128xf32>, vector<128x128xf32>, vector<32x128xf32> -> vector<32x128xf32>
    %166 = arith.addf %143, %165 : vector<32x128xf32>
    %c1 = arith.constant 1 : index
    %c0_51 = arith.constant 0 : index
    %167 = vector.load %arg5[%c1, %c0_51] : memref<2x128xf32, #tpu.memory_space<vmem>>, vector<1x128xf32>
    %168 = arith.mulf %166, %166 : vector<32x128xf32>
    %cst_52 = arith.constant dense<0.000000e+00> : vector<32xf32>
    %169 = vector.multi_reduction <add>, %168, %cst_52 [1] : vector<32x128xf32> to vector<32xf32>
    %170 = vector.shape_cast %169 : vector<32xf32> to vector<32x1xf32>
    %cst_53 = arith.constant 1.280000e+02 : f32
    %171 = vector.broadcast %cst_53 : f32 to vector<32x1xf32>
    %172 = arith.divf %170, %171 : vector<32x1xf32>
    %cst_54 = arith.constant 9.99999974E-6 : f32
    %173 = vector.broadcast %cst_54 : f32 to vector<32x1xf32>
    %174 = arith.addf %172, %173 : vector<32x1xf32>
    %175 = math.rsqrt %174 : vector<32x1xf32>
    %176 = vector.broadcast %175 : vector<32x1xf32> to vector<32x128xf32>
    %177 = arith.mulf %166, %176 : vector<32x128xf32>
    %178 = vector.broadcast %167 : vector<1x128xf32> to vector<32x128xf32>
    %179 = arith.mulf %177, %178 : vector<32x128xf32>
    %c1_55 = arith.constant 1 : index
    %c0_56 = arith.constant 0 : index
    %c0_57 = arith.constant 0 : index
    %180 = vector.load %arg6[%c1_55, %c0_56, %c0_57] : memref<2x128x384xf32, #tpu.memory_space<vmem>>, vector<1x128x384xf32>
    %181 = vector.shape_cast %180 : vector<1x128x384xf32> to vector<128x384xf32>
    %cst_58 = arith.constant dense<0.000000e+00> : vector<32x384xf32>
    %182 = tpu.matmul %179, %181, %cst_58 {dimension_numbers = #tpu.dot_dimension_numbers<[1], [0], [0], [1], [0, 0, 1, 1], [], []>} : vector<32x128xf32>, vector<128x384xf32>, vector<32x384xf32> -> vector<32x384xf32>
    %183 = vector.extract_strided_slice %182 {offsets = [0, 0], sizes = [16, 128], strides = [1, 1]} : vector<32x384xf32> to vector<16x128xf32>
    %184 = vector.extract_strided_slice %183 {offsets = [0, 0], sizes = [16, 32], strides = [1, 1]} : vector<16x128xf32> to vector<16x32xf32>
    %185 = vector.extract_strided_slice %183 {offsets = [0, 32], sizes = [16, 32], strides = [1, 1]} : vector<16x128xf32> to vector<16x32xf32>
    %186 = vector.extract_strided_slice %183 {offsets = [0, 64], sizes = [16, 32], strides = [1, 1]} : vector<16x128xf32> to vector<16x32xf32>
    %187 = vector.extract_strided_slice %183 {offsets = [0, 96], sizes = [16, 32], strides = [1, 1]} : vector<16x128xf32> to vector<16x32xf32>
    %188 = vector.shape_cast %184 : vector<16x32xf32> to vector<1x16x32xf32>
    %189 = vector.shape_cast %185 : vector<16x32xf32> to vector<1x16x32xf32>
    %190 = vector.shape_cast %186 : vector<16x32xf32> to vector<1x16x32xf32>
    %191 = vector.shape_cast %187 : vector<16x32xf32> to vector<1x16x32xf32>
    %192 = tpu.concatenate %188, %189, %190, %191 in 0 : vector<1x16x32xf32>, vector<1x16x32xf32>, vector<1x16x32xf32>, vector<1x16x32xf32> -> vector<4x16x32xf32>
    %193 = vector.extract_strided_slice %182 {offsets = [0, 128], sizes = [16, 128], strides = [1, 1]} : vector<32x384xf32> to vector<16x128xf32>
    %194 = vector.extract_strided_slice %193 {offsets = [0, 0], sizes = [16, 32], strides = [1, 1]} : vector<16x128xf32> to vector<16x32xf32>
    %195 = vector.extract_strided_slice %193 {offsets = [0, 32], sizes = [16, 32], strides = [1, 1]} : vector<16x128xf32> to vector<16x32xf32>
    %196 = vector.extract_strided_slice %193 {offsets = [0, 64], sizes = [16, 32], strides = [1, 1]} : vector<16x128xf32> to vector<16x32xf32>
    %197 = vector.extract_strided_slice %193 {offsets = [0, 96], sizes = [16, 32], strides = [1, 1]} : vector<16x128xf32> to vector<16x32xf32>
    %198 = vector.shape_cast %194 : vector<16x32xf32> to vector<1x16x32xf32>
    %199 = vector.shape_cast %195 : vector<16x32xf32> to vector<1x16x32xf32>
    %200 = vector.shape_cast %196 : vector<16x32xf32> to vector<1x16x32xf32>
    %201 = vector.shape_cast %197 : vector<16x32xf32> to vector<1x16x32xf32>
    %202 = tpu.concatenate %198, %199, %200, %201 in 0 : vector<1x16x32xf32>, vector<1x16x32xf32>, vector<1x16x32xf32>, vector<1x16x32xf32> -> vector<4x16x32xf32>
    %203 = vector.extract_strided_slice %182 {offsets = [0, 256], sizes = [16, 128], strides = [1, 1]} : vector<32x384xf32> to vector<16x128xf32>
    %204 = vector.extract_strided_slice %203 {offsets = [0, 0], sizes = [16, 32], strides = [1, 1]} : vector<16x128xf32> to vector<16x32xf32>
    %205 = vector.extract_strided_slice %203 {offsets = [0, 32], sizes = [16, 32], strides = [1, 1]} : vector<16x128xf32> to vector<16x32xf32>
    %206 = vector.extract_strided_slice %203 {offsets = [0, 64], sizes = [16, 32], strides = [1, 1]} : vector<16x128xf32> to vector<16x32xf32>
    %207 = vector.extract_strided_slice %203 {offsets = [0, 96], sizes = [16, 32], strides = [1, 1]} : vector<16x128xf32> to vector<16x32xf32>
    %208 = vector.shape_cast %204 : vector<16x32xf32> to vector<1x16x32xf32>
    %209 = vector.shape_cast %205 : vector<16x32xf32> to vector<1x16x32xf32>
    %210 = vector.shape_cast %206 : vector<16x32xf32> to vector<1x16x32xf32>
    %211 = vector.shape_cast %207 : vector<16x32xf32> to vector<1x16x32xf32>
    %212 = tpu.concatenate %208, %209, %210, %211 in 0 : vector<1x16x32xf32>, vector<1x16x32xf32>, vector<1x16x32xf32>, vector<1x16x32xf32> -> vector<4x16x32xf32>
    "tpu.trace_start"() <{level = 10 : i32, message = "hqd,hkd->hqk"}> : () -> ()
    %cst_59 = arith.constant dense<0.000000e+00> : vector<4x16x16xf32>
    %213 = tpu.matmul %192, %202, %cst_59 {dimension_numbers = #tpu.dot_dimension_numbers<[2], [2], [1], [1], [0, 0, 0, 1, 1, 1], [0], [0]>} : vector<4x16x32xf32>, vector<4x16x32xf32>, vector<4x16x16xf32> -> vector<4x16x16xf32>
    "tpu.trace_stop"() : () -> ()
    %cst_60 = arith.constant 0.176776692 : f32
    %214 = vector.broadcast %cst_60 : f32 to vector<4x16x16xf32>
    %215 = arith.mulf %213, %214 : vector<4x16x16xf32>
    %cst_61 = arith.constant dense<0xFF800000> : vector<4x16xf32>
    %216 = vector.multi_reduction <maximumf>, %215, %cst_61 [2] : vector<4x16x16xf32> to vector<4x16xf32>
    %217 = vector.shape_cast %216 : vector<4x16xf32> to vector<4x16x1xf32>
    %218 = vector.broadcast %217 : vector<4x16x1xf32> to vector<4x16x16xf32>
    %219 = arith.subf %215, %218 : vector<4x16x16xf32>
    %220 = math.exp %219 : vector<4x16x16xf32>
    %cst_62 = arith.constant dense<0.000000e+00> : vector<4x16xf32>
    %221 = vector.multi_reduction <add>, %220, %cst_62 [2] : vector<4x16x16xf32> to vector<4x16xf32>
    %222 = vector.shape_cast %221 : vector<4x16xf32> to vector<4x16x1xf32>
    %223 = tpu.reciprocal %222 {approx = true} : vector<4x16x1xf32> -> vector<4x16x1xf32>
    %224 = vector.broadcast %223 : vector<4x16x1xf32> to vector<4x16x16xf32>
    %225 = arith.mulf %220, %224 : vector<4x16x16xf32>
    "tpu.trace_start"() <{level = 10 : i32, message = "hqk,hkd->hqd"}> : () -> ()
    %cst_63 = arith.constant dense<0.000000e+00> : vector<4x16x32xf32>
    %226 = tpu.matmul %225, %212, %cst_63 {dimension_numbers = #tpu.dot_dimension_numbers<[2], [1], [1], [2], [0, 0, 0, 1, 1, 2], [0], [0]>} : vector<4x16x16xf32>, vector<4x16x32xf32>, vector<4x16x32xf32> -> vector<4x16x32xf32>
    "tpu.trace_stop"() : () -> ()
    %227 = vector.extract_strided_slice %226 {offsets = [0, 0, 0], sizes = [1, 16, 32], strides = [1, 1, 1]} : vector<4x16x32xf32> to vector<1x16x32xf32>
    %228 = vector.shape_cast %227 : vector<1x16x32xf32> to vector<16x32xf32>
    %229 = vector.extract_strided_slice %226 {offsets = [1, 0, 0], sizes = [1, 16, 32], strides = [1, 1, 1]} : vector<4x16x32xf32> to vector<1x16x32xf32>
    %230 = vector.shape_cast %229 : vector<1x16x32xf32> to vector<16x32xf32>
    %231 = vector.extract_strided_slice %226 {offsets = [2, 0, 0], sizes = [1, 16, 32], strides = [1, 1, 1]} : vector<4x16x32xf32> to vector<1x16x32xf32>
    %232 = vector.shape_cast %231 : vector<1x16x32xf32> to vector<16x32xf32>
    %233 = vector.extract_strided_slice %226 {offsets = [3, 0, 0], sizes = [1, 16, 32], strides = [1, 1, 1]} : vector<4x16x32xf32> to vector<1x16x32xf32>
    %234 = vector.shape_cast %233 : vector<1x16x32xf32> to vector<16x32xf32>
    %235 = tpu.concatenate %228, %230, %232, %234 in 1 : vector<16x32xf32>, vector<16x32xf32>, vector<16x32xf32>, vector<16x32xf32> -> vector<16x128xf32>
    %236 = vector.extract_strided_slice %182 {offsets = [16, 0], sizes = [16, 128], strides = [1, 1]} : vector<32x384xf32> to vector<16x128xf32>
    %237 = vector.extract_strided_slice %236 {offsets = [0, 0], sizes = [16, 32], strides = [1, 1]} : vector<16x128xf32> to vector<16x32xf32>
    %238 = vector.extract_strided_slice %236 {offsets = [0, 32], sizes = [16, 32], strides = [1, 1]} : vector<16x128xf32> to vector<16x32xf32>
    %239 = vector.extract_strided_slice %236 {offsets = [0, 64], sizes = [16, 32], strides = [1, 1]} : vector<16x128xf32> to vector<16x32xf32>
    %240 = vector.extract_strided_slice %236 {offsets = [0, 96], sizes = [16, 32], strides = [1, 1]} : vector<16x128xf32> to vector<16x32xf32>
    %241 = vector.shape_cast %237 : vector<16x32xf32> to vector<1x16x32xf32>
    %242 = vector.shape_cast %238 : vector<16x32xf32> to vector<1x16x32xf32>
    %243 = vector.shape_cast %239 : vector<16x32xf32> to vector<1x16x32xf32>
    %244 = vector.shape_cast %240 : vector<16x32xf32> to vector<1x16x32xf32>
    %245 = tpu.concatenate %241, %242, %243, %244 in 0 : vector<1x16x32xf32>, vector<1x16x32xf32>, vector<1x16x32xf32>, vector<1x16x32xf32> -> vector<4x16x32xf32>
    %246 = vector.extract_strided_slice %182 {offsets = [16, 128], sizes = [16, 128], strides = [1, 1]} : vector<32x384xf32> to vector<16x128xf32>
    %247 = vector.extract_strided_slice %246 {offsets = [0, 0], sizes = [16, 32], strides = [1, 1]} : vector<16x128xf32> to vector<16x32xf32>
    %248 = vector.extract_strided_slice %246 {offsets = [0, 32], sizes = [16, 32], strides = [1, 1]} : vector<16x128xf32> to vector<16x32xf32>
    %249 = vector.extract_strided_slice %246 {offsets = [0, 64], sizes = [16, 32], strides = [1, 1]} : vector<16x128xf32> to vector<16x32xf32>
    %250 = vector.extract_strided_slice %246 {offsets = [0, 96], sizes = [16, 32], strides = [1, 1]} : vector<16x128xf32> to vector<16x32xf32>
    %251 = vector.shape_cast %247 : vector<16x32xf32> to vector<1x16x32xf32>
    %252 = vector.shape_cast %248 : vector<16x32xf32> to vector<1x16x32xf32>
    %253 = vector.shape_cast %249 : vector<16x32xf32> to vector<1x16x32xf32>
    %254 = vector.shape_cast %250 : vector<16x32xf32> to vector<1x16x32xf32>
    %255 = tpu.concatenate %251, %252, %253, %254 in 0 : vector<1x16x32xf32>, vector<1x16x32xf32>, vector<1x16x32xf32>, vector<1x16x32xf32> -> vector<4x16x32xf32>
    %256 = vector.extract_strided_slice %182 {offsets = [16, 256], sizes = [16, 128], strides = [1, 1]} : vector<32x384xf32> to vector<16x128xf32>
    %257 = vector.extract_strided_slice %256 {offsets = [0, 0], sizes = [16, 32], strides = [1, 1]} : vector<16x128xf32> to vector<16x32xf32>
    %258 = vector.extract_strided_slice %256 {offsets = [0, 32], sizes = [16, 32], strides = [1, 1]} : vector<16x128xf32> to vector<16x32xf32>
    %259 = vector.extract_strided_slice %256 {offsets = [0, 64], sizes = [16, 32], strides = [1, 1]} : vector<16x128xf32> to vector<16x32xf32>
    %260 = vector.extract_strided_slice %256 {offsets = [0, 96], sizes = [16, 32], strides = [1, 1]} : vector<16x128xf32> to vector<16x32xf32>
    %261 = vector.shape_cast %257 : vector<16x32xf32> to vector<1x16x32xf32>
    %262 = vector.shape_cast %258 : vector<16x32xf32> to vector<1x16x32xf32>
    %263 = vector.shape_cast %259 : vector<16x32xf32> to vector<1x16x32xf32>
    %264 = vector.shape_cast %260 : vector<16x32xf32> to vector<1x16x32xf32>
    %265 = tpu.concatenate %261, %262, %263, %264 in 0 : vector<1x16x32xf32>, vector<1x16x32xf32>, vector<1x16x32xf32>, vector<1x16x32xf32> -> vector<4x16x32xf32>
    "tpu.trace_start"() <{level = 10 : i32, message = "hqd,hkd->hqk"}> : () -> ()
    %cst_64 = arith.constant dense<0.000000e+00> : vector<4x16x16xf32>
    %266 = tpu.matmul %245, %255, %cst_64 {dimension_numbers = #tpu.dot_dimension_numbers<[2], [2], [1], [1], [0, 0, 0, 1, 1, 1], [0], [0]>} : vector<4x16x32xf32>, vector<4x16x32xf32>, vector<4x16x16xf32> -> vector<4x16x16xf32>
    "tpu.trace_stop"() : () -> ()
    %cst_65 = arith.constant 0.176776692 : f32
    %267 = vector.broadcast %cst_65 : f32 to vector<4x16x16xf32>
    %268 = arith.mulf %266, %267 : vector<4x16x16xf32>
    %cst_66 = arith.constant dense<0xFF800000> : vector<4x16xf32>
    %269 = vector.multi_reduction <maximumf>, %268, %cst_66 [2] : vector<4x16x16xf32> to vector<4x16xf32>
    %270 = vector.shape_cast %269 : vector<4x16xf32> to vector<4x16x1xf32>
    %271 = vector.broadcast %270 : vector<4x16x1xf32> to vector<4x16x16xf32>
    %272 = arith.subf %268, %271 : vector<4x16x16xf32>
    %273 = math.exp %272 : vector<4x16x16xf32>
    %cst_67 = arith.constant dense<0.000000e+00> : vector<4x16xf32>
    %274 = vector.multi_reduction <add>, %273, %cst_67 [2] : vector<4x16x16xf32> to vector<4x16xf32>
    %275 = vector.shape_cast %274 : vector<4x16xf32> to vector<4x16x1xf32>
    %276 = tpu.reciprocal %275 {approx = true} : vector<4x16x1xf32> -> vector<4x16x1xf32>
    %277 = vector.broadcast %276 : vector<4x16x1xf32> to vector<4x16x16xf32>
    %278 = arith.mulf %273, %277 : vector<4x16x16xf32>
    "tpu.trace_start"() <{level = 10 : i32, message = "hqk,hkd->hqd"}> : () -> ()
    %cst_68 = arith.constant dense<0.000000e+00> : vector<4x16x32xf32>
    %279 = tpu.matmul %278, %265, %cst_68 {dimension_numbers = #tpu.dot_dimension_numbers<[2], [1], [1], [2], [0, 0, 0, 1, 1, 2], [0], [0]>} : vector<4x16x16xf32>, vector<4x16x32xf32>, vector<4x16x32xf32> -> vector<4x16x32xf32>
    "tpu.trace_stop"() : () -> ()
    %280 = vector.extract_strided_slice %279 {offsets = [0, 0, 0], sizes = [1, 16, 32], strides = [1, 1, 1]} : vector<4x16x32xf32> to vector<1x16x32xf32>
    %281 = vector.shape_cast %280 : vector<1x16x32xf32> to vector<16x32xf32>
    %282 = vector.extract_strided_slice %279 {offsets = [1, 0, 0], sizes = [1, 16, 32], strides = [1, 1, 1]} : vector<4x16x32xf32> to vector<1x16x32xf32>
    %283 = vector.shape_cast %282 : vector<1x16x32xf32> to vector<16x32xf32>
    %284 = vector.extract_strided_slice %279 {offsets = [2, 0, 0], sizes = [1, 16, 32], strides = [1, 1, 1]} : vector<4x16x32xf32> to vector<1x16x32xf32>
    %285 = vector.shape_cast %284 : vector<1x16x32xf32> to vector<16x32xf32>
    %286 = vector.extract_strided_slice %279 {offsets = [3, 0, 0], sizes = [1, 16, 32], strides = [1, 1, 1]} : vector<4x16x32xf32> to vector<1x16x32xf32>
    %287 = vector.shape_cast %286 : vector<1x16x32xf32> to vector<16x32xf32>
    %288 = tpu.concatenate %281, %283, %285, %287 in 1 : vector<16x32xf32>, vector<16x32xf32>, vector<16x32xf32>, vector<16x32xf32> -> vector<16x128xf32>
    %289 = tpu.concatenate %235, %288 in 0 : vector<16x128xf32>, vector<16x128xf32> -> vector<32x128xf32>
    %c1_69 = arith.constant 1 : index
    %c0_70 = arith.constant 0 : index
    %c0_71 = arith.constant 0 : index
    %290 = vector.load %arg7[%c1_69, %c0_70, %c0_71] : memref<2x128x128xf32, #tpu.memory_space<vmem>>, vector<1x128x128xf32>
    %291 = vector.shape_cast %290 : vector<1x128x128xf32> to vector<128x128xf32>
    %cst_72 = arith.constant dense<0.000000e+00> : vector<32x128xf32>
    %292 = tpu.matmul %289, %291, %cst_72 {dimension_numbers = #tpu.dot_dimension_numbers<[1], [0], [0], [1], [0, 0, 1, 1], [], []>} : vector<32x128xf32>, vector<128x128xf32>, vector<32x128xf32> -> vector<32x128xf32>
    %293 = arith.addf %166, %292 : vector<32x128xf32>
    %c1_73 = arith.constant 1 : index
    %c0_74 = arith.constant 0 : index
    %294 = vector.load %arg8[%c1_73, %c0_74] : memref<2x128xf32, #tpu.memory_space<vmem>>, vector<1x128xf32>
    %295 = vector.broadcast %294 : vector<1x128xf32> to vector<32x128xf32>
    %296 = arith.mulf %293, %295 : vector<32x128xf32>
    %c1_75 = arith.constant 1 : index
    %c0_76 = arith.constant 0 : index
    %297 = vector.load %arg9[%c1_75, %c0_76] : memref<2x128xf32, #tpu.memory_space<vmem>>, vector<1x128xf32>
    %298 = vector.broadcast %297 : vector<1x128xf32> to vector<32x128xf32>
    %299 = arith.addf %296, %298 : vector<32x128xf32>
    %c1_77 = arith.constant 1 : index
    %c0_78 = arith.constant 0 : index
    %c0_79 = arith.constant 0 : index
    %300 = vector.load %arg10[%c1_77, %c0_78, %c0_79] : memref<2x128x256xf32, #tpu.memory_space<vmem>>, vector<1x128x256xf32>
    %301 = vector.shape_cast %300 : vector<1x128x256xf32> to vector<128x256xf32>
    %cst_80 = arith.constant dense<0.000000e+00> : vector<32x256xf32>
    %302 = tpu.matmul %299, %301, %cst_80 {dimension_numbers = #tpu.dot_dimension_numbers<[1], [0], [0], [1], [0, 0, 1, 1], [], []>} : vector<32x128xf32>, vector<128x256xf32>, vector<32x256xf32> -> vector<32x256xf32>
    %303 = vector.extract_strided_slice %302 {offsets = [0, 0], sizes = [32, 128], strides = [1, 1]} : vector<32x256xf32> to vector<32x128xf32>
    %304 = vector.extract_strided_slice %302 {offsets = [0, 128], sizes = [32, 128], strides = [1, 1]} : vector<32x256xf32> to vector<32x128xf32>
    %cst_81 = arith.constant 5.000000e-01 : f32
    %305 = vector.broadcast %cst_81 : f32 to vector<32x128xf32>
    %306 = arith.mulf %305, %304 : vector<32x128xf32>
    %cst_82 = arith.constant 4.471500e-02 : f32
    %307 = vector.broadcast %cst_82 : f32 to vector<32x128xf32>
    %308 = arith.mulf %307, %304 : vector<32x128xf32>
    %309 = arith.mulf %308, %304 : vector<32x128xf32>
    %310 = arith.mulf %309, %304 : vector<32x128xf32>
    %311 = arith.addf %304, %310 : vector<32x128xf32>
    %cst_83 = arith.constant 0.797884583 : f32
    %312 = vector.broadcast %cst_83 : f32 to vector<32x128xf32>
    %313 = arith.mulf %312, %311 : vector<32x128xf32>
    %314 = math.tanh %313 : vector<32x128xf32>
    %cst_84 = arith.constant 1.000000e+00 : f32
    %315 = vector.broadcast %cst_84 : f32 to vector<32x128xf32>
    %316 = arith.addf %315, %314 : vector<32x128xf32>
    %317 = arith.mulf %306, %316 : vector<32x128xf32>
    %318 = arith.mulf %303, %317 : vector<32x128xf32>
    %c1_85 = arith.constant 1 : index
    %c0_86 = arith.constant 0 : index
    %c0_87 = arith.constant 0 : index
    %319 = vector.load %arg11[%c1_85, %c0_86, %c0_87] : memref<2x128x128xf32, #tpu.memory_space<vmem>>, vector<1x128x128xf32>
    %320 = vector.shape_cast %319 : vector<1x128x128xf32> to vector<128x128xf32>
    %cst_88 = arith.constant dense<0.000000e+00> : vector<32x128xf32>
    %321 = tpu.matmul %318, %320, %cst_88 {dimension_numbers = #tpu.dot_dimension_numbers<[1], [0], [0], [1], [0, 0, 1, 1], [], []>} : vector<32x128xf32>, vector<128x128xf32>, vector<32x128xf32> -> vector<32x128xf32>
    %322 = arith.addf %299, %321 : vector<32x128xf32>
    %c0_89 = arith.constant 0 : index
    %c0_90 = arith.constant 0 : index
    %323 = vector.load %arg12[%c0_89, %c0_90] : memref<1x128xf32, #tpu.memory_space<vmem>>, vector<1x128xf32>
    %324 = arith.mulf %322, %322 : vector<32x128xf32>
    %cst_91 = arith.constant dense<0.000000e+00> : vector<32xf32>
    %325 = vector.multi_reduction <add>, %324, %cst_91 [1] : vector<32x128xf32> to vector<32xf32>
    %326 = vector.shape_cast %325 : vector<32xf32> to vector<32x1xf32>
    %cst_92 = arith.constant 1.280000e+02 : f32
    %327 = vector.broadcast %cst_92 : f32 to vector<32x1xf32>
    %328 = arith.divf %326, %327 : vector<32x1xf32>
    %cst_93 = arith.constant 9.99999974E-6 : f32
    %329 = vector.broadcast %cst_93 : f32 to vector<32x1xf32>
    %330 = arith.addf %328, %329 : vector<32x1xf32>
    %331 = math.rsqrt %330 : vector<32x1xf32>
    %332 = vector.broadcast %331 : vector<32x1xf32> to vector<32x128xf32>
    %333 = arith.mulf %322, %332 : vector<32x128xf32>
    %334 = vector.broadcast %323 : vector<1x128xf32> to vector<32x128xf32>
    %335 = arith.mulf %333, %334 : vector<32x128xf32>
    %c0_94 = arith.constant 0 : index
    %c0_95 = arith.constant 0 : index
    %336 = vector.load %arg13[%c0_94, %c0_95] : memref<128x384xf32, #tpu.memory_space<vmem>>, vector<128x384xf32>
    %cst_96 = arith.constant dense<0.000000e+00> : vector<32x384xf32>
    %337 = tpu.matmul %335, %336, %cst_96 {dimension_numbers = #tpu.dot_dimension_numbers<[1], [0], [0], [1], [0, 0, 1, 1], [], []>} : vector<32x128xf32>, vector<128x384xf32>, vector<32x384xf32> -> vector<32x384xf32>
    %338 = vector.extract_strided_slice %337 {offsets = [0, 0], sizes = [16, 128], strides = [1, 1]} : vector<32x384xf32> to vector<16x128xf32>
    %c0_97 = arith.constant 0 : index
    %c0_98 = arith.constant 0 : index
    %339 = vector.load %arg14[%c0_97, %c0_98] : memref<3x128xf32, #tpu.memory_space<vmem>>, vector<1x128xf32>
    %340 = vector.broadcast %339 : vector<1x128xf32> to vector<16x128xf32>
    %341 = arith.addf %338, %340 : vector<16x128xf32>
    %c0_99 = arith.constant 0 : index
    %c0_100 = arith.constant 0 : index
    %c0_101 = arith.constant 0 : index
    %c0_102 = arith.constant 0 : index
    %342 = vector.load %arg15[%c0_99, %c0_100, %c0_101, %c0_102] : memref<2x3x16x128xf32, #tpu.memory_space<vmem>>, vector<1x1x16x128xf32>
    %343 = vector.shape_cast %342 : vector<1x1x16x128xf32> to vector<16x128xf32>
    %344 = vector.shape_cast %341 : vector<16x128xf32> to vector<1x1x16x128xf32>
    tpu.vector_store %arg15[%c0_99, %c0_100, %c0_101, %c0_102], %344 {strides = array<i32>} : memref<2x3x16x128xf32, #tpu.memory_space<vmem>>, vector<1x1x16x128xf32>,
    %345 = vector.extract_strided_slice %337 {offsets = [0, 128], sizes = [16, 128], strides = [1, 1]} : vector<32x384xf32> to vector<16x128xf32>
    %c1_103 = arith.constant 1 : index
    %c0_104 = arith.constant 0 : index
    %346 = vector.load %arg14[%c1_103, %c0_104] : memref<3x128xf32, #tpu.memory_space<vmem>>, vector<1x128xf32>
    %347 = vector.broadcast %346 : vector<1x128xf32> to vector<16x128xf32>
    %348 = arith.addf %345, %347 : vector<16x128xf32>
    %c0_105 = arith.constant 0 : index
    %c1_106 = arith.constant 1 : index
    %c0_107 = arith.constant 0 : index
    %c0_108 = arith.constant 0 : index
    %349 = vector.load %arg15[%c0_105, %c1_106, %c0_107, %c0_108] : memref<2x3x16x128xf32, #tpu.memory_space<vmem>>, vector<1x1x16x128xf32>
    %350 = vector.shape_cast %349 : vector<1x1x16x128xf32> to vector<16x128xf32>
    %351 = vector.shape_cast %348 : vector<16x128xf32> to vector<1x1x16x128xf32>
    tpu.vector_store %arg15[%c0_105, %c1_106, %c0_107, %c0_108], %351 {strides = array<i32>} : memref<2x3x16x128xf32, #tpu.memory_space<vmem>>, vector<1x1x16x128xf32>,
    %352 = vector.extract_strided_slice %337 {offsets = [0, 256], sizes = [16, 128], strides = [1, 1]} : vector<32x384xf32> to vector<16x128xf32>
    %c2 = arith.constant 2 : index
    %c0_109 = arith.constant 0 : index
    %353 = vector.load %arg14[%c2, %c0_109] : memref<3x128xf32, #tpu.memory_space<vmem>>, vector<1x128xf32>
    %354 = vector.broadcast %353 : vector<1x128xf32> to vector<16x128xf32>
    %355 = arith.addf %352, %354 : vector<16x128xf32>
    %c0_110 = arith.constant 0 : index
    %c2_111 = arith.constant 2 : index
    %c0_112 = arith.constant 0 : index
    %c0_113 = arith.constant 0 : index
    %356 = vector.load %arg15[%c0_110, %c2_111, %c0_112, %c0_113] : memref<2x3x16x128xf32, #tpu.memory_space<vmem>>, vector<1x1x16x128xf32>
    %357 = vector.shape_cast %356 : vector<1x1x16x128xf32> to vector<16x128xf32>
    %358 = vector.shape_cast %355 : vector<16x128xf32> to vector<1x1x16x128xf32>
    tpu.vector_store %arg15[%c0_110, %c2_111, %c0_112, %c0_113], %358 {strides = array<i32>} : memref<2x3x16x128xf32, #tpu.memory_space<vmem>>, vector<1x1x16x128xf32>,
    %359 = vector.extract_strided_slice %337 {offsets = [16, 0], sizes = [16, 128], strides = [1, 1]} : vector<32x384xf32> to vector<16x128xf32>
    %c0_114 = arith.constant 0 : index
    %c0_115 = arith.constant 0 : index
    %360 = vector.load %arg14[%c0_114, %c0_115] : memref<3x128xf32, #tpu.memory_space<vmem>>, vector<1x128xf32>
    %361 = vector.broadcast %360 : vector<1x128xf32> to vector<16x128xf32>
    %362 = arith.addf %359, %361 : vector<16x128xf32>
    %c1_116 = arith.constant 1 : index
    %c0_117 = arith.constant 0 : index
    %c0_118 = arith.constant 0 : index
    %c0_119 = arith.constant 0 : index
    %363 = vector.load %arg15[%c1_116, %c0_117, %c0_118, %c0_119] : memref<2x3x16x128xf32, #tpu.memory_space<vmem>>, vector<1x1x16x128xf32>
    %364 = vector.shape_cast %363 : vector<1x1x16x128xf32> to vector<16x128xf32>
    %365 = vector.shape_cast %362 : vector<16x128xf32> to vector<1x1x16x128xf32>
    tpu.vector_store %arg15[%c1_116, %c0_117, %c0_118, %c0_119], %365 {strides = array<i32>} : memref<2x3x16x128xf32, #tpu.memory_space<vmem>>, vector<1x1x16x128xf32>,
    %366 = vector.extract_strided_slice %337 {offsets = [16, 128], sizes = [16, 128], strides = [1, 1]} : vector<32x384xf32> to vector<16x128xf32>
    %c1_120 = arith.constant 1 : index
    %c0_121 = arith.constant 0 : index
    %367 = vector.load %arg14[%c1_120, %c0_121] : memref<3x128xf32, #tpu.memory_space<vmem>>, vector<1x128xf32>
    %368 = vector.broadcast %367 : vector<1x128xf32> to vector<16x128xf32>
    %369 = arith.addf %366, %368 : vector<16x128xf32>
    %c1_122 = arith.constant 1 : index
    %c1_123 = arith.constant 1 : index
    %c0_124 = arith.constant 0 : index
    %c0_125 = arith.constant 0 : index
    %370 = vector.load %arg15[%c1_122, %c1_123, %c0_124, %c0_125] : memref<2x3x16x128xf32, #tpu.memory_space<vmem>>, vector<1x1x16x128xf32>
    %371 = vector.shape_cast %370 : vector<1x1x16x128xf32> to vector<16x128xf32>
    %372 = vector.shape_cast %369 : vector<16x128xf32> to vector<1x1x16x128xf32>
    tpu.vector_store %arg15[%c1_122, %c1_123, %c0_124, %c0_125], %372 {strides = array<i32>} : memref<2x3x16x128xf32, #tpu.memory_space<vmem>>, vector<1x1x16x128xf32>,
    %373 = vector.extract_strided_slice %337 {offsets = [16, 256], sizes = [16, 128], strides = [1, 1]} : vector<32x384xf32> to vector<16x128xf32>
    %c2_126 = arith.constant 2 : index
    %c0_127 = arith.constant 0 : index
    %374 = vector.load %arg14[%c2_126, %c0_127] : memref<3x128xf32, #tpu.memory_space<vmem>>, vector<1x128xf32>
    %375 = vector.broadcast %374 : vector<1x128xf32> to vector<16x128xf32>
    %376 = arith.addf %373, %375 : vector<16x128xf32>
    %c1_128 = arith.constant 1 : index
    %c2_129 = arith.constant 2 : index
    %c0_130 = arith.constant 0 : index
    %c0_131 = arith.constant 0 : index
    %377 = vector.load %arg15[%c1_128, %c2_129, %c0_130, %c0_131] : memref<2x3x16x128xf32, #tpu.memory_space<vmem>>, vector<1x1x16x128xf32>
    %378 = vector.shape_cast %377 : vector<1x1x16x128xf32> to vector<16x128xf32>
    %379 = vector.shape_cast %376 : vector<16x128xf32> to vector<1x1x16x128xf32>
    tpu.vector_store %arg15[%c1_128, %c2_129, %c0_130, %c0_131], %379 {strides = array<i32>} : memref<2x3x16x128xf32, #tpu.memory_space<vmem>>, vector<1x1x16x128xf32>,
    return
  }
  func.func @transform_0(%arg0: i32) -> (i32, i32, i32) {
    %c0_i32 = arith.constant 0 : i32
    %c0_i32_0 = arith.constant 0 : i32
    %c0_i32_1 = arith.constant 0 : i32
    return %arg0, %c0_i32, %c0_i32_0 : i32, i32, i32
  }
  func.func @transform_1(%arg0: i32) -> (i32, i32) {
    %c0_i32 = arith.constant 0 : i32
    %c0_i32_0 = arith.constant 0 : i32
    %c0_i32_1 = arith.constant 0 : i32
    return %c0_i32, %c0_i32_0 : i32, i32
  }
  func.func @transform_2(%arg0: i32) -> (i32, i32) {
    %c0_i32 = arith.constant 0 : i32
    %c0_i32_0 = arith.constant 0 : i32
    %c0_i32_1 = arith.constant 0 : i32
    return %c0_i32, %c0_i32_0 : i32, i32
  }
  func.func @transform_3(%arg0: i32) -> (i32, i32, i32) {
    %c0_i32 = arith.constant 0 : i32
    %c0_i32_0 = arith.constant 0 : i32
    %c0_i32_1 = arith.constant 0 : i32
    %c0_i32_2 = arith.constant 0 : i32
    return %c0_i32, %c0_i32_0, %c0_i32_1 : i32, i32, i32
  }
  func.func @transform_4(%arg0: i32) -> (i32, i32) {
    %c0_i32 = arith.constant 0 : i32
    %c0_i32_0 = arith.constant 0 : i32
    %c0_i32_1 = arith.constant 0 : i32
    return %c0_i32, %c0_i32_0 : i32, i32
  }
  func.func @transform_5(%arg0: i32) -> (i32, i32, i32) {
    %c0_i32 = arith.constant 0 : i32
    %c0_i32_0 = arith.constant 0 : i32
    %c0_i32_1 = arith.constant 0 : i32
    %c0_i32_2 = arith.constant 0 : i32
    return %c0_i32, %c0_i32_0, %c0_i32_1 : i32, i32, i32
  }
  func.func @transform_6(%arg0: i32) -> (i32, i32, i32) {
    %c0_i32 = arith.constant 0 : i32
    %c0_i32_0 = arith.constant 0 : i32
    %c0_i32_1 = arith.constant 0 : i32
    %c0_i32_2 = arith.constant 0 : i32
    return %c0_i32, %c0_i32_0, %c0_i32_1 : i32, i32, i32
  }
  func.func @transform_7(%arg0: i32) -> (i32, i32) {
    %c0_i32 = arith.constant 0 : i32
    %c0_i32_0 = arith.constant 0 : i32
    %c0_i32_1 = arith.constant 0 : i32
    return %c0_i32, %c0_i32_0 : i32, i32
  }
  func.func @transform_8(%arg0: i32) -> (i32, i32) {
    %c0_i32 = arith.constant 0 : i32
    %c0_i32_0 = arith.constant 0 : i32
    %c0_i32_1 = arith.constant 0 : i32
    return %c0_i32, %c0_i32_0 : i32, i32
  }
  func.func @transform_9(%arg0: i32) -> (i32, i32, i32) {
    %c0_i32 = arith.constant 0 : i32
    %c0_i32_0 = arith.constant 0 : i32
    %c0_i32_1 = arith.constant 0 : i32
    %c0_i32_2 = arith.constant 0 : i32
    return %c0_i32, %c0_i32_0, %c0_i32_1 : i32, i32, i32
  }
  func.func @transform_10(%arg0: i32) -> (i32, i32, i32) {
    %c0_i32 = arith.constant 0 : i32
    %c0_i32_0 = arith.constant 0 : i32
    %c0_i32_1 = arith.constant 0 : i32
    %c0_i32_2 = arith.constant 0 : i32
    return %c0_i32, %c0_i32_0, %c0_i32_1 : i32, i32, i32
  }
  func.func @transform_11(%arg0: i32) -> (i32, i32) {
    %c0_i32 = arith.constant 0 : i32
    %c0_i32_0 = arith.constant 0 : i32
    %c0_i32_1 = arith.constant 0 : i32
    return %c0_i32, %c0_i32_0 : i32, i32
  }
  func.func @transform_12(%arg0: i32) -> (i32, i32) {
    %c0_i32 = arith.constant 0 : i32
    %c0_i32_0 = arith.constant 0 : i32
    %c0_i32_1 = arith.constant 0 : i32
    return %c0_i32, %c0_i32_0 : i32, i32
  }
  func.func @transform_13(%arg0: i32) -> (i32, i32) {
    %c0_i32 = arith.constant 0 : i32
    %c0_i32_0 = arith.constant 0 : i32
    %c0_i32_1 = arith.constant 0 : i32
    return %c0_i32, %c0_i32_0 : i32, i32
  }
  func.func @transform_14(%arg0: i32) -> (i32, i32, i32, i32) {
    %c0_i32 = arith.constant 0 : i32
    %c0_i32_0 = arith.constant 0 : i32
    %c0_i32_1 = arith.constant 0 : i32
    %c0_i32_2 = arith.constant 0 : i32
    return %arg0, %c0_i32, %c0_i32_0, %c0_i32_1 : i32, i32, i32, i32
  }
}

</mosaic_0001>

<llo_original>
// kernel: tpu_custom_call.1
$region0: #{tpu_custom_call.1}
  #allocation0 [shape = 'u32[]', space=smem, size = 0x4, offset = 0x4, fixed_abs, tag = 'smem constant byte address 0x4 - core index']
  #allocation1 [shape = 'u32[144,128]{1,0:T(1,128)}', space=vmem, size = 0x12000, scoped, tag = 'internal scratch']
  %s0 = inlined_call_operand.hbm [shape: f32[2,16,32], index: 0, kind: input, shape index: {}]
  %s1 = inlined_call_operand.hbm [shape: f32[32,128], index: 1, kind: input, shape index: {}]
  %s2 = inlined_call_operand.vmem [shape: f32[1,128], index: 2, kind: input, shape index: {}]
  %s3 = inlined_call_operand.hbm [shape: f32[4,16,16], index: 3, kind: input, shape index: {}]
  %s4 = inlined_call_operand.vmem [shape: f32[2,128], index: 4, kind: input, shape index: {}]
  %s5 = inlined_call_operand.hbm [shape: f32[2,128,384], index: 5, kind: input, shape index: {}]
  %s6 = inlined_call_operand.hbm [shape: f32[2,128,128], index: 6, kind: input, shape index: {}]
  %s7 = inlined_call_operand.vmem [shape: f32[2,128], index: 7, kind: input, shape index: {}]
  %s8 = inlined_call_operand.vmem [shape: f32[2,128], index: 8, kind: input, shape index: {}]
  %s9 = inlined_call_operand.hbm [shape: f32[2,128,256], index: 9, kind: input, shape index: {}]
  %s10 = inlined_call_operand.hbm [shape: f32[2,128,128], index: 10, kind: input, shape index: {}]
  %s11 = inlined_call_operand.vmem [shape: f32[1,128], index: 11, kind: input, shape index: {}]
  %s12 = inlined_call_operand.hbm [shape: f32[128,384], index: 12, kind: input, shape index: {}]
  %s13 = inlined_call_operand.vmem [shape: f32[3,128], index: 13, kind: input, shape index: {}]
  %s14 = inlined_call_operand.hbm [shape: f32[2,3,16,128], index: 14, kind: output, shape index: {}]
  %s15 = sld [smem:[#allocation0]]
  $region98: #{tpu_custom_call.1} parent=0
    _
  %s17 = ssub.s32 1, %s15
  %s18 = scalar_select 0, %s17, %s15
  $region1: #{tpu_custom_call.1} parent=0
    #allocation2 [shape = 'u8[16384]{0}', space=vmem, size = 0x4000, scoped, tag = 'input window, operand 0, single buffered']
    #allocation3 [shape = 's32[1]{0}', space=sflag, size = 0x4, scoped, tag = 'scoped memory for tpu_custom_call.1']
    #allocation4 [shape = 's32[1]{0}', space=sflag, size = 0x4, scoped, tag = 'scoped memory for tpu_custom_call.1']
    #allocation5 [shape = 'u8[16384]{0}', space=vmem, size = 0x4000, scoped, tag = 'input window, operand 1, single buffered']
    #allocation6 [shape = 's32[1]{0}', space=sflag, size = 0x4, scoped, tag = 'scoped memory for tpu_custom_call.1']
    #allocation7 [shape = 'u8[32768]{0}', space=vmem, size = 0x8000, scoped, tag = 'input window, operand 3, single buffered']
    #allocation8 [shape = 'u8[393216]{0}', space=vmem, size = 0x60000, scoped, tag = 'input window, operand 5, single buffered']
    #allocation9 [shape = 's32[1]{0}', space=sflag, size = 0x4, scoped, tag = 'scoped memory for tpu_custom_call.1']
    #allocation10 [shape = 'u8[131072]{0}', space=vmem, size = 0x20000, scoped, tag = 'input window, operand 6, single buffered']
    #allocation11 [shape = 'u8[262144]{0}', space=vmem, size = 0x40000, scoped, tag = 'input window, operand 9, single buffered']
    #allocation12 [shape = 's32[1]{0}', space=sflag, size = 0x4, scoped, tag = 'scoped memory for tpu_custom_call.1']
    #allocation13 [shape = 'u8[131072]{0}', space=vmem, size = 0x20000, scoped, tag = 'input window, operand 10, single buffered']
    #allocation14 [shape = 'u8[196608]{0}', space=vmem, size = 0x30000, scoped, tag = 'input window, operand 12, single buffered']
    #allocation15 [shape = 's32[1]{0}', space=sflag, size = 0x4, scoped, tag = 'scoped memory for tpu_custom_call.1']
    #allocation16 [shape = 'u8[49152]{0}', space=vmem, size = 0xc000, scoped, tag = 'output window, operand 0, single buffered']
    %19 = vsyncpa [#allocation3], 0
    %20 = vsyncpa [#allocation6], 0
    %21 = vsyncpa [#allocation9], 0
    %22 = vsyncpa [#allocation12], 0
    %23 = vsyncpa [#allocation15], 0
    %24 = vsyncpa [#allocation4], 0
    // Predicated region
    $region2: #{tpu_custom_call.1} parent=1 // pred_check
      _
    $region3: #{tpu_custom_call.1} parent=1 // pred_check_branch
      %26 = sbr.rel (0) target = $region5
    $region4: #{tpu_custom_call.1} parent=1 // pred_region
      %s28 = ssub.s32 512, 512
      %29 = vsyncadd [#allocation3], %s28
      %s30 = sshll.u32 [#allocation2], 4
      %s31 = int_to_ptr.vmem [resolvable:$true] %s30
      %36 = dma.hbm_to_vmem [thread:$0]  %s0, 512, %s31, [#allocation3], 128, 128, 8
    $region5: #{tpu_custom_call.1} parent=1 // pred_fallthru
      _
    // Predicated region
    $region6: #{tpu_custom_call.1} parent=1 // pred_check
      _
    $region7: #{tpu_custom_call.1} parent=1 // pred_check_branch
      %38 = sbr.rel (0) target = $region9
    $region8: #{tpu_custom_call.1} parent=1 // pred_region
      %s40 = ssub.s32 512, 512
      %41 = vsyncadd [#allocation6], %s40
      %s42 = sshll.u32 [#allocation5], 4
      %s43 = int_to_ptr.vmem [resolvable:$true] %s42
      %48 = dma.hbm_to_vmem [thread:$0]  %s1, 512, %s43, [#allocation6], 128, 128, 8
    $region9: #{tpu_custom_call.1} parent=1 // pred_fallthru
      _
    // Predicated region
    $region10: #{tpu_custom_call.1} parent=1 // pred_check
      _
    $region11: #{tpu_custom_call.1} parent=1 // pred_check_branch
      %50 = sbr.rel (0) target = $region13
    $region12: #{tpu_custom_call.1} parent=1 // pred_region
      _
    $region13: #{tpu_custom_call.1} parent=1 // pred_fallthru
      _
    // Predicated region
    $region14: #{tpu_custom_call.1} parent=1 // pred_check
      _
    $region15: #{tpu_custom_call.1} parent=1 // pred_check_branch
      %52 = sbr.rel (0) target = $region17
    $region16: #{tpu_custom_call.1} parent=1 // pred_region
      %s54 = ssub.s32 1024, 1024
      %55 = vsyncadd [#allocation6], %s54
      %s56 = sshll.u32 [#allocation7], 4
      %s57 = int_to_ptr.vmem [resolvable:$true] %s56
      %62 = dma.hbm_to_vmem [thread:$0]  %s3, 1024, %s57, [#allocation6], 128, 128, 8
    $region17: #{tpu_custom_call.1} parent=1 // pred_fallthru
      _
    // Predicated region
    $region18: #{tpu_custom_call.1} parent=1 // pred_check
      _
    $region19: #{tpu_custom_call.1} parent=1 // pred_check_branch
      %64 = sbr.rel (0) target = $region21
    $region20: #{tpu_custom_call.1} parent=1 // pred_region
      _
    $region21: #{tpu_custom_call.1} parent=1 // pred_fallthru
      _
    // Predicated region
    $region22: #{tpu_custom_call.1} parent=1 // pred_check
      _
    $region23: #{tpu_custom_call.1} parent=1 // pred_check_branch
      %66 = sbr.rel (0) target = $region25
    $region24: #{tpu_custom_call.1} parent=1 // pred_region
      %s68 = ssub.s32 12288, 12288
      %69 = vsyncadd [#allocation9], %s68
      %s70 = sshll.u32 [#allocation8], 4
      %s71 = int_to_ptr.vmem [resolvable:$true] %s70
      %76 = dma.hbm_to_vmem [thread:$0]  %s5, 12288, %s71, [#allocation9], 384, 384, 24
    $region25: #{tpu_custom_call.1} parent=1 // pred_fallthru
      _
    // Predicated region
    $region26: #{tpu_custom_call.1} parent=1 // pred_check
      _
    $region27: #{tpu_custom_call.1} parent=1 // pred_check_branch
      %78 = sbr.rel (0) target = $region29
    $region28: #{tpu_custom_call.1} parent=1 // pred_region
      %s80 = ssub.s32 4096, 4096
      %81 = vsyncadd [#allocation9], %s80
      %s82 = sshll.u32 [#allocation10], 4
      %s83 = int_to_ptr.vmem [resolvable:$true] %s82
      %88 = dma.hbm_to_vmem [thread:$0]  %s6, 4096, %s83, [#allocation9], 128, 128, 8
    $region29: #{tpu_custom_call.1} parent=1 // pred_fallthru
      _
    // Predicated region
    $region30: #{tpu_custom_call.1} parent=1 // pred_check
      _
    $region31: #{tpu_custom_call.1} parent=1 // pred_check_branch
      %90 = sbr.rel (0) target = $region33
    $region32: #{tpu_custom_call.1} parent=1 // pred_region
      _
    $region33: #{tpu_custom_call.1} parent=1 // pred_fallthru
      _
    // Predicated region
    $region34: #{tpu_custom_call.1} parent=1 // pred_check
      _
    $region35: #{tpu_custom_call.1} parent=1 // pred_check_branch
      %92 = sbr.rel (0) target = $region37
    $region36: #{tpu_custom_call.1} parent=1 // pred_region
      _
    $region37: #{tpu_custom_call.1} parent=1 // pred_fallthru
      _
    // Predicated region
    $region38: #{tpu_custom_call.1} parent=1 // pred_check
      _
    $region39: #{tpu_custom_call.1} parent=1 // pred_check_branch
      %94 = sbr.rel (0) target = $region41
    $region40: #{tpu_custom_call.1} parent=1 // pred_region
      %s96 = ssub.s32 8192, 8192
      %97 = vsyncadd [#allocation12], %s96
      %s98 = sshll.u32 [#allocation11], 4
      %s99 = int_to_ptr.vmem [resolvable:$true] %s98
      %104 = dma.hbm_to_vmem [thread:$0]  %s9, 8192, %s99, [#allocation12], 256, 256, 16
    $region41: #{tpu_custom_call.1} parent=1 // pred_fallthru
      _
    // Predicated region
    $region42: #{tpu_custom_call.1} parent=1 // pred_check
      _
    $region43: #{tpu_custom_call.1} parent=1 // pred_check_branch
      %106 = sbr.rel (0) target = $region45
    $region44: #{tpu_custom_call.1} parent=1 // pred_region
      %s108 = ssub.s32 4096, 4096
      %109 = vsyncadd [#allocation12], %s108
      %s110 = sshll.u32 [#allocation13], 4
      %s111 = int_to_ptr.vmem [resolvable:$true] %s110
      %116 = dma.hbm_to_vmem [thread:$0]  %s10, 4096, %s111, [#allocation12], 128, 128, 8
    $region45: #{tpu_custom_call.1} parent=1 // pred_fallthru
      _
    // Predicated region
    $region46: #{tpu_custom_call.1} parent=1 // pred_check
      _
    $region47: #{tpu_custom_call.1} parent=1 // pred_check_branch
      %118 = sbr.rel (0) target = $region49
    $region48: #{tpu_custom_call.1} parent=1 // pred_region
      _
    $region49: #{tpu_custom_call.1} parent=1 // pred_fallthru
      _
    // Predicated region
    $region50: #{tpu_custom_call.1} parent=1 // pred_check
      _
    $region51: #{tpu_custom_call.1} parent=1 // pred_check_branch
      %120 = sbr.rel (0) target = $region53
    $region52: #{tpu_custom_call.1} parent=1 // pred_region
      %s122 = ssub.s32 6144, 6144
      %123 = vsyncadd [#allocation15], %s122
      %s124 = sshll.u32 [#allocation14], 4
      %s125 = int_to_ptr.vmem [resolvable:$true] %s124
      %130 = dma.hbm_to_vmem [thread:$0]  %s12, 6144, %s125, [#allocation15], 384, 384, 24
    $region53: #{tpu_custom_call.1} parent=1 // pred_fallthru
      _
    // Predicated region
    $region54: #{tpu_custom_call.1} parent=1 // pred_check
      _
    $region55: #{tpu_custom_call.1} parent=1 // pred_check_branch
      %132 = sbr.rel (0) target = $region57
    $region56: #{tpu_custom_call.1} parent=1 // pred_region
      _
    $region57: #{tpu_custom_call.1} parent=1 // pred_fallthru
      _
    // Predicated region
    $region58: #{tpu_custom_call.1} parent=1 // pred_check
      _
    $region59: #{tpu_custom_call.1} parent=1 // pred_check_branch
      %134 = sbr.rel (0) target = $region61
    $region60: #{tpu_custom_call.1} parent=1 // pred_region
      %135 = dma.done [#allocation3], 512
    $region61: #{tpu_custom_call.1} parent=1 // pred_fallthru
      _
    // Predicated region
    $region62: #{tpu_custom_call.1} parent=1 // pred_check
      _
    $region63: #{tpu_custom_call.1} parent=1 // pred_check_branch
      %137 = sbr.rel (0) target = $region65
    $region64: #{tpu_custom_call.1} parent=1 // pred_region
      %138 = dma.done [#allocation6], 512
    $region65: #{tpu_custom_call.1} parent=1 // pred_fallthru
      _
    // Predicated region
    $region66: #{tpu_custom_call.1} parent=1 // pred_check
      _
    $region67: #{tpu_custom_call.1} parent=1 // pred_check_branch
      %140 = sbr.rel (0) target = $region69
    $region68: #{tpu_custom_call.1} parent=1 // pred_region
      %141 = dma.done [#allocation6], 1024
    $region69: #{tpu_custom_call.1} parent=1 // pred_fallthru
      _
    // Predicated region
    $region70: #{tpu_custom_call.1} parent=1 // pred_check
      _
    $region71: #{tpu_custom_call.1} parent=1 // pred_check_branch
      %143 = sbr.rel (0) target = $region73
    $region72: #{tpu_custom_call.1} parent=1 // pred_region
      %144 = dma.done [#allocation9], 12288
    $region73: #{tpu_custom_call.1} parent=1 // pred_fallthru
      _
    // Predicated region
    $region74: #{tpu_custom_call.1} parent=1 // pred_check
      _
    $region75: #{tpu_custom_call.1} parent=1 // pred_check_branch
      %146 = sbr.rel (0) target = $region77
    $region76: #{tpu_custom_call.1} parent=1 // pred_region
      %147 = dma.done [#allocation9], 4096
    $region77: #{tpu_custom_call.1} parent=1 // pred_fallthru
      _
    // Predicated region
    $region78: #{tpu_custom_call.1} parent=1 // pred_check
      _
    $region79: #{tpu_custom_call.1} parent=1 // pred_check_branch
      %149 = sbr.rel (0) target = $region81
    $region80: #{tpu_custom_call.1} parent=1 // pred_region
      %150 = dma.done [#allocation12], 8192
    $region81: #{tpu_custom_call.1} parent=1 // pred_fallthru
      _
    // Predicated region
    $region82: #{tpu_custom_call.1} parent=1 // pred_check
      _
    $region83: #{tpu_custom_call.1} parent=1 // pred_check_branch
      %152 = sbr.rel (0) target = $region85
    $region84: #{tpu_custom_call.1} parent=1 // pred_region
      %153 = dma.done [#allocation12], 4096
    $region85: #{tpu_custom_call.1} parent=1 // pred_fallthru
      _
    // Predicated region
    $region86: #{tpu_custom_call.1} parent=1 // pred_check
      _
    $region87: #{tpu_custom_call.1} parent=1 // pred_check_branch
      %155 = sbr.rel (0) target = $region89
    $region88: #{tpu_custom_call.1} parent=1 // pred_region
      %156 = dma.done [#allocation15], 6144
    $region89: #{tpu_custom_call.1} parent=1 // pred_fallthru
      _
    %v157 = vld [vmem:[#allocation2] sm:$0xff]
    %v158 = vld [vmem:[#allocation2 + $0x8] sm:$0xff]
    %v159 = vld [vmem:[#allocation2 + $0x10] sm:$0xff]
    %v160 = vld [vmem:[#allocation2 + $0x18] sm:$0xff]
    %v161 = vld [vmem:[#allocation5] sm:$0xff]
    %v162 = vld [vmem:[#allocation5 + $0x8] sm:$0xff]
    %v163 = vld [vmem:[#allocation5 + $0x10] sm:$0xff]
    %v164 = vld [vmem:[#allocation5 + $0x18] sm:$0xff]
    %v165 = vld [vmem:[%s2] sm:$0x1]
    %v167 = vlaneseq
    %v168 = vshrl.u32 %v167, 7
    %v169 = vsub.s32 0, %v168
    %v170 = vrot.slane %v165, %v169
    %vm172 = vcmask 261120
    %v174 = vsel %vm172, %v157, 0
    %v177 = vsel %vm172, %v158, 0
    %v180 = vsel %vm172, %v159, 0
    %v183 = vsel %vm172, %v160, 0
    %185 = vmatprep.subr.mxu0 0.0
    %186 = vmatpush1.msra.mxu0 %v161
    %187 = vmatprep.subr.mxu0 0.0
    %188 = vmatpush1.msra.mxu0 %v162
    %189 = vmatprep.subr.mxu0 0.0
    %190 = vmatpush1.msra.mxu0 %v163
    %191 = vmatprep.subr.mxu0 0.0
    %192 = vmatpush1.msra.mxu0 %v164
    %193 = vmatprep.subr.mxu0 0.0
    %194 = vmatpush1.msra.mxu0 0.0
    %195 = vmatprep.subr.mxu0 0.0
    %196 = vmatpush1.msra.mxu0 0.0
    %197 = vmatprep.subr.mxu0 0.0
    %198 = vmatpush1.msra.mxu0 0.0
    %199 = vmatprep.subr.mxu0 0.0
    %200 = vmatpush1.msra.mxu0 0.0
    %201 = vmatprep.subr.mxu0 0.0
    %202 = vmatpush1.msra.mxu0 0.0
    %203 = vmatprep.subr.mxu0 0.0
    %204 = vmatpush1.msra.mxu0 0.0
    %205 = vmatprep.subr.mxu0 0.0
    %206 = vmatpush1.msra.mxu0 0.0
    %207 = vmatprep.subr.mxu0 0.0
    %208 = vmatpush1.msra.mxu0 0.0
    %209 = vmatprep.subr.mxu0 0.0
    %210 = vmatpush1.msra.mxu0 0.0
    %211 = vmatprep.subr.mxu0 0.0
    %212 = vmatpush1.msra.mxu0 0.0
    %213 = vmatprep.subr.mxu0 0.0
    %214 = vmatpush1.msra.mxu0 0.0
    %215 = vmatprep.subr.mxu0 0.0
    %216 = vmatpush1.msra.mxu0 0.0
    %217 = vmatprep.subr.mxu0 0.0
    %218 = vmatpush1.msra.mxu0 0.0
    %219 = vmatprep.subr.mxu0 0.0
    %220 = vmatpush1.msra.mxu0 0.0
    %221 = vmatprep.subr.mxu0 0.0
    %222 = vmatpush1.msra.mxu0 0.0
    %223 = vmatprep.subr.mxu0 0.0
    %224 = vmatpush1.msra.mxu0 0.0
    %225 = vmatprep.subr.mxu0 0.0
    %226 = vmatpush1.msra.mxu0 0.0
    %227 = vmatprep.subr.mxu0 0.0
    %228 = vmatpush1.msra.mxu0 0.0
    %229 = vmatprep.subr.mxu0 0.0
    %230 = vmatpush1.msra.mxu0 0.0
    %231 = vmatprep.subr.mxu0 0.0
    %232 = vmatpush1.msra.mxu0 0.0
    %233 = vmatprep.subr.mxu0 0.0
    %234 = vmatpush1.msra.mxu0 0.0
    %235 = vmatprep.subr.mxu0 0.0
    %236 = vmatpush1.msra.mxu0 0.0
    %237 = vmatprep.subr.mxu0 0.0
    %238 = vmatpush1.msra.mxu0 0.0
    %239 = vmatprep.subr.mxu0 0.0
    %240 = vmatpush1.msra.mxu0 0.0
    %241 = vmatprep.subr.mxu0 0.0
    %242 = vmatpush1.msra.mxu0 0.0
    %243 = vmatprep.subr.mxu0 0.0
    %244 = vmatpush1.msra.mxu0 0.0
    %245 = vmatprep.subr.mxu0 0.0
    %246 = vmatpush1.msra.mxu0 0.0
    %247 = vmatprep.subr.mxu0 0.0
    %248 = vmatpush1.msra.mxu0 0.0
    %249 = vmatprep.mubr.f32.mxu0 0.0
    %250 = vmatmul.mubr.f32.gmra.mrb[0].mxu0 %v174
    %v251 = vpop.f32.mrb[0].mxu0
    %v252 = vadd.f32 %v170, %v251
    %v253 = vpop.f32.mrb[0].mxu0
    %254 = vmatprep.mubr.f32.mxu0 0.0
    %255 = vmatmul.mubr.f32.gmra.mrb[0].mxu0 %v177
    %v256 = vpop.f32.mrb[0].mxu0
    %v257 = vadd.f32 %v170, %v256
    %v258 = vpop.f32.mrb[0].mxu0
    %259 = vmatprep.mubr.f32.mxu0 0.0
    %260 = vmatmul.mubr.f32.gmra.mrb[0].mxu0 %v180
    %v261 = vpop.f32.mrb[0].mxu0
    %v262 = vadd.f32 %v170, %v261
    %v263 = vpop.f32.mrb[0].mxu0
    %264 = vmatprep.mubr.f32.mxu0 0.0
    %265 = vmatmul.mubr.f32.gmra.mrb[0].mxu0 %v183
    %v266 = vpop.f32.mrb[0].mxu0
    %v267 = vadd.f32 %v170, %v266
    %v268 = vpop.f32.mrb[0].mxu0
    %269 = vdwg.mxu0
    %v270 = vld [vmem:[%s4] sm:$0x1]
    %v271 = vmul.f32 %v252, %v252
    %v272 = vmul.f32 %v257, %v257
    %v273 = vmul.f32 %v262, %v262
    %v274 = vmul.f32 %v267, %v267
    %275 = vadd.xlane.f32.xlu0 %v271
    %v276 = vpop.xlane.xlu0 %275
    %277 = vadd.xlane.f32.xlu0 %v272
    %v278 = vpop.xlane.xlu0 %277
    %279 = vadd.xlane.f32.xlu0 %v273
    %v280 = vpop.xlane.xlu0 %279
    %281 = vadd.xlane.f32.xlu0 %v274
    %v282 = vpop.xlane.xlu0 %281
    %v283 = vrcp.pop 128.0
    %v284 = vmul.f32 %v276, %v283
    %v285 = vmul.f32 %v278, %v283
    %v286 = vmul.f32 %v280, %v283
    %v287 = vmul.f32 %v282, %v283
    %v288 = vadd.f32 %v284, 1e-05
    %v289 = vadd.f32 %v285, 1e-05
    %v290 = vadd.f32 %v286, 1e-05
    %v291 = vadd.f32 %v287, 1e-05
    %v292 = vrsqrt.pop %v288
    %v293 = vrsqrt.pop %v289
    %v294 = vrsqrt.pop %v290
    %v295 = vrsqrt.pop %v291
    %v296 = vmul.f32 %v252, %v292
    %v297 = vmul.f32 %v257, %v293
    %v298 = vmul.f32 %v262, %v294
    %v299 = vmul.f32 %v267, %v295
    %v300 = vlaneseq
    %v301 = vshrl.u32 %v300, 7
    %v302 = vsub.s32 0, %v301
    %v303 = vrot.slane %v270, %v302
    %v304 = vmul.f32 %v296, %v303
    %v305 = vmul.f32 %v297, %v303
    %v306 = vmul.f32 %v298, %v303
    %v307 = vmul.f32 %v299, %v303
    %v308 = vld [vmem:[#allocation8] sm:$0xff]
    %v309 = vld [vmem:[#allocation8 + $0x8] sm:$0xff]
    %v310 = vld [vmem:[#allocation8 + $0x10] sm:$0xff]
    %v311 = vld [vmem:[#allocation8 + $0x18] sm:$0xff]
    %v312 = vld [vmem:[#allocation8 + $0x20] sm:$0xff]
    %v313 = vld [vmem:[#allocation8 + $0x28] sm:$0xff]
    %v314 = vld [vmem:[#allocation8 + $0x30] sm:$0xff]
    %v315 = vld [vmem:[#allocation8 + $0x38] sm:$0xff]
    %v316 = vld [vmem:[#allocation8 + $0x40] sm:$0xff]
    %v317 = vld [vmem:[#allocation8 + $0x48] sm:$0xff]
    %v318 = vld [vmem:[#allocation8 + $0x50] sm:$0xff]
    %v319 = vld [vmem:[#allocation8 + $0x58] sm:$0xff]
    %v320 = vld [vmem:[#allocation8 + $0x60] sm:$0xff]
    %v321 = vld [vmem:[#allocation8 + $0x68] sm:$0xff]
    %v322 = vld [vmem:[#allocation8 + $0x70] sm:$0xff]
    %v323 = vld [vmem:[#allocation8 + $0x78] sm:$0xff]
    %v324 = vld [vmem:[#allocation8 + $0x80] sm:$0xff]
    %v325 = vld [vmem:[#allocation8 + $0x88] sm:$0xff]
    %v326 = vld [vmem:[#allocation8 + $0x90] sm:$0xff]
    %v327 = vld [vmem:[#allocation8 + $0x98] sm:$0xff]
    %v328 = vld [vmem:[#allocation8 + $0xa0] sm:$0xff]
    %v329 = vld [vmem:[#allocation8 + $0xa8] sm:$0xff]
    %v330 = vld [vmem:[#allocation8 + $0xb0] sm:$0xff]
    %v331 = vld [vmem:[#allocation8 + $0xb8] sm:$0xff]
    %v332 = vld [vmem:[#allocation8 + $0xc0] sm:$0xff]
    %v333 = vld [vmem:[#allocation8 + $0xc8] sm:$0xff]
    %v334 = vld [vmem:[#allocation8 + $0xd0] sm:$0xff]
    %v335 = vld [vmem:[#allocation8 + $0xd8] sm:$0xff]
    %v336 = vld [vmem:[#allocation8 + $0xe0] sm:$0xff]
    %v337 = vld [vmem:[#allocation8 + $0xe8] sm:$0xff]
    %v338 = vld [vmem:[#allocation8 + $0xf0] sm:$0xff]
    %v339 = vld [vmem:[#allocation8 + $0xf8] sm:$0xff]
    %v340 = vld [vmem:[#allocation8 + $0x100] sm:$0xff]
    %v341 = vld [vmem:[#allocation8 + $0x108] sm:$0xff]
    %v342 = vld [vmem:[#allocation8 + $0x110] sm:$0xff]
    %v343 = vld [vmem:[#allocation8 + $0x118] sm:$0xff]
    %v344 = vld [vmem:[#allocation8 + $0x120] sm:$0xff]
    %v345 = vld [vmem:[#allocation8 + $0x128] sm:$0xff]
    %v346 = vld [vmem:[#allocation8 + $0x130] sm:$0xff]
    %v347 = vld [vmem:[#allocation8 + $0x138] sm:$0xff]
    %v348 = vld [vmem:[#allocation8 + $0x140] sm:$0xff]
    %v349 = vld [vmem:[#allocation8 + $0x148] sm:$0xff]
    %v350 = vld [vmem:[#allocation8 + $0x150] sm:$0xff]
    %v351 = vld [vmem:[#allocation8 + $0x158] sm:$0xff]
    %v352 = vld [vmem:[#allocation8 + $0x160] sm:$0xff]
    %v353 = vld [vmem:[#allocation8 + $0x168] sm:$0xff]
    %v354 = vld [vmem:[#allocation8 + $0x170] sm:$0xff]
    %v355 = vld [vmem:[#allocation8 + $0x178] sm:$0xff]
    %356 = vmatprep.subr.mxu0 %v309
    %357 = vmatpush1.msra.mxu0 %v308
    %358 = vmatprep.subr.mxu0 %v312
    %359 = vmatpush1.msra.mxu0 %v311
    %360 = vmatprep.subr.mxu0 %v315
    %361 = vmatpush1.msra.mxu0 %v314
    %362 = vmatprep.subr.mxu0 %v318
    %363 = vmatpush1.msra.mxu0 %v317
    %364 = vmatprep.subr.mxu0 %v321
    %365 = vmatpush1.msra.mxu0 %v320
    %366 = vmatprep.subr.mxu0 %v324
    %367 = vmatpush1.msra.mxu0 %v323
    %368 = vmatprep.subr.mxu0 %v327
    %369 = vmatpush1.msra.mxu0 %v326
    %370 = vmatprep.subr.mxu0 %v330
    %371 = vmatpush1.msra.mxu0 %v329
    %372 = vmatprep.subr.mxu0 %v333
    %373 = vmatpush1.msra.mxu0 %v332
    %374 = vmatprep.subr.mxu0 %v336
    %375 = vmatpush1.msra.mxu0 %v335
    %376 = vmatprep.subr.mxu0 %v339
    %377 = vmatpush1.msra.mxu0 %v338
    %378 = vmatprep.subr.mxu0 %v342
    %379 = vmatpush1.msra.mxu0 %v341
    %380 = vmatprep.subr.mxu0 %v345
    %381 = vmatpush1.msra.mxu0 %v344
    %382 = vmatprep.subr.mxu0 %v348
    %383 = vmatpush1.msra.mxu0 %v347
    %384 = vmatprep.subr.mxu0 %v351
    %385 = vmatpush1.msra.mxu0 %v350
    %386 = vmatprep.subr.mxu0 %v354
    %387 = vmatpush1.msra.mxu0 %v353
    %388 = vmatprep.subr.mxu0 0.0
    %389 = vmatpush1.msra.mxu0 0.0
    %390 = vmatprep.subr.mxu0 0.0
    %391 = vmatpush1.msra.mxu0 0.0
    %392 = vmatprep.subr.mxu0 0.0
    %393 = vmatpush1.msra.mxu0 0.0
    %394 = vmatprep.subr.mxu0 0.0
    %395 = vmatpush1.msra.mxu0 0.0
    %396 = vmatprep.subr.mxu0 0.0
    %397 = vmatpush1.msra.mxu0 0.0
    %398 = vmatprep.subr.mxu0 0.0
    %399 = vmatpush1.msra.mxu0 0.0
    %400 = vmatprep.subr.mxu0 0.0
    %401 = vmatpush1.msra.mxu0 0.0
    %402 = vmatprep.subr.mxu0 0.0
    %403 = vmatpush1.msra.mxu0 0.0
    %404 = vmatprep.subr.mxu0 0.0
    %405 = vmatpush1.msra.mxu0 0.0
    %406 = vmatprep.subr.mxu0 0.0
    %407 = vmatpush1.msra.mxu0 0.0
    %408 = vmatprep.subr.mxu0 0.0
    %409 = vmatpush1.msra.mxu0 0.0
    %410 = vmatprep.subr.mxu0 0.0
    %411 = vmatpush1.msra.mxu0 0.0
    %412 = vmatprep.subr.mxu0 0.0
    %413 = vmatpush1.msra.mxu0 0.0
    %414 = vmatprep.subr.mxu0 0.0
    %415 = vmatpush1.msra.mxu0 0.0
    %416 = vmatprep.subr.mxu0 0.0
    %417 = vmatpush1.msra.mxu0 0.0
    %418 = vmatprep.subr.mxu0 0.0
    %419 = vmatpush1.msra.mxu0 0.0
    %420 = vmatprep.mubr.f32.mxu0 0.0
    %421 = vmatmul.mubr.f32.gmra.mrb[0].mxu0 %v304
    %v422 = vpop.f32.mrb[0].mxu0
    %v423 = vadd.f32 0.0, %v422
    %v424 = vpop.f32.mrb[0].mxu0
    %v425 = vadd.f32 0.0, %v424
    %426 = vmatprep.mubr.f32.mxu0 0.0
    %427 = vmatmul.mubr.f32.gmra.mrb[0].mxu0 %v305
    %v428 = vpop.f32.mrb[0].mxu0
    %v429 = vadd.f32 0.0, %v428
    %v430 = vpop.f32.mrb[0].mxu0
    %v431 = vadd.f32 0.0, %v430
    %432 = vmatprep.mubr.f32.mxu0 0.0
    %433 = vmatmul.mubr.f32.gmra.mrb[0].mxu0 %v306
    %v434 = vpop.f32.mrb[0].mxu0
    %v435 = vadd.f32 0.0, %v434
    %v436 = vpop.f32.mrb[0].mxu0
    %v437 = vadd.f32 0.0, %v436
    %438 = vmatprep.mubr.f32.mxu0 0.0
    %439 = vmatmul.mubr.f32.gmra.mrb[0].mxu0 %v307
    %v440 = vpop.f32.mrb[0].mxu0
    %v441 = vadd.f32 0.0, %v440
    %v442 = vpop.f32.mrb[0].mxu0
    %v443 = vadd.f32 0.0, %v442
    %444 = vdwg.mxu0
    %445 = vmatprep.subr.mxu0 0.0
    %446 = vmatpush1.msra.mxu0 %v310
    %447 = vmatprep.subr.mxu0 0.0
    %448 = vmatpush1.msra.mxu0 %v313
    %449 = vmatprep.subr.mxu0 0.0
    %450 = vmatpush1.msra.mxu0 %v316
    %451 = vmatprep.subr.mxu0 0.0
    %452 = vmatpush1.msra.mxu0 %v319
    %453 = vmatprep.subr.mxu0 0.0
    %454 = vmatpush1.msra.mxu0 %v322
    %455 = vmatprep.subr.mxu0 0.0
    %456 = vmatpush1.msra.mxu0 %v325
    %457 = vmatprep.subr.mxu0 0.0
    %458 = vmatpush1.msra.mxu0 %v328
    %459 = vmatprep.subr.mxu0 0.0
    %460 = vmatpush1.msra.mxu0 %v331
    %461 = vmatprep.subr.mxu0 0.0
    %462 = vmatpush1.msra.mxu0 %v334
    %463 = vmatprep.subr.mxu0 0.0
    %464 = vmatpush1.msra.mxu0 %v337
    %465 = vmatprep.subr.mxu0 0.0
    %466 = vmatpush1.msra.mxu0 %v340
    %467 = vmatprep.subr.mxu0 0.0
    %468 = vmatpush1.msra.mxu0 %v343
    %469 = vmatprep.subr.mxu0 0.0
    %470 = vmatpush1.msra.mxu0 %v346
    %471 = vmatprep.subr.mxu0 0.0
    %472 = vmatpush1.msra.mxu0 %v349
    %473 = vmatprep.subr.mxu0 0.0
    %474 = vmatpush1.msra.mxu0 %v352
    %475 = vmatprep.subr.mxu0 0.0
    %476 = vmatpush1.msra.mxu0 %v355
    %477 = vmatprep.subr.mxu0 0.0
    %478 = vmatpush1.msra.mxu0 0.0
    %479 = vmatprep.subr.mxu0 0.0
    %480 = vmatpush1.msra.mxu0 0.0
    %481 = vmatprep.subr.mxu0 0.0
    %482 = vmatpush1.msra.mxu0 0.0
    %483 = vmatprep.subr.mxu0 0.0
    %484 = vmatpush1.msra.mxu0 0.0
    %485 = vmatprep.subr.mxu0 0.0
    %486 = vmatpush1.msra.mxu0 0.0
    %487 = vmatprep.subr.mxu0 0.0
    %488 = vmatpush1.msra.mxu0 0.0
    %489 = vmatprep.subr.mxu0 0.0
    %490 = vmatpush1.msra.mxu0 0.0
    %491 = vmatprep.subr.mxu0 0.0
    %492 = vmatpush1.msra.mxu0 0.0
    %493 = vmatprep.subr.mxu0 0.0
    %494 = vmatpush1.msra.mxu0 0.0
    %495 = vmatprep.subr.mxu0 0.0
    %496 = vmatpush1.msra.mxu0 0.0
    %497 = vmatprep.subr.mxu0 0.0
    %498 = vmatpush1.msra.mxu0 0.0
    %499 = vmatprep.subr.mxu0 0.0
    %500 = vmatpush1.msra.mxu0 0.0
    %501 = vmatprep.subr.mxu0 0.0
    %502 = vmatpush1.msra.mxu0 0.0
    %503 = vmatprep.subr.mxu0 0.0
    %504 = vmatpush1.msra.mxu0 0.0
    %505 = vmatprep.subr.mxu0 0.0
    %506 = vmatpush1.msra.mxu0 0.0
    %507 = vmatprep.subr.mxu0 0.0
    %508 = vmatpush1.msra.mxu0 0.0
    %509 = vmatprep.mubr.f32.mxu0 0.0
    %510 = vmatmul.mubr.f32.gmra.mrb[0].mxu0 %v304
    %v511 = vpop.f32.mrb[0].mxu0
    %v512 = vadd.f32 0.0, %v511
    %v513 = vpop.f32.mrb[0].mxu0
    %514 = vmatprep.mubr.f32.mxu0 0.0
    %515 = vmatmul.mubr.f32.gmra.mrb[0].mxu0 %v305
    %v516 = vpop.f32.mrb[0].mxu0
    %v517 = vadd.f32 0.0, %v516
    %v518 = vpop.f32.mrb[0].mxu0
    %519 = vmatprep.mubr.f32.mxu0 0.0
    %520 = vmatmul.mubr.f32.gmra.mrb[0].mxu0 %v306
    %v521 = vpop.f32.mrb[0].mxu0
    %v522 = vadd.f32 0.0, %v521
    %v523 = vpop.f32.mrb[0].mxu0
    %524 = vmatprep.mubr.f32.mxu0 0.0
    %525 = vmatmul.mubr.f32.gmra.mrb[0].mxu0 %v307
    %v526 = vpop.f32.mrb[0].mxu0
    %v527 = vadd.f32 0.0, %v526
    %v528 = vpop.f32.mrb[0].mxu0
    %529 = vdwg.mxu0
    %532 = vrot.lane.b32.xlu0 %v423, 96
    %v533 = vpop.permute.xlu0 %532
    %534 = vrot.lane.b32.xlu0 %v429, 96
    %v535 = vpop.permute.xlu0 %534
    %536 = vrot.lane.b32.xlu0 %v423, 64
    %v537 = vpop.permute.xlu0 %536
    %538 = vrot.lane.b32.xlu0 %v429, 64
    %v539 = vpop.permute.xlu0 %538
    %540 = vrot.lane.b32.xlu0 %v423, 32
    %v541 = vpop.permute.xlu0 %540
    %542 = vrot.lane.b32.xlu0 %v429, 32
    %v543 = vpop.permute.xlu0 %542
    %546 = vrot.lane.b32.xlu0 %v425, 96
    %v547 = vpop.permute.xlu0 %546
    %548 = vrot.lane.b32.xlu0 %v431, 96
    %v549 = vpop.permute.xlu0 %548
    %550 = vrot.lane.b32.xlu0 %v425, 64
    %v551 = vpop.permute.xlu0 %550
    %552 = vrot.lane.b32.xlu0 %v431, 64
    %v553 = vpop.permute.xlu0 %552
    %554 = vrot.lane.b32.xlu0 %v425, 32
    %v555 = vpop.permute.xlu0 %554
    %556 = vrot.lane.b32.xlu0 %v431, 32
    %v557 = vpop.permute.xlu0 %556
    %560 = vrot.lane.b32.xlu0 %v512, 96
    %v561 = vpop.permute.xlu0 %560
    %562 = vrot.lane.b32.xlu0 %v517, 96
    %v563 = vpop.permute.xlu0 %562
    %566 = vrot.lane.b32.xlu0 %v512, 64
    %v567 = vpop.permute.xlu0 %566
    %568 = vrot.lane.b32.xlu0 %v517, 64
    %v569 = vpop.permute.xlu0 %568
    %572 = vrot.lane.b32.xlu0 %v512, 32
    %v573 = vpop.permute.xlu0 %572
    %574 = vrot.lane.b32.xlu0 %v517, 32
    %v575 = vpop.permute.xlu0 %574
    %v578 = vsel %vm172, %v423, 0
    %v580 = vsel %vm172, %v429, 0
    %v582 = vsel %vm172, %v425, 0
    %v584 = vsel %vm172, %v431, 0
    %586 = vmatprep.subr.mxu0 0.0
    %587 = vmatpush1.xpose.msra.mxu0 %v582
    %588 = vmatprep.subr.mxu0 0.0
    %589 = vmatpush1.xpose.msra.mxu0 %v584
    %590 = vmatprep.subr.mxu0 0.0
    %591 = vmatpush1.xpose.msra.mxu0 0.0
    %592 = vmatprep.subr.mxu0 0.0
    %593 = vmatpush1.xpose.msra.mxu0 0.0
    %594 = vmatprep.subr.mxu0 0.0
    %595 = vmatpush1.xpose.msra.mxu0 0.0
    %596 = vmatprep.subr.mxu0 0.0
    %597 = vmatpush1.xpose.msra.mxu0 0.0
    %598 = vmatprep.subr.mxu0 0.0
    %599 = vmatpush1.xpose.msra.mxu0 0.0
    %600 = vmatprep.subr.mxu0 0.0
    %601 = vmatpush1.xpose.msra.mxu0 0.0
    %602 = vmatprep.subr.mxu0 0.0
    %603 = vmatpush1.xpose.msra.mxu0 0.0
    %604 = vmatprep.subr.mxu0 0.0
    %605 = vmatpush1.xpose.msra.mxu0 0.0
    %606 = vmatprep.subr.mxu0 0.0
    %607 = vmatpush1.xpose.msra.mxu0 0.0
    %608 = vmatprep.subr.mxu0 0.0
    %609 = vmatpush1.xpose.msra.mxu0 0.0
    %610 = vmatprep.subr.mxu0 0.0
    %611 = vmatpush1.xpose.msra.mxu0 0.0
    %612 = vmatprep.subr.mxu0 0.0
    %613 = vmatpush1.xpose.msra.mxu0 0.0
    %614 = vmatprep.subr.mxu0 0.0
    %615 = vmatpush1.xpose.msra.mxu0 0.0
    %616 = vmatprep.subr.mxu0 0.0
    %617 = vmatpush1.xpose.msra.mxu0 0.0
    %618 = vmatprep.subr.mxu0 0.0
    %619 = vmatpush1.xpose.msra.mxu0 0.0
    %620 = vmatprep.subr.mxu0 0.0
    %621 = vmatpush1.xpose.msra.mxu0 0.0
    %622 = vmatprep.subr.mxu0 0.0
    %623 = vmatpush1.xpose.msra.mxu0 0.0
    %624 = vmatprep.subr.mxu0 0.0
    %625 = vmatpush1.xpose.msra.mxu0 0.0
    %626 = vmatprep.subr.mxu0 0.0
    %627 = vmatpush1.xpose.msra.mxu0 0.0
    %628 = vmatprep.subr.mxu0 0.0
    %629 = vmatpush1.xpose.msra.mxu0 0.0
    %630 = vmatprep.subr.mxu0 0.0
    %631 = vmatpush1.xpose.msra.mxu0 0.0
    %632 = vmatprep.subr.mxu0 0.0
    %633 = vmatpush1.xpose.msra.mxu0 0.0
    %634 = vmatprep.subr.mxu0 0.0
    %635 = vmatpush1.xpose.msra.mxu0 0.0
    %636 = vmatprep.subr.mxu0 0.0
    %637 = vmatpush1.xpose.msra.mxu0 0.0
    %638 = vmatprep.subr.mxu0 0.0
    %639 = vmatpush1.xpose.msra.mxu0 0.0
    %640 = vmatprep.subr.mxu0 0.0
    %641 = vmatpush1.xpose.msra.mxu0 0.0
    %642 = vmatprep.subr.mxu0 0.0
    %643 = vmatpush1.xpose.msra.mxu0 0.0
    %644 = vmatprep.subr.mxu0 0.0
    %645 = vmatpush1.xpose.msra.mxu0 0.0
    %646 = vmatprep.subr.mxu0 0.0
    %647 = vmatpush1.xpose.msra.mxu0 0.0
    %648 = vmatprep.subr.mxu0 0.0
    %649 = vmatpush1.xpose.msra.mxu0 0.0
    %650 = vmatprep.mubr.f32.mxu0 0.0
    %651 = vmatmul.mubr.f32.gmra.mrb[0].mxu0 %v578
    %v652 = vpop.f32.mrb[0].mxu0
    %v653 = vadd.f32 0.0, %v652
    %v654 = vpop.f32.mrb[0].mxu0
    %655 = vmatprep.mubr.f32.mxu0 0.0
    %656 = vmatmul.mubr.f32.gmra.mrb[0].mxu0 %v580
    %v657 = vpop.f32.mrb[0].mxu0
    %v658 = vadd.f32 0.0, %v657
    %v659 = vpop.f32.mrb[0].mxu0
    %660 = vdwg.mxu0
    %v661 = vsel %vm172, %v533, 0
    %v663 = vsel %vm172, %v535, 0
    %v665 = vsel %vm172, %v547, 0
    %v667 = vsel %vm172, %v549, 0
    %669 = vmatprep.subr.mxu0 0.0
    %670 = vmatpush1.xpose.msra.mxu0 %v665
    %671 = vmatprep.subr.mxu0 0.0
    %672 = vmatpush1.xpose.msra.mxu0 %v667
    %673 = vmatprep.subr.mxu0 0.0
    %674 = vmatpush1.xpose.msra.mxu0 0.0
    %675 = vmatprep.subr.mxu0 0.0
    %676 = vmatpush1.xpose.msra.mxu0 0.0
    %677 = vmatprep.subr.mxu0 0.0
    %678 = vmatpush1.xpose.msra.mxu0 0.0
    %679 = vmatprep.subr.mxu0 0.0
    %680 = vmatpush1.xpose.msra.mxu0 0.0
    %681 = vmatprep.subr.mxu0 0.0
    %682 = vmatpush1.xpose.msra.mxu0 0.0
    %683 = vmatprep.subr.mxu0 0.0
    %684 = vmatpush1.xpose.msra.mxu0 0.0
    %685 = vmatprep.subr.mxu0 0.0
    %686 = vmatpush1.xpose.msra.mxu0 0.0
    %687 = vmatprep.subr.mxu0 0.0
    %688 = vmatpush1.xpose.msra.mxu0 0.0
    %689 = vmatprep.subr.mxu0 0.0
    %690 = vmatpush1.xpose.msra.mxu0 0.0
    %691 = vmatprep.subr.mxu0 0.0
    %692 = vmatpush1.xpose.msra.mxu0 0.0
    %693 = vmatprep.subr.mxu0 0.0
    %694 = vmatpush1.xpose.msra.mxu0 0.0
    %695 = vmatprep.subr.mxu0 0.0
    %696 = vmatpush1.xpose.msra.mxu0 0.0
    %697 = vmatprep.subr.mxu0 0.0
    %698 = vmatpush1.xpose.msra.mxu0 0.0
    %699 = vmatprep.subr.mxu0 0.0
    %700 = vmatpush1.xpose.msra.mxu0 0.0
    %701 = vmatprep.subr.mxu0 0.0
    %702 = vmatpush1.xpose.msra.mxu0 0.0
    %703 = vmatprep.subr.mxu0 0.0
    %704 = vmatpush1.xpose.msra.mxu0 0.0
    %705 = vmatprep.subr.mxu0 0.0
    %706 = vmatpush1.xpose.msra.mxu0 0.0
    %707 = vmatprep.subr.mxu0 0.0
    %708 = vmatpush1.xpose.msra.mxu0 0.0
    %709 = vmatprep.subr.mxu0 0.0
    %710 = vmatpush1.xpose.msra.mxu0 0.0
    %711 = vmatprep.subr.mxu0 0.0
    %712 = vmatpush1.xpose.msra.mxu0 0.0
    %713 = vmatprep.subr.mxu0 0.0
    %714 = vmatpush1.xpose.msra.mxu0 0.0
    %715 = vmatprep.subr.mxu0 0.0
    %716 = vmatpush1.xpose.msra.mxu0 0.0
    %717 = vmatprep.subr.mxu0 0.0
    %718 = vmatpush1.xpose.msra.mxu0 0.0
    %719 = vmatprep.subr.mxu0 0.0
    %720 = vmatpush1.xpose.msra.mxu0 0.0
    %721 = vmatprep.subr.mxu0 0.0
    %722 = vmatpush1.xpose.msra.mxu0 0.0
    %723 = vmatprep.subr.mxu0 0.0
    %724 = vmatpush1.xpose.msra.mxu0 0.0
    %725 = vmatprep.subr.mxu0 0.0
    %726 = vmatpush1.xpose.msra.mxu0 0.0
    %727 = vmatprep.subr.mxu0 0.0
    %728 = vmatpush1.xpose.msra.mxu0 0.0
    %729 = vmatprep.subr.mxu0 0.0
    %730 = vmatpush1.xpose.msra.mxu0 0.0
    %731 = vmatprep.subr.mxu0 0.0
    %732 = vmatpush1.xpose.msra.mxu0 0.0
    %733 = vmatprep.mubr.f32.mxu0 0.0
    %734 = vmatmul.mubr.f32.gmra.mrb[0].mxu0 %v661
    %v735 = vpop.f32.mrb[0].mxu0
    %v736 = vadd.f32 0.0, %v735
    %v737 = vpop.f32.mrb[0].mxu0
    %738 = vmatprep.mubr.f32.mxu0 0.0
    %739 = vmatmul.mubr.f32.gmra.mrb[0].mxu0 %v663
    %v740 = vpop.f32.mrb[0].mxu0
    %v741 = vadd.f32 0.0, %v740
    %v742 = vpop.f32.mrb[0].mxu0
    %743 = vdwg.mxu0
    %v744 = vsel %vm172, %v537, 0
    %v746 = vsel %vm172, %v539, 0
    %v748 = vsel %vm172, %v551, 0
    %v750 = vsel %vm172, %v553, 0
    %752 = vmatprep.subr.mxu0 0.0
    %753 = vmatpush1.xpose.msra.mxu0 %v748
    %754 = vmatprep.subr.mxu0 0.0
    %755 = vmatpush1.xpose.msra.mxu0 %v750
    %756 = vmatprep.subr.mxu0 0.0
    %757 = vmatpush1.xpose.msra.mxu0 0.0
    %758 = vmatprep.subr.mxu0 0.0
    %759 = vmatpush1.xpose.msra.mxu0 0.0
    %760 = vmatprep.subr.mxu0 0.0
    %761 = vmatpush1.xpose.msra.mxu0 0.0
    %762 = vmatprep.subr.mxu0 0.0
    %763 = vmatpush1.xpose.msra.mxu0 0.0
    %764 = vmatprep.subr.mxu0 0.0
    %765 = vmatpush1.xpose.msra.mxu0 0.0
    %766 = vmatprep.subr.mxu0 0.0
    %767 = vmatpush1.xpose.msra.mxu0 0.0
    %768 = vmatprep.subr.mxu0 0.0
    %769 = vmatpush1.xpose.msra.mxu0 0.0
    %770 = vmatprep.subr.mxu0 0.0
    %771 = vmatpush1.xpose.msra.mxu0 0.0
    %772 = vmatprep.subr.mxu0 0.0
    %773 = vmatpush1.xpose.msra.mxu0 0.0
    %774 = vmatprep.subr.mxu0 0.0
    %775 = vmatpush1.xpose.msra.mxu0 0.0
    %776 = vmatprep.subr.mxu0 0.0
    %777 = vmatpush1.xpose.msra.mxu0 0.0
    %778 = vmatprep.subr.mxu0 0.0
    %779 = vmatpush1.xpose.msra.mxu0 0.0
    %780 = vmatprep.subr.mxu0 0.0
    %781 = vmatpush1.xpose.msra.mxu0 0.0
    %782 = vmatprep.subr.mxu0 0.0
    %783 = vmatpush1.xpose.msra.mxu0 0.0
    %784 = vmatprep.subr.mxu0 0.0
    %785 = vmatpush1.xpose.msra.mxu0 0.0
    %786 = vmatprep.subr.mxu0 0.0
    %787 = vmatpush1.xpose.msra.mxu0 0.0
    %788 = vmatprep.subr.mxu0 0.0
    %789 = vmatpush1.xpose.msra.mxu0 0.0
    %790 = vmatprep.subr.mxu0 0.0
    %791 = vmatpush1.xpose.msra.mxu0 0.0
    %792 = vmatprep.subr.mxu0 0.0
    %793 = vmatpush1.xpose.msra.mxu0 0.0
    %794 = vmatprep.subr.mxu0 0.0
    %795 = vmatpush1.xpose.msra.mxu0 0.0
    %796 = vmatprep.subr.mxu0 0.0
    %797 = vmatpush1.xpose.msra.mxu0 0.0
    %798 = vmatprep.subr.mxu0 0.0
    %799 = vmatpush1.xpose.msra.mxu0 0.0
    %800 = vmatprep.subr.mxu0 0.0
    %801 = vmatpush1.xpose.msra.mxu0 0.0
    %802 = vmatprep.subr.mxu0 0.0
    %803 = vmatpush1.xpose.msra.mxu0 0.0
    %804 = vmatprep.subr.mxu0 0.0
    %805 = vmatpush1.xpose.msra.mxu0 0.0
    %806 = vmatprep.subr.mxu0 0.0
    %807 = vmatpush1.xpose.msra.mxu0 0.0
    %808 = vmatprep.subr.mxu0 0.0
    %809 = vmatpush1.xpose.msra.mxu0 0.0
    %810 = vmatprep.subr.mxu0 0.0
    %811 = vmatpush1.xpose.msra.mxu0 0.0
    %812 = vmatprep.subr.mxu0 0.0
    %813 = vmatpush1.xpose.msra.mxu0 0.0
    %814 = vmatprep.subr.mxu0 0.0
    %815 = vmatpush1.xpose.msra.mxu0 0.0
    %816 = vmatprep.mubr.f32.mxu0 0.0
    %817 = vmatmul.mubr.f32.gmra.mrb[0].mxu0 %v744
    %v818 = vpop.f32.mrb[0].mxu0
    %v819 = vadd.f32 0.0, %v818
    %v820 = vpop.f32.mrb[0].mxu0
    %821 = vmatprep.mubr.f32.mxu0 0.0
    %822 = vmatmul.mubr.f32.gmra.mrb[0].mxu0 %v746
    %v823 = vpop.f32.mrb[0].mxu0
    %v824 = vadd.f32 0.0, %v823
    %v825 = vpop.f32.mrb[0].mxu0
    %826 = vdwg.mxu0
    %v827 = vsel %vm172, %v541, 0
    %v829 = vsel %vm172, %v543, 0
    %v831 = vsel %vm172, %v555, 0
    %v833 = vsel %vm172, %v557, 0
    %835 = vmatprep.subr.mxu0 0.0
    %836 = vmatpush1.xpose.msra.mxu0 %v831
    %837 = vmatprep.subr.mxu0 0.0
    %838 = vmatpush1.xpose.msra.mxu0 %v833
    %839 = vmatprep.subr.mxu0 0.0
    %840 = vmatpush1.xpose.msra.mxu0 0.0
    %841 = vmatprep.subr.mxu0 0.0
    %842 = vmatpush1.xpose.msra.mxu0 0.0
    %843 = vmatprep.subr.mxu0 0.0
    %844 = vmatpush1.xpose.msra.mxu0 0.0
    %845 = vmatprep.subr.mxu0 0.0
    %846 = vmatpush1.xpose.msra.mxu0 0.0
    %847 = vmatprep.subr.mxu0 0.0
    %848 = vmatpush1.xpose.msra.mxu0 0.0
    %849 = vmatprep.subr.mxu0 0.0
    %850 = vmatpush1.xpose.msra.mxu0 0.0
    %851 = vmatprep.subr.mxu0 0.0
    %852 = vmatpush1.xpose.msra.mxu0 0.0
    %853 = vmatprep.subr.mxu0 0.0
    %854 = vmatpush1.xpose.msra.mxu0 0.0
    %855 = vmatprep.subr.mxu0 0.0
    %856 = vmatpush1.xpose.msra.mxu0 0.0
    %857 = vmatprep.subr.mxu0 0.0
    %858 = vmatpush1.xpose.msra.mxu0 0.0
    %859 = vmatprep.subr.mxu0 0.0
    %860 = vmatpush1.xpose.msra.mxu0 0.0
    %861 = vmatprep.subr.mxu0 0.0
    %862 = vmatpush1.xpose.msra.mxu0 0.0
    %863 = vmatprep.subr.mxu0 0.0
    %864 = vmatpush1.xpose.msra.mxu0 0.0
    %865 = vmatprep.subr.mxu0 0.0
    %866 = vmatpush1.xpose.msra.mxu0 0.0
    %867 = vmatprep.subr.mxu0 0.0
    %868 = vmatpush1.xpose.msra.mxu0 0.0
    %869 = vmatprep.subr.mxu0 0.0
    %870 = vmatpush1.xpose.msra.mxu0 0.0
    %871 = vmatprep.subr.mxu0 0.0
    %872 = vmatpush1.xpose.msra.mxu0 0.0
    %873 = vmatprep.subr.mxu0 0.0
    %874 = vmatpush1.xpose.msra.mxu0 0.0
    %875 = vmatprep.subr.mxu0 0.0
    %876 = vmatpush1.xpose.msra.mxu0 0.0
    %877 = vmatprep.subr.mxu0 0.0
    %878 = vmatpush1.xpose.msra.mxu0 0.0
    %879 = vmatprep.subr.mxu0 0.0
    %880 = vmatpush1.xpose.msra.mxu0 0.0
    %881 = vmatprep.subr.mxu0 0.0
    %882 = vmatpush1.xpose.msra.mxu0 0.0
    %883 = vmatprep.subr.mxu0 0.0
    %884 = vmatpush1.xpose.msra.mxu0 0.0
    %885 = vmatprep.subr.mxu0 0.0
    %886 = vmatpush1.xpose.msra.mxu0 0.0
    %887 = vmatprep.subr.mxu0 0.0
    %888 = vmatpush1.xpose.msra.mxu0 0.0
    %889 = vmatprep.subr.mxu0 0.0
    %890 = vmatpush1.xpose.msra.mxu0 0.0
    %891 = vmatprep.subr.mxu0 0.0
    %892 = vmatpush1.xpose.msra.mxu0 0.0
    %893 = vmatprep.subr.mxu0 0.0
    %894 = vmatpush1.xpose.msra.mxu0 0.0
    %895 = vmatprep.subr.mxu0 0.0
    %896 = vmatpush1.xpose.msra.mxu0 0.0
    %897 = vmatprep.subr.mxu0 0.0
    %898 = vmatpush1.xpose.msra.mxu0 0.0
    %899 = vmatprep.mubr.f32.mxu0 0.0
    %900 = vmatmul.mubr.f32.gmra.mrb[0].mxu0 %v827
    %v901 = vpop.f32.mrb[0].mxu0
    %v902 = vadd.f32 0.0, %v901
    %v903 = vpop.f32.mrb[0].mxu0
    %904 = vmatprep.mubr.f32.mxu0 0.0
    %905 = vmatmul.mubr.f32.gmra.mrb[0].mxu0 %v829
    %v906 = vpop.f32.mrb[0].mxu0
    %v907 = vadd.f32 0.0, %v906
    %v908 = vpop.f32.mrb[0].mxu0
    %909 = vdwg.mxu0
    %v910 = vmul.f32 %v653, 0.17677669
    %v911 = vmul.f32 %v658, 0.17677669
    %v912 = vmul.f32 %v736, 0.17677669
    %v913 = vmul.f32 %v741, 0.17677669
    %v914 = vmul.f32 %v819, 0.17677669
    %v915 = vmul.f32 %v824, 0.17677669
    %v916 = vmul.f32 %v902, 0.17677669
    %v917 = vmul.f32 %v907, 0.17677669
    %v918 = vld [vmem:[#allocation7] sm:$0xff]
    %v919 = vld [vmem:[#allocation7 + $0x8] sm:$0xff]
    %v920 = vld [vmem:[#allocation7 + $0x10] sm:$0xff]
    %v921 = vld [vmem:[#allocation7 + $0x18] sm:$0xff]
    %v922 = vld [vmem:[#allocation7 + $0x20] sm:$0xff]
    %v923 = vld [vmem:[#allocation7 + $0x28] sm:$0xff]
    %v924 = vld [vmem:[#allocation7 + $0x30] sm:$0xff]
    %v925 = vld [vmem:[#allocation7 + $0x38] sm:$0xff]
    %v926 = vadd.f32 %v910, %v918
    %v927 = vadd.f32 %v911, %v919
    %v928 = vadd.f32 %v912, %v920
    %v929 = vadd.f32 %v913, %v921
    %v930 = vadd.f32 %v914, %v922
    %v931 = vadd.f32 %v915, %v923
    %v932 = vadd.f32 %v916, %v924
    %v933 = vadd.f32 %v917, %v925
    %vm934 = vcmask 130048
    %v935 = vsel %vm934, %v926, -inf
    %936 = vmax.xlane.f32.xlu0 %v935
    %v937 = vpop.xlane.xlu0 %936
    %v938 = vsel %vm934, %v927, -inf
    %939 = vmax.xlane.f32.xlu0 %v938
    %v940 = vpop.xlane.xlu0 %939
    %v941 = vsel %vm934, %v928, -inf
    %942 = vmax.xlane.f32.xlu0 %v941
    %v943 = vpop.xlane.xlu0 %942
    %v944 = vsel %vm934, %v929, -inf
    %945 = vmax.xlane.f32.xlu0 %v944
    %v946 = vpop.xlane.xlu0 %945
    %v947 = vsel %vm934, %v930, -inf
    %948 = vmax.xlane.f32.xlu0 %v947
    %v949 = vpop.xlane.xlu0 %948
    %v950 = vsel %vm934, %v931, -inf
    %951 = vmax.xlane.f32.xlu0 %v950
    %v952 = vpop.xlane.xlu0 %951
    %v953 = vsel %vm934, %v932, -inf
    %954 = vmax.xlane.f32.xlu0 %v953
    %v955 = vpop.xlane.xlu0 %954
    %v956 = vsel %vm934, %v933, -inf
    %957 = vmax.xlane.f32.xlu0 %v956
    %v958 = vpop.xlane.xlu0 %957
    %v959 = vsub.f32 %v926, %v937
    %v960 = vsub.f32 %v927, %v940
    %v961 = vsub.f32 %v928, %v943
    %v962 = vsub.f32 %v929, %v946
    %v963 = vsub.f32 %v930, %v949
    %v964 = vsub.f32 %v931, %v952
    %v965 = vsub.f32 %v932, %v955
    %v966 = vsub.f32 %v933, %v958
    %v967 = vmul.f32 %v959, 1.442695
    %v968 = vpow.pop %v967
    %v969 = vmul.f32 %v960, 1.442695
    %v970 = vpow.pop %v969
    %v971 = vmul.f32 %v961, 1.442695
    %v972 = vpow.pop %v971
    %v973 = vmul.f32 %v962, 1.442695
    %v974 = vpow.pop %v973
    %v975 = vmul.f32 %v963, 1.442695
    %v976 = vpow.pop %v975
    %v977 = vmul.f32 %v964, 1.442695
    %v978 = vpow.pop %v977
    %v979 = vmul.f32 %v965, 1.442695
    %v980 = vpow.pop %v979
    %v981 = vmul.f32 %v966, 1.442695
    %v982 = vpow.pop %v981
    %v983 = vsel %vm934, %v968, 0.0
    %984 = vadd.xlane.f32.xlu0 %v983
    %v985 = vpop.xlane.xlu0 %984
    %v986 = vsel %vm934, %v970, 0.0
    %987 = vadd.xlane.f32.xlu0 %v986
    %v988 = vpop.xlane.xlu0 %987
    %v989 = vsel %vm934, %v972, 0.0
    %990 = vadd.xlane.f32.xlu0 %v989
    %v991 = vpop.xlane.xlu0 %990
    %v992 = vsel %vm934, %v974, 0.0
    %993 = vadd.xlane.f32.xlu0 %v992
    %v994 = vpop.xlane.xlu0 %993
    %v995 = vsel %vm934, %v976, 0.0
    %996 = vadd.xlane.f32.xlu0 %v995
    %v997 = vpop.xlane.xlu0 %996
    %v998 = vsel %vm934, %v978, 0.0
    %999 = vadd.xlane.f32.xlu0 %v998
    %v1000 = vpop.xlane.xlu0 %999
    %v1001 = vsel %vm934, %v980, 0.0
    %1002 = vadd.xlane.f32.xlu0 %v1001
    %v1003 = vpop.xlane.xlu0 %1002
    %v1004 = vsel %vm934, %v982, 0.0
    %1005 = vadd.xlane.f32.xlu0 %v1004
    %v1006 = vpop.xlane.xlu0 %1005
    %v1007 = vrcp.pop %v985
    %v1008 = vrcp.pop %v988
    %v1009 = vrcp.pop %v991
    %v1010 = vrcp.pop %v994
    %v1011 = vrcp.pop %v997
    %v1012 = vrcp.pop %v1000
    %v1013 = vrcp.pop %v1003
    %v1014 = vrcp.pop %v1006
    %v1015 = vmul.f32 %v968, %v1007
    %v1016 = vmul.f32 %v970, %v1008
    %v1017 = vmul.f32 %v972, %v1009
    %v1018 = vmul.f32 %v974, %v1010
    %v1019 = vmul.f32 %v976, %v1011
    %v1020 = vmul.f32 %v978, %v1012
    %v1021 = vmul.f32 %v980, %v1013
    %v1022 = vmul.f32 %v982, %v1014
    %v1024 = vsel %vm934, %v1015, 0
    %v1027 = vsel %vm934, %v1016, 0
    %1029 = vmatprep.subr.mxu0 0.0
    %1030 = vmatpush1.msra.mxu0 %v512
    %1031 = vmatprep.subr.mxu0 0.0
    %1032 = vmatpush1.msra.mxu0 %v517
    %1033 = vmatprep.subr.mxu0 0.0
    %1034 = vmatpush1.msra.mxu0 0.0
    %1035 = vmatprep.subr.mxu0 0.0
    %1036 = vmatpush1.msra.mxu0 0.0
    %1037 = vmatprep.subr.mxu0 0.0
    %1038 = vmatpush1.msra.mxu0 0.0
    %1039 = vmatprep.subr.mxu0 0.0
    %1040 = vmatpush1.msra.mxu0 0.0
    %1041 = vmatprep.subr.mxu0 0.0
    %1042 = vmatpush1.msra.mxu0 0.0
    %1043 = vmatprep.subr.mxu0 0.0
    %1044 = vmatpush1.msra.mxu0 0.0
    %1045 = vmatprep.subr.mxu0 0.0
    %1046 = vmatpush1.msra.mxu0 0.0
    %1047 = vmatprep.subr.mxu0 0.0
    %1048 = vmatpush1.msra.mxu0 0.0
    %1049 = vmatprep.subr.mxu0 0.0
    %1050 = vmatpush1.msra.mxu0 0.0
    %1051 = vmatprep.subr.mxu0 0.0
    %1052 = vmatpush1.msra.mxu0 0.0
    %1053 = vmatprep.subr.mxu0 0.0
    %1054 = vmatpush1.msra.mxu0 0.0
    %1055 = vmatprep.subr.mxu0 0.0
    %1056 = vmatpush1.msra.mxu0 0.0
    %1057 = vmatprep.subr.mxu0 0.0
    %1058 = vmatpush1.msra.mxu0 0.0
    %1059 = vmatprep.subr.mxu0 0.0
    %1060 = vmatpush1.msra.mxu0 0.0
    %1061 = vmatprep.subr.mxu0 0.0
    %1062 = vmatpush1.msra.mxu0 0.0
    %1063 = vmatprep.subr.mxu0 0.0
    %1064 = vmatpush1.msra.mxu0 0.0
    %1065 = vmatprep.subr.mxu0 0.0
    %1066 = vmatpush1.msra.mxu0 0.0
    %1067 = vmatprep.subr.mxu0 0.0
    %1068 = vmatpush1.msra.mxu0 0.0
    %1069 = vmatprep.subr.mxu0 0.0
    %1070 = vmatpush1.msra.mxu0 0.0
    %1071 = vmatprep.subr.mxu0 0.0
    %1072 = vmatpush1.msra.mxu0 0.0
    %1073 = vmatprep.subr.mxu0 0.0
    %1074 = vmatpush1.msra.mxu0 0.0
    %1075 = vmatprep.subr.mxu0 0.0
    %1076 = vmatpush1.msra.mxu0 0.0
    %1077 = vmatprep.subr.mxu0 0.0
    %1078 = vmatpush1.msra.mxu0 0.0
    %1079 = vmatprep.subr.mxu0 0.0
    %1080 = vmatpush1.msra.mxu0 0.0
    %1081 = vmatprep.subr.mxu0 0.0
    %1082 = vmatpush1.msra.mxu0 0.0
    %1083 = vmatprep.subr.mxu0 0.0
    %1084 = vmatpush1.msra.mxu0 0.0
    %1085 = vmatprep.subr.mxu0 0.0
    %1086 = vmatpush1.msra.mxu0 0.0
    %1087 = vmatprep.subr.mxu0 0.0
    %1088 = vmatpush1.msra.mxu0 0.0
    %1089 = vmatprep.subr.mxu0 0.0
    %1090 = vmatpush1.msra.mxu0 0.0
    %1091 = vmatprep.subr.mxu0 0.0
    %1092 = vmatpush1.msra.mxu0 0.0
    %1093 = vmatprep.mubr.f32.mxu0 0.0
    %1094 = vmatmul.mubr.f32.gmra.mrb[0].mxu0 %v1024
    %v1095 = vpop.f32.mrb[0].mxu0
    %v1096 = vadd.f32 0.0, %v1095
    %v1097 = vpop.f32.mrb[0].mxu0
    %1098 = vmatprep.mubr.f32.mxu0 0.0
    %1099 = vmatmul.mubr.f32.gmra.mrb[0].mxu0 %v1027
    %v1100 = vpop.f32.mrb[0].mxu0
    %v1101 = vadd.f32 0.0, %v1100
    %v1102 = vpop.f32.mrb[0].mxu0
    %1103 = vdwg.mxu0
    %v1105 = vsel %vm934, %v1017, 0
    %v1108 = vsel %vm934, %v1018, 0
    %1110 = vmatprep.subr.mxu0 0.0
    %1111 = vmatpush1.msra.mxu0 %v561
    %1112 = vmatprep.subr.mxu0 0.0
    %1113 = vmatpush1.msra.mxu0 %v563
    %1114 = vmatprep.subr.mxu0 0.0
    %1115 = vmatpush1.msra.mxu0 0.0
    %1116 = vmatprep.subr.mxu0 0.0
    %1117 = vmatpush1.msra.mxu0 0.0
    %1118 = vmatprep.subr.mxu0 0.0
    %1119 = vmatpush1.msra.mxu0 0.0
    %1120 = vmatprep.subr.mxu0 0.0
    %1121 = vmatpush1.msra.mxu0 0.0
    %1122 = vmatprep.subr.mxu0 0.0
    %1123 = vmatpush1.msra.mxu0 0.0
    %1124 = vmatprep.subr.mxu0 0.0
    %1125 = vmatpush1.msra.mxu0 0.0
    %1126 = vmatprep.subr.mxu0 0.0
    %1127 = vmatpush1.msra.mxu0 0.0
    %1128 = vmatprep.subr.mxu0 0.0
    %1129 = vmatpush1.msra.mxu0 0.0
    %1130 = vmatprep.subr.mxu0 0.0
    %1131 = vmatpush1.msra.mxu0 0.0
    %1132 = vmatprep.subr.mxu0 0.0
    %1133 = vmatpush1.msra.mxu0 0.0
    %1134 = vmatprep.subr.mxu0 0.0
    %1135 = vmatpush1.msra.mxu0 0.0
    %1136 = vmatprep.subr.mxu0 0.0
    %1137 = vmatpush1.msra.mxu0 0.0
    %1138 = vmatprep.subr.mxu0 0.0
    %1139 = vmatpush1.msra.mxu0 0.0
    %1140 = vmatprep.subr.mxu0 0.0
    %1141 = vmatpush1.msra.mxu0 0.0
    %1142 = vmatprep.subr.mxu0 0.0
    %1143 = vmatpush1.msra.mxu0 0.0
    %1144 = vmatprep.subr.mxu0 0.0
    %1145 = vmatpush1.msra.mxu0 0.0
    %1146 = vmatprep.subr.mxu0 0.0
    %1147 = vmatpush1.msra.mxu0 0.0
    %1148 = vmatprep.subr.mxu0 0.0
    %1149 = vmatpush1.msra.mxu0 0.0
    %1150 = vmatprep.subr.mxu0 0.0
    %1151 = vmatpush1.msra.mxu0 0.0
    %1152 = vmatprep.subr.mxu0 0.0
    %1153 = vmatpush1.msra.mxu0 0.0
    %1154 = vmatprep.subr.mxu0 0.0
    %1155 = vmatpush1.msra.mxu0 0.0
    %1156 = vmatprep.subr.mxu0 0.0
    %1157 = vmatpush1.msra.mxu0 0.0
    %1158 = vmatprep.subr.mxu0 0.0
    %1159 = vmatpush1.msra.mxu0 0.0
    %1160 = vmatprep.subr.mxu0 0.0
    %1161 = vmatpush1.msra.mxu0 0.0
    %1162 = vmatprep.subr.mxu0 0.0
    %1163 = vmatpush1.msra.mxu0 0.0
    %1164 = vmatprep.subr.mxu0 0.0
    %1165 = vmatpush1.msra.mxu0 0.0
    %1166 = vmatprep.subr.mxu0 0.0
    %1167 = vmatpush1.msra.mxu0 0.0
    %1168 = vmatprep.subr.mxu0 0.0
    %1169 = vmatpush1.msra.mxu0 0.0
    %1170 = vmatprep.subr.mxu0 0.0
    %1171 = vmatpush1.msra.mxu0 0.0
    %1172 = vmatprep.subr.mxu0 0.0
    %1173 = vmatpush1.msra.mxu0 0.0
    %1174 = vmatprep.mubr.f32.mxu0 0.0
    %1175 = vmatmul.mubr.f32.gmra.mrb[0].mxu0 %v1105
    %v1176 = vpop.f32.mrb[0].mxu0
    %v1177 = vadd.f32 0.0, %v1176
    %v1178 = vpop.f32.mrb[0].mxu0
    %1179 = vmatprep.mubr.f32.mxu0 0.0
    %1180 = vmatmul.mubr.f32.gmra.mrb[0].mxu0 %v1108
    %v1181 = vpop.f32.mrb[0].mxu0
    %v1182 = vadd.f32 0.0, %v1181
    %v1183 = vpop.f32.mrb[0].mxu0
    %1184 = vdwg.mxu0
    %v1186 = vsel %vm934, %v1019, 0
    %v1189 = vsel %vm934, %v1020, 0
    %1191 = vmatprep.subr.mxu0 0.0
    %1192 = vmatpush1.msra.mxu0 %v567
    %1193 = vmatprep.subr.mxu0 0.0
    %1194 = vmatpush1.msra.mxu0 %v569
    %1195 = vmatprep.subr.mxu0 0.0
    %1196 = vmatpush1.msra.mxu0 0.0
    %1197 = vmatprep.subr.mxu0 0.0
    %1198 = vmatpush1.msra.mxu0 0.0
    %1199 = vmatprep.subr.mxu0 0.0
    %1200 = vmatpush1.msra.mxu0 0.0
    %1201 = vmatprep.subr.mxu0 0.0
    %1202 = vmatpush1.msra.mxu0 0.0
    %1203 = vmatprep.subr.mxu0 0.0
    %1204 = vmatpush1.msra.mxu0 0.0
    %1205 = vmatprep.subr.mxu0 0.0
    %1206 = vmatpush1.msra.mxu0 0.0
    %1207 = vmatprep.subr.mxu0 0.0
    %1208 = vmatpush1.msra.mxu0 0.0
    %1209 = vmatprep.subr.mxu0 0.0
    %1210 = vmatpush1.msra.mxu0 0.0
    %1211 = vmatprep.subr.mxu0 0.0
    %1212 = vmatpush1.msra.mxu0 0.0
    %1213 = vmatprep.subr.mxu0 0.0
    %1214 = vmatpush1.msra.mxu0 0.0
    %1215 = vmatprep.subr.mxu0 0.0
    %1216 = vmatpush1.msra.mxu0 0.0
    %1217 = vmatprep.subr.mxu0 0.0
    %1218 = vmatpush1.msra.mxu0 0.0
    %1219 = vmatprep.subr.mxu0 0.0
    %1220 = vmatpush1.msra.mxu0 0.0
    %1221 = vmatprep.subr.mxu0 0.0
    %1222 = vmatpush1.msra.mxu0 0.0
    %1223 = vmatprep.subr.mxu0 0.0
    %1224 = vmatpush1.msra.mxu0 0.0
    %1225 = vmatprep.subr.mxu0 0.0
    %1226 = vmatpush1.msra.mxu0 0.0
    %1227 = vmatprep.subr.mxu0 0.0
    %1228 = vmatpush1.msra.mxu0 0.0
    %1229 = vmatprep.subr.mxu0 0.0
    %1230 = vmatpush1.msra.mxu0 0.0
    %1231 = vmatprep.subr.mxu0 0.0
    %1232 = vmatpush1.msra.mxu0 0.0
    %1233 = vmatprep.subr.mxu0 0.0
    %1234 = vmatpush1.msra.mxu0 0.0
    %1235 = vmatprep.subr.mxu0 0.0
    %1236 = vmatpush1.msra.mxu0 0.0
    %1237 = vmatprep.subr.mxu0 0.0
    %1238 = vmatpush1.msra.mxu0 0.0
    %1239 = vmatprep.subr.mxu0 0.0
    %1240 = vmatpush1.msra.mxu0 0.0
    %1241 = vmatprep.subr.mxu0 0.0
    %1242 = vmatpush1.msra.mxu0 0.0
    %1243 = vmatprep.subr.mxu0 0.0
    %1244 = vmatpush1.msra.mxu0 0.0
    %1245 = vmatprep.subr.mxu0 0.0
    %1246 = vmatpush1.msra.mxu0 0.0
    %1247 = vmatprep.subr.mxu0 0.0
    %1248 = vmatpush1.msra.mxu0 0.0
    %1249 = vmatprep.subr.mxu0 0.0
    %1250 = vmatpush1.msra.mxu0 0.0
    %1251 = vmatprep.subr.mxu0 0.0
    %1252 = vmatpush1.msra.mxu0 0.0
    %1253 = vmatprep.subr.mxu0 0.0
    %1254 = vmatpush1.msra.mxu0 0.0
    %1255 = vmatprep.mubr.f32.mxu0 0.0
    %1256 = vmatmul.mubr.f32.gmra.mrb[0].mxu0 %v1186
    %v1257 = vpop.f32.mrb[0].mxu0
    %v1258 = vadd.f32 0.0, %v1257
    %v1259 = vpop.f32.mrb[0].mxu0
    %1260 = vmatprep.mubr.f32.mxu0 0.0
    %1261 = vmatmul.mubr.f32.gmra.mrb[0].mxu0 %v1189
    %v1262 = vpop.f32.mrb[0].mxu0
    %v1263 = vadd.f32 0.0, %v1262
    %v1264 = vpop.f32.mrb[0].mxu0
    %1265 = vdwg.mxu0
    %v1267 = vsel %vm934, %v1021, 0
    %v1270 = vsel %vm934, %v1022, 0
    %1272 = vmatprep.subr.mxu0 0.0
    %1273 = vmatpush1.msra.mxu0 %v573
    %1274 = vmatprep.subr.mxu0 0.0
    %1275 = vmatpush1.msra.mxu0 %v575
    %1276 = vmatprep.subr.mxu0 0.0
    %1277 = vmatpush1.msra.mxu0 0.0
    %1278 = vmatprep.subr.mxu0 0.0
    %1279 = vmatpush1.msra.mxu0 0.0
    %1280 = vmatprep.subr.mxu0 0.0
    %1281 = vmatpush1.msra.mxu0 0.0
    %1282 = vmatprep.subr.mxu0 0.0
    %1283 = vmatpush1.msra.mxu0 0.0
    %1284 = vmatprep.subr.mxu0 0.0
    %1285 = vmatpush1.msra.mxu0 0.0
    %1286 = vmatprep.subr.mxu0 0.0
    %1287 = vmatpush1.msra.mxu0 0.0
    %1288 = vmatprep.subr.mxu0 0.0
    %1289 = vmatpush1.msra.mxu0 0.0
    %1290 = vmatprep.subr.mxu0 0.0
    %1291 = vmatpush1.msra.mxu0 0.0
    %1292 = vmatprep.subr.mxu0 0.0
    %1293 = vmatpush1.msra.mxu0 0.0
    %1294 = vmatprep.subr.mxu0 0.0
    %1295 = vmatpush1.msra.mxu0 0.0
    %1296 = vmatprep.subr.mxu0 0.0
    %1297 = vmatpush1.msra.mxu0 0.0
    %1298 = vmatprep.subr.mxu0 0.0
    %1299 = vmatpush1.msra.mxu0 0.0
    %1300 = vmatprep.subr.mxu0 0.0
    %1301 = vmatpush1.msra.mxu0 0.0
    %1302 = vmatprep.subr.mxu0 0.0
    %1303 = vmatpush1.msra.mxu0 0.0
    %1304 = vmatprep.subr.mxu0 0.0
    %1305 = vmatpush1.msra.mxu0 0.0
    %1306 = vmatprep.subr.mxu0 0.0
    %1307 = vmatpush1.msra.mxu0 0.0
    %1308 = vmatprep.subr.mxu0 0.0
    %1309 = vmatpush1.msra.mxu0 0.0
    %1310 = vmatprep.subr.mxu0 0.0
    %1311 = vmatpush1.msra.mxu0 0.0
    %1312 = vmatprep.subr.mxu0 0.0
    %1313 = vmatpush1.msra.mxu0 0.0
    %1314 = vmatprep.subr.mxu0 0.0
    %1315 = vmatpush1.msra.mxu0 0.0
    %1316 = vmatprep.subr.mxu0 0.0
    %1317 = vmatpush1.msra.mxu0 0.0
    %1318 = vmatprep.subr.mxu0 0.0
    %1319 = vmatpush1.msra.mxu0 0.0
    %1320 = vmatprep.subr.mxu0 0.0
    %1321 = vmatpush1.msra.mxu0 0.0
    %1322 = vmatprep.subr.mxu0 0.0
    %1323 = vmatpush1.msra.mxu0 0.0
    %1324 = vmatprep.subr.mxu0 0.0
    %1325 = vmatpush1.msra.mxu0 0.0
    %1326 = vmatprep.subr.mxu0 0.0
    %1327 = vmatpush1.msra.mxu0 0.0
    %1328 = vmatprep.subr.mxu0 0.0
    %1329 = vmatpush1.msra.mxu0 0.0
    %1330 = vmatprep.subr.mxu0 0.0
    %1331 = vmatpush1.msra.mxu0 0.0
    %1332 = vmatprep.subr.mxu0 0.0
    %1333 = vmatpush1.msra.mxu0 0.0
    %1334 = vmatprep.subr.mxu0 0.0
    %1335 = vmatpush1.msra.mxu0 0.0
    %1336 = vmatprep.mubr.f32.mxu0 0.0
    %1337 = vmatmul.mubr.f32.gmra.mrb[0].mxu0 %v1267
    %v1338 = vpop.f32.mrb[0].mxu0
    %v1339 = vadd.f32 0.0, %v1338
    %v1340 = vpop.f32.mrb[0].mxu0
    %1341 = vmatprep.mubr.f32.mxu0 0.0
    %1342 = vmatmul.mubr.f32.gmra.mrb[0].mxu0 %v1270
    %v1343 = vpop.f32.mrb[0].mxu0
    %v1344 = vadd.f32 0.0, %v1343
    %v1345 = vpop.f32.mrb[0].mxu0
    %1346 = vdwg.mxu0
    %1349 = vrot.lane.b32.xlu0 %v1177, 32
    %v1350 = vpop.permute.xlu0 %1349
    %1351 = vrot.lane.b32.xlu0 %v1182, 32
    %v1352 = vpop.permute.xlu0 %1351
    %1357 = vrot.lane.b32.xlu0 %v1258, 64
    %v1358 = vpop.permute.xlu0 %1357
    %1359 = vrot.lane.b32.xlu0 %v1263, 64
    %v1360 = vpop.permute.xlu0 %1359
    %1365 = vrot.lane.b32.xlu0 %v1339, 96
    %v1366 = vpop.permute.xlu0 %1365
    %1367 = vrot.lane.b32.xlu0 %v1344, 96
    %v1368 = vpop.permute.xlu0 %1367
    %v1371 = vsel %vm172, %v1096, %v1350
    %v1372 = vsel %vm172, %v1101, %v1352
    %vm1373 = vcmask 523264
    %v1374 = vsel %vm1373, %v1371, %v1358
    %v1375 = vsel %vm1373, %v1372, %v1360
    %vm1376 = vcmask 785408
    %v1377 = vsel %vm1376, %v1374, %v1366
    %v1378 = vsel %vm1376, %v1375, %v1368
    %1381 = vrot.lane.b32.xlu0 %v435, 96
    %v1382 = vpop.permute.xlu0 %1381
    %1383 = vrot.lane.b32.xlu0 %v441, 96
    %v1384 = vpop.permute.xlu0 %1383
    %1385 = vrot.lane.b32.xlu0 %v435, 64
    %v1386 = vpop.permute.xlu0 %1385
    %1387 = vrot.lane.b32.xlu0 %v441, 64
    %v1388 = vpop.permute.xlu0 %1387
    %1389 = vrot.lane.b32.xlu0 %v435, 32
    %v1390 = vpop.permute.xlu0 %1389
    %1391 = vrot.lane.b32.xlu0 %v441, 32
    %v1392 = vpop.permute.xlu0 %1391
    %1395 = vrot.lane.b32.xlu0 %v437, 96
    %v1396 = vpop.permute.xlu0 %1395
    %1397 = vrot.lane.b32.xlu0 %v443, 96
    %v1398 = vpop.permute.xlu0 %1397
    %1399 = vrot.lane.b32.xlu0 %v437, 64
    %v1400 = vpop.permute.xlu0 %1399
    %1401 = vrot.lane.b32.xlu0 %v443, 64
    %v1402 = vpop.permute.xlu0 %1401
    %1403 = vrot.lane.b32.xlu0 %v437, 32
    %v1404 = vpop.permute.xlu0 %1403
    %1405 = vrot.lane.b32.xlu0 %v443, 32
    %v1406 = vpop.permute.xlu0 %1405
    %1409 = vrot.lane.b32.xlu0 %v522, 96
    %v1410 = vpop.permute.xlu0 %1409
    %1411 = vrot.lane.b32.xlu0 %v527, 96
    %v1412 = vpop.permute.xlu0 %1411
    %1415 = vrot.lane.b32.xlu0 %v522, 64
    %v1416 = vpop.permute.xlu0 %1415
    %1417 = vrot.lane.b32.xlu0 %v527, 64
    %v1418 = vpop.permute.xlu0 %1417
    %1421 = vrot.lane.b32.xlu0 %v522, 32
    %v1422 = vpop.permute.xlu0 %1421
    %1423 = vrot.lane.b32.xlu0 %v527, 32
    %v1424 = vpop.permute.xlu0 %1423
    %v1427 = vsel %vm172, %v435, 0
    %v1429 = vsel %vm172, %v441, 0
    %v1431 = vsel %vm172, %v437, 0
    %v1433 = vsel %vm172, %v443, 0
    %1435 = vmatprep.subr.mxu0 0.0
    %1436 = vmatpush1.xpose.msra.mxu0 %v1431
    %1437 = vmatprep.subr.mxu0 0.0
    %1438 = vmatpush1.xpose.msra.mxu0 %v1433
    %1439 = vmatprep.subr.mxu0 0.0
    %1440 = vmatpush1.xpose.msra.mxu0 0.0
    %1441 = vmatprep.subr.mxu0 0.0
    %1442 = vmatpush1.xpose.msra.mxu0 0.0
    %1443 = vmatprep.subr.mxu0 0.0
    %1444 = vmatpush1.xpose.msra.mxu0 0.0
    %1445 = vmatprep.subr.mxu0 0.0
    %1446 = vmatpush1.xpose.msra.mxu0 0.0
    %1447 = vmatprep.subr.mxu0 0.0
    %1448 = vmatpush1.xpose.msra.mxu0 0.0
    %1449 = vmatprep.subr.mxu0 0.0
    %1450 = vmatpush1.xpose.msra.mxu0 0.0
    %1451 = vmatprep.subr.mxu0 0.0
    %1452 = vmatpush1.xpose.msra.mxu0 0.0
    %1453 = vmatprep.subr.mxu0 0.0
    %1454 = vmatpush1.xpose.msra.mxu0 0.0
    %1455 = vmatprep.subr.mxu0 0.0
    %1456 = vmatpush1.xpose.msra.mxu0 0.0
    %1457 = vmatprep.subr.mxu0 0.0
    %1458 = vmatpush1.xpose.msra.mxu0 0.0
    %1459 = vmatprep.subr.mxu0 0.0
    %1460 = vmatpush1.xpose.msra.mxu0 0.0
    %1461 = vmatprep.subr.mxu0 0.0
    %1462 = vmatpush1.xpose.msra.mxu0 0.0
    %1463 = vmatprep.subr.mxu0 0.0
    %1464 = vmatpush1.xpose.msra.mxu0 0.0
    %1465 = vmatprep.subr.mxu0 0.0
    %1466 = vmatpush1.xpose.msra.mxu0 0.0
    %1467 = vmatprep.subr.mxu0 0.0
    %1468 = vmatpush1.xpose.msra.mxu0 0.0
    %1469 = vmatprep.subr.mxu0 0.0
    %1470 = vmatpush1.xpose.msra.mxu0 0.0
    %1471 = vmatprep.subr.mxu0 0.0
    %1472 = vmatpush1.xpose.msra.mxu0 0.0
    %1473 = vmatprep.subr.mxu0 0.0
    %1474 = vmatpush1.xpose.msra.mxu0 0.0
    %1475 = vmatprep.subr.mxu0 0.0
    %1476 = vmatpush1.xpose.msra.mxu0 0.0
    %1477 = vmatprep.subr.mxu0 0.0
    %1478 = vmatpush1.xpose.msra.mxu0 0.0
    %1479 = vmatprep.subr.mxu0 0.0
    %1480 = vmatpush1.xpose.msra.mxu0 0.0
    %1481 = vmatprep.subr.mxu0 0.0
    %1482 = vmatpush1.xpose.msra.mxu0 0.0
    %1483 = vmatprep.subr.mxu0 0.0
    %1484 = vmatpush1.xpose.msra.mxu0 0.0
    %1485 = vmatprep.subr.mxu0 0.0
    %1486 = vmatpush1.xpose.msra.mxu0 0.0
    %1487 = vmatprep.subr.mxu0 0.0
    %1488 = vmatpush1.xpose.msra.mxu0 0.0
    %1489 = vmatprep.subr.mxu0 0.0
    %1490 = vmatpush1.xpose.msra.mxu0 0.0
    %1491 = vmatprep.subr.mxu0 0.0
    %1492 = vmatpush1.xpose.msra.mxu0 0.0
    %1493 = vmatprep.subr.mxu0 0.0
    %1494 = vmatpush1.xpose.msra.mxu0 0.0
    %1495 = vmatprep.subr.mxu0 0.0
    %1496 = vmatpush1.xpose.msra.mxu0 0.0
    %1497 = vmatprep.subr.mxu0 0.0
    %1498 = vmatpush1.xpose.msra.mxu0 0.0
    %1499 = vmatprep.mubr.f32.mxu0 0.0
    %1500 = vmatmul.mubr.f32.gmra.mrb[0].mxu0 %v1427
    %v1501 = vpop.f32.mrb[0].mxu0
    %v1502 = vadd.f32 0.0, %v1501
    %v1503 = vpop.f32.mrb[0].mxu0
    %1504 = vmatprep.mubr.f32.mxu0 0.0
    %1505 = vmatmul.mubr.f32.gmra.mrb[0].mxu0 %v1429
    %v1506 = vpop.f32.mrb[0].mxu0
    %v1507 = vadd.f32 0.0, %v1506
    %v1508 = vpop.f32.mrb[0].mxu0
    %1509 = vdwg.mxu0
    %v1510 = vsel %vm172, %v1382, 0
    %v1512 = vsel %vm172, %v1384, 0
    %v1514 = vsel %vm172, %v1396, 0
    %v1516 = vsel %vm172, %v1398, 0
    %1518 = vmatprep.subr.mxu0 0.0
    %1519 = vmatpush1.xpose.msra.mxu0 %v1514
    %1520 = vmatprep.subr.mxu0 0.0
    %1521 = vmatpush1.xpose.msra.mxu0 %v1516
    %1522 = vmatprep.subr.mxu0 0.0
    %1523 = vmatpush1.xpose.msra.mxu0 0.0
    %1524 = vmatprep.subr.mxu0 0.0
    %1525 = vmatpush1.xpose.msra.mxu0 0.0
    %1526 = vmatprep.subr.mxu0 0.0
    %1527 = vmatpush1.xpose.msra.mxu0 0.0
    %1528 = vmatprep.subr.mxu0 0.0
    %1529 = vmatpush1.xpose.msra.mxu0 0.0
    %1530 = vmatprep.subr.mxu0 0.0
    %1531 = vmatpush1.xpose.msra.mxu0 0.0
    %1532 = vmatprep.subr.mxu0 0.0
    %1533 = vmatpush1.xpose.msra.mxu0 0.0
    %1534 = vmatprep.subr.mxu0 0.0
    %1535 = vmatpush1.xpose.msra.mxu0 0.0
    %1536 = vmatprep.subr.mxu0 0.0
    %1537 = vmatpush1.xpose.msra.mxu0 0.0
    %1538 = vmatprep.subr.mxu0 0.0
    %1539 = vmatpush1.xpose.msra.mxu0 0.0
    %1540 = vmatprep.subr.mxu0 0.0
    %1541 = vmatpush1.xpose.msra.mxu0 0.0
    %1542 = vmatprep.subr.mxu0 0.0
    %1543 = vmatpush1.xpose.msra.mxu0 0.0
    %1544 = vmatprep.subr.mxu0 0.0
    %1545 = vmatpush1.xpose.msra.mxu0 0.0
    %1546 = vmatprep.subr.mxu0 0.0
    %1547 = vmatpush1.xpose.msra.mxu0 0.0
    %1548 = vmatprep.subr.mxu0 0.0
    %1549 = vmatpush1.xpose.msra.mxu0 0.0
    %1550 = vmatprep.subr.mxu0 0.0
    %1551 = vmatpush1.xpose.msra.mxu0 0.0
    %1552 = vmatprep.subr.mxu0 0.0
    %1553 = vmatpush1.xpose.msra.mxu0 0.0
    %1554 = vmatprep.subr.mxu0 0.0
    %1555 = vmatpush1.xpose.msra.mxu0 0.0
    %1556 = vmatprep.subr.mxu0 0.0
    %1557 = vmatpush1.xpose.msra.mxu0 0.0
    %1558 = vmatprep.subr.mxu0 0.0
    %1559 = vmatpush1.xpose.msra.mxu0 0.0
    %1560 = vmatprep.subr.mxu0 0.0
    %1561 = vmatpush1.xpose.msra.mxu0 0.0
    %1562 = vmatprep.subr.mxu0 0.0
    %1563 = vmatpush1.xpose.msra.mxu0 0.0
    %1564 = vmatprep.subr.mxu0 0.0
    %1565 = vmatpush1.xpose.msra.mxu0 0.0
    %1566 = vmatprep.subr.mxu0 0.0
    %1567 = vmatpush1.xpose.msra.mxu0 0.0
    %1568 = vmatprep.subr.mxu0 0.0
    %1569 = vmatpush1.xpose.msra.mxu0 0.0
    %1570 = vmatprep.subr.mxu0 0.0
    %1571 = vmatpush1.xpose.msra.mxu0 0.0
    %1572 = vmatprep.subr.mxu0 0.0
    %1573 = vmatpush1.xpose.msra.mxu0 0.0
    %1574 = vmatprep.subr.mxu0 0.0
    %1575 = vmatpush1.xpose.msra.mxu0 0.0
    %1576 = vmatprep.subr.mxu0 0.0
    %1577 = vmatpush1.xpose.msra.mxu0 0.0
    %1578 = vmatprep.subr.mxu0 0.0
    %1579 = vmatpush1.xpose.msra.mxu0 0.0
    %1580 = vmatprep.subr.mxu0 0.0
    %1581 = vmatpush1.xpose.msra.mxu0 0.0
    %1582 = vmatprep.mubr.f32.mxu0 0.0
    %1583 = vmatmul.mubr.f32.gmra.mrb[0].mxu0 %v1510
    %v1584 = vpop.f32.mrb[0].mxu0
    %v1585 = vadd.f32 0.0, %v1584
    %v1586 = vpop.f32.mrb[0].mxu0
    %1587 = vmatprep.mubr.f32.mxu0 0.0
    %1588 = vmatmul.mubr.f32.gmra.mrb[0].mxu0 %v1512
    %v1589 = vpop.f32.mrb[0].mxu0
    %v1590 = vadd.f32 0.0, %v1589
    %v1591 = vpop.f32.mrb[0].mxu0
    %1592 = vdwg.mxu0
    %v1593 = vsel %vm172, %v1386, 0
    %v1595 = vsel %vm172, %v1388, 0
    %v1597 = vsel %vm172, %v1400, 0
    %v1599 = vsel %vm172, %v1402, 0
    %1601 = vmatprep.subr.mxu0 0.0
    %1602 = vmatpush1.xpose.msra.mxu0 %v1597
    %1603 = vmatprep.subr.mxu0 0.0
    %1604 = vmatpush1.xpose.msra.mxu0 %v1599
    %1605 = vmatprep.subr.mxu0 0.0
    %1606 = vmatpush1.xpose.msra.mxu0 0.0
    %1607 = vmatprep.subr.mxu0 0.0
    %1608 = vmatpush1.xpose.msra.mxu0 0.0
    %1609 = vmatprep.subr.mxu0 0.0
    %1610 = vmatpush1.xpose.msra.mxu0 0.0
    %1611 = vmatprep.subr.mxu0 0.0
    %1612 = vmatpush1.xpose.msra.mxu0 0.0
    %1613 = vmatprep.subr.mxu0 0.0
    %1614 = vmatpush1.xpose.msra.mxu0 0.0
    %1615 = vmatprep.subr.mxu0 0.0
    %1616 = vmatpush1.xpose.msra.mxu0 0.0
    %1617 = vmatprep.subr.mxu0 0.0
    %1618 = vmatpush1.xpose.msra.mxu0 0.0
    %1619 = vmatprep.subr.mxu0 0.0
    %1620 = vmatpush1.xpose.msra.mxu0 0.0
    %1621 = vmatprep.subr.mxu0 0.0
    %1622 = vmatpush1.xpose.msra.mxu0 0.0
    %1623 = vmatprep.subr.mxu0 0.0
    %1624 = vmatpush1.xpose.msra.mxu0 0.0
    %1625 = vmatprep.subr.mxu0 0.0
    %1626 = vmatpush1.xpose.msra.mxu0 0.0
    %1627 = vmatprep.subr.mxu0 0.0
    %1628 = vmatpush1.xpose.msra.mxu0 0.0
    %1629 = vmatprep.subr.mxu0 0.0
    %1630 = vmatpush1.xpose.msra.mxu0 0.0
    %1631 = vmatprep.subr.mxu0 0.0
    %1632 = vmatpush1.xpose.msra.mxu0 0.0
    %1633 = vmatprep.subr.mxu0 0.0
    %1634 = vmatpush1.xpose.msra.mxu0 0.0
    %1635 = vmatprep.subr.mxu0 0.0
    %1636 = vmatpush1.xpose.msra.mxu0 0.0
    %1637 = vmatprep.subr.mxu0 0.0
    %1638 = vmatpush1.xpose.msra.mxu0 0.0
    %1639 = vmatprep.subr.mxu0 0.0
    %1640 = vmatpush1.xpose.msra.mxu0 0.0
    %1641 = vmatprep.subr.mxu0 0.0
    %1642 = vmatpush1.xpose.msra.mxu0 0.0
    %1643 = vmatprep.subr.mxu0 0.0
    %1644 = vmatpush1.xpose.msra.mxu0 0.0
    %1645 = vmatprep.subr.mxu0 0.0
    %1646 = vmatpush1.xpose.msra.mxu0 0.0
    %1647 = vmatprep.subr.mxu0 0.0
    %1648 = vmatpush1.xpose.msra.mxu0 0.0
    %1649 = vmatprep.subr.mxu0 0.0
    %1650 = vmatpush1.xpose.msra.mxu0 0.0
    %1651 = vmatprep.subr.mxu0 0.0
    %1652 = vmatpush1.xpose.msra.mxu0 0.0
    %1653 = vmatprep.subr.mxu0 0.0
    %1654 = vmatpush1.xpose.msra.mxu0 0.0
    %1655 = vmatprep.subr.mxu0 0.0
    %1656 = vmatpush1.xpose.msra.mxu0 0.0
    %1657 = vmatprep.subr.mxu0 0.0
    %1658 = vmatpush1.xpose.msra.mxu0 0.0
    %1659 = vmatprep.subr.mxu0 0.0
    %1660 = vmatpush1.xpose.msra.mxu0 0.0
    %1661 = vmatprep.subr.mxu0 0.0
    %1662 = vmatpush1.xpose.msra.mxu0 0.0
    %1663 = vmatprep.subr.mxu0 0.0
    %1664 = vmatpush1.xpose.msra.mxu0 0.0
    %1665 = vmatprep.mubr.f32.mxu0 0.0
    %1666 = vmatmul.mubr.f32.gmra.mrb[0].mxu0 %v1593
    %v1667 = vpop.f32.mrb[0].mxu0
    %v1668 = vadd.f32 0.0, %v1667
    %v1669 = vpop.f32.mrb[0].mxu0
    %1670 = vmatprep.mubr.f32.mxu0 0.0
    %1671 = vmatmul.mubr.f32.gmra.mrb[0].mxu0 %v1595
    %v1672 = vpop.f32.mrb[0].mxu0
    %v1673 = vadd.f32 0.0, %v1672
    %v1674 = vpop.f32.mrb[0].mxu0
    %1675 = vdwg.mxu0
    %v1676 = vsel %vm172, %v1390, 0
    %v1678 = vsel %vm172, %v1392, 0
    %v1680 = vsel %vm172, %v1404, 0
    %v1682 = vsel %vm172, %v1406, 0
    %1684 = vmatprep.subr.mxu0 0.0
    %1685 = vmatpush1.xpose.msra.mxu0 %v1680
    %1686 = vmatprep.subr.mxu0 0.0
    %1687 = vmatpush1.xpose.msra.mxu0 %v1682
    %1688 = vmatprep.subr.mxu0 0.0
    %1689 = vmatpush1.xpose.msra.mxu0 0.0
    %1690 = vmatprep.subr.mxu0 0.0
    %1691 = vmatpush1.xpose.msra.mxu0 0.0
    %1692 = vmatprep.subr.mxu0 0.0
    %1693 = vmatpush1.xpose.msra.mxu0 0.0
    %1694 = vmatprep.subr.mxu0 0.0
    %1695 = vmatpush1.xpose.msra.mxu0 0.0
    %1696 = vmatprep.subr.mxu0 0.0
    %1697 = vmatpush1.xpose.msra.mxu0 0.0
    %1698 = vmatprep.subr.mxu0 0.0
    %1699 = vmatpush1.xpose.msra.mxu0 0.0
    %1700 = vmatprep.subr.mxu0 0.0
    %1701 = vmatpush1.xpose.msra.mxu0 0.0
    %1702 = vmatprep.subr.mxu0 0.0
    %1703 = vmatpush1.xpose.msra.mxu0 0.0
    %1704 = vmatprep.subr.mxu0 0.0
    %1705 = vmatpush1.xpose.msra.mxu0 0.0
    %1706 = vmatprep.subr.mxu0 0.0
    %1707 = vmatpush1.xpose.msra.mxu0 0.0
    %1708 = vmatprep.subr.mxu0 0.0
    %1709 = vmatpush1.xpose.msra.mxu0 0.0
    %1710 = vmatprep.subr.mxu0 0.0
    %1711 = vmatpush1.xpose.msra.mxu0 0.0
    %1712 = vmatprep.subr.mxu0 0.0
    %1713 = vmatpush1.xpose.msra.mxu0 0.0
    %1714 = vmatprep.subr.mxu0 0.0
    %1715 = vmatpush1.xpose.msra.mxu0 0.0
    %1716 = vmatprep.subr.mxu0 0.0
    %1717 = vmatpush1.xpose.msra.mxu0 0.0
    %1718 = vmatprep.subr.mxu0 0.0
    %1719 = vmatpush1.xpose.msra.mxu0 0.0
    %1720 = vmatprep.subr.mxu0 0.0
    %1721 = vmatpush1.xpose.msra.mxu0 0.0
    %1722 = vmatprep.subr.mxu0 0.0
    %1723 = vmatpush1.xpose.msra.mxu0 0.0
    %1724 = vmatprep.subr.mxu0 0.0
    %1725 = vmatpush1.xpose.msra.mxu0 0.0
    %1726 = vmatprep.subr.mxu0 0.0
    %1727 = vmatpush1.xpose.msra.mxu0 0.0
    %1728 = vmatprep.subr.mxu0 0.0
    %1729 = vmatpush1.xpose.msra.mxu0 0.0
    %1730 = vmatprep.subr.mxu0 0.0
    %1731 = vmatpush1.xpose.msra.mxu0 0.0
    %1732 = vmatprep.subr.mxu0 0.0
    %1733 = vmatpush1.xpose.msra.mxu0 0.0
    %1734 = vmatprep.subr.mxu0 0.0
    %1735 = vmatpush1.xpose.msra.mxu0 0.0
    %1736 = vmatprep.subr.mxu0 0.0
    %1737 = vmatpush1.xpose.msra.mxu0 0.0
    %1738 = vmatprep.subr.mxu0 0.0
    %1739 = vmatpush1.xpose.msra.mxu0 0.0
    %1740 = vmatprep.subr.mxu0 0.0
    %1741 = vmatpush1.xpose.msra.mxu0 0.0
    %1742 = vmatprep.subr.mxu0 0.0
    %1743 = vmatpush1.xpose.msra.mxu0 0.0
    %1744 = vmatprep.subr.mxu0 0.0
    %1745 = vmatpush1.xpose.msra.mxu0 0.0
    %1746 = vmatprep.subr.mxu0 0.0
    %1747 = vmatpush1.xpose.msra.mxu0 0.0
    %1748 = vmatprep.mubr.f32.mxu0 0.0
    %1749 = vmatmul.mubr.f32.gmra.mrb[0].mxu0 %v1676
    %v1750 = vpop.f32.mrb[0].mxu0
    %v1751 = vadd.f32 0.0, %v1750
    %v1752 = vpop.f32.mrb[0].mxu0
    %1753 = vmatprep.mubr.f32.mxu0 0.0
    %1754 = vmatmul.mubr.f32.gmra.mrb[0].mxu0 %v1678
    %v1755 = vpop.f32.mrb[0].mxu0
    %v1756 = vadd.f32 0.0, %v1755
    %v1757 = vpop.f32.mrb[0].mxu0
    %1758 = vdwg.mxu0
    %v1759 = vmul.f32 %v1502, 0.17677669
    %v1760 = vmul.f32 %v1507, 0.17677669
    %v1761 = vmul.f32 %v1585, 0.17677669
    %v1762 = vmul.f32 %v1590, 0.17677669
    %v1763 = vmul.f32 %v1668, 0.17677669
    %v1764 = vmul.f32 %v1673, 0.17677669
    %v1765 = vmul.f32 %v1751, 0.17677669
    %v1766 = vmul.f32 %v1756, 0.17677669
    %v1767 = vld [vmem:[#allocation7] sm:$0xff]
    %v1768 = vld [vmem:[#allocation7 + $0x8] sm:$0xff]
    %v1769 = vld [vmem:[#allocation7 + $0x10] sm:$0xff]
    %v1770 = vld [vmem:[#allocation7 + $0x18] sm:$0xff]
    %v1771 = vld [vmem:[#allocation7 + $0x20] sm:$0xff]
    %v1772 = vld [vmem:[#allocation7 + $0x28] sm:$0xff]
    %v1773 = vld [vmem:[#allocation7 + $0x30] sm:$0xff]
    %v1774 = vld [vmem:[#allocation7 + $0x38] sm:$0xff]
    %v1775 = vadd.f32 %v1759, %v1767
    %v1776 = vadd.f32 %v1760, %v1768
    %v1777 = vadd.f32 %v1761, %v1769
    %v1778 = vadd.f32 %v1762, %v1770
    %v1779 = vadd.f32 %v1763, %v1771
    %v1780 = vadd.f32 %v1764, %v1772
    %v1781 = vadd.f32 %v1765, %v1773
    %v1782 = vadd.f32 %v1766, %v1774
    %v1783 = vsel %vm934, %v1775, -inf
    %1784 = vmax.xlane.f32.xlu0 %v1783
    %v1785 = vpop.xlane.xlu0 %1784
    %v1786 = vsel %vm934, %v1776, -inf
    %1787 = vmax.xlane.f32.xlu0 %v1786
    %v1788 = vpop.xlane.xlu0 %1787
    %v1789 = vsel %vm934, %v1777, -inf
    %1790 = vmax.xlane.f32.xlu0 %v1789
    %v1791 = vpop.xlane.xlu0 %1790
    %v1792 = vsel %vm934, %v1778, -inf
    %1793 = vmax.xlane.f32.xlu0 %v1792
    %v1794 = vpop.xlane.xlu0 %1793
    %v1795 = vsel %vm934, %v1779, -inf
    %1796 = vmax.xlane.f32.xlu0 %v1795
    %v1797 = vpop.xlane.xlu0 %1796
    %v1798 = vsel %vm934, %v1780, -inf
    %1799 = vmax.xlane.f32.xlu0 %v1798
    %v1800 = vpop.xlane.xlu0 %1799
    %v1801 = vsel %vm934, %v1781, -inf
    %1802 = vmax.xlane.f32.xlu0 %v1801
    %v1803 = vpop.xlane.xlu0 %1802
    %v1804 = vsel %vm934, %v1782, -inf
    %1805 = vmax.xlane.f32.xlu0 %v1804
    %v1806 = vpop.xlane.xlu0 %1805
    %v1807 = vsub.f32 %v1775, %v1785
    %v1808 = vsub.f32 %v1776, %v1788
    %v1809 = vsub.f32 %v1777, %v1791
    %v1810 = vsub.f32 %v1778, %v1794
    %v1811 = vsub.f32 %v1779, %v1797
    %v1812 = vsub.f32 %v1780, %v1800
    %v1813 = vsub.f32 %v1781, %v1803
    %v1814 = vsub.f32 %v1782, %v1806
    %v1815 = vmul.f32 %v1807, 1.442695
    %v1816 = vpow.pop %v1815
    %v1817 = vmul.f32 %v1808, 1.442695
    %v1818 = vpow.pop %v1817
    %v1819 = vmul.f32 %v1809, 1.442695
    %v1820 = vpow.pop %v1819
    %v1821 = vmul.f32 %v1810, 1.442695
    %v1822 = vpow.pop %v1821
    %v1823 = vmul.f32 %v1811, 1.442695
    %v1824 = vpow.pop %v1823
    %v1825 = vmul.f32 %v1812, 1.442695
    %v1826 = vpow.pop %v1825
    %v1827 = vmul.f32 %v1813, 1.442695
    %v1828 = vpow.pop %v1827
    %v1829 = vmul.f32 %v1814, 1.442695
    %v1830 = vpow.pop %v1829
    %v1831 = vsel %vm934, %v1816, 0.0
    %1832 = vadd.xlane.f32.xlu0 %v1831
    %v1833 = vpop.xlane.xlu0 %1832
    %v1834 = vsel %vm934, %v1818, 0.0
    %1835 = vadd.xlane.f32.xlu0 %v1834
    %v1836 = vpop.xlane.xlu0 %1835
    %v1837 = vsel %vm934, %v1820, 0.0
    %1838 = vadd.xlane.f32.xlu0 %v1837
    %v1839 = vpop.xlane.xlu0 %1838
    %v1840 = vsel %vm934, %v1822, 0.0
    %1841 = vadd.xlane.f32.xlu0 %v1840
    %v1842 = vpop.xlane.xlu0 %1841
    %v1843 = vsel %vm934, %v1824, 0.0
    %1844 = vadd.xlane.f32.xlu0 %v1843
    %v1845 = vpop.xlane.xlu0 %1844
    %v1846 = vsel %vm934, %v1826, 0.0
    %1847 = vadd.xlane.f32.xlu0 %v1846
    %v1848 = vpop.xlane.xlu0 %1847
    %v1849 = vsel %vm934, %v1828, 0.0
    %1850 = vadd.xlane.f32.xlu0 %v1849
    %v1851 = vpop.xlane.xlu0 %1850
    %v1852 = vsel %vm934, %v1830, 0.0
    %1853 = vadd.xlane.f32.xlu0 %v1852
    %v1854 = vpop.xlane.xlu0 %1853
    %v1855 = vrcp.pop %v1833
    %v1856 = vrcp.pop %v1836
    %v1857 = vrcp.pop %v1839
    %v1858 = vrcp.pop %v1842
    %v1859 = vrcp.pop %v1845
    %v1860 = vrcp.pop %v1848
    %v1861 = vrcp.pop %v1851
    %v1862 = vrcp.pop %v1854
    %v1863 = vmul.f32 %v1816, %v1855
    %v1864 = vmul.f32 %v1818, %v1856
    %v1865 = vmul.f32 %v1820, %v1857
    %v1866 = vmul.f32 %v1822, %v1858
    %v1867 = vmul.f32 %v1824, %v1859
    %v1868 = vmul.f32 %v1826, %v1860
    %v1869 = vmul.f32 %v1828, %v1861
    %v1870 = vmul.f32 %v1830, %v1862
    %v1872 = vsel %vm934, %v1863, 0
    %v1875 = vsel %vm934, %v1864, 0
    %1877 = vmatprep.subr.mxu0 0.0
    %1878 = vmatpush1.msra.mxu0 %v522
    %1879 = vmatprep.subr.mxu0 0.0
    %1880 = vmatpush1.msra.mxu0 %v527
    %1881 = vmatprep.subr.mxu0 0.0
    %1882 = vmatpush1.msra.mxu0 0.0
    %1883 = vmatprep.subr.mxu0 0.0
    %1884 = vmatpush1.msra.mxu0 0.0
    %1885 = vmatprep.subr.mxu0 0.0
    %1886 = vmatpush1.msra.mxu0 0.0
    %1887 = vmatprep.subr.mxu0 0.0
    %1888 = vmatpush1.msra.mxu0 0.0
    %1889 = vmatprep.subr.mxu0 0.0
    %1890 = vmatpush1.msra.mxu0 0.0
    %1891 = vmatprep.subr.mxu0 0.0
    %1892 = vmatpush1.msra.mxu0 0.0
    %1893 = vmatprep.subr.mxu0 0.0
    %1894 = vmatpush1.msra.mxu0 0.0
    %1895 = vmatprep.subr.mxu0 0.0
    %1896 = vmatpush1.msra.mxu0 0.0
    %1897 = vmatprep.subr.mxu0 0.0
    %1898 = vmatpush1.msra.mxu0 0.0
    %1899 = vmatprep.subr.mxu0 0.0
    %1900 = vmatpush1.msra.mxu0 0.0
    %1901 = vmatprep.subr.mxu0 0.0
    %1902 = vmatpush1.msra.mxu0 0.0
    %1903 = vmatprep.subr.mxu0 0.0
    %1904 = vmatpush1.msra.mxu0 0.0
    %1905 = vmatprep.subr.mxu0 0.0
    %1906 = vmatpush1.msra.mxu0 0.0
    %1907 = vmatprep.subr.mxu0 0.0
    %1908 = vmatpush1.msra.mxu0 0.0
    %1909 = vmatprep.subr.mxu0 0.0
    %1910 = vmatpush1.msra.mxu0 0.0
    %1911 = vmatprep.subr.mxu0 0.0
    %1912 = vmatpush1.msra.mxu0 0.0
    %1913 = vmatprep.subr.mxu0 0.0
    %1914 = vmatpush1.msra.mxu0 0.0
    %1915 = vmatprep.subr.mxu0 0.0
    %1916 = vmatpush1.msra.mxu0 0.0
    %1917 = vmatprep.subr.mxu0 0.0
    %1918 = vmatpush1.msra.mxu0 0.0
    %1919 = vmatprep.subr.mxu0 0.0
    %1920 = vmatpush1.msra.mxu0 0.0
    %1921 = vmatprep.subr.mxu0 0.0
    %1922 = vmatpush1.msra.mxu0 0.0
    %1923 = vmatprep.subr.mxu0 0.0
    %1924 = vmatpush1.msra.mxu0 0.0
    %1925 = vmatprep.subr.mxu0 0.0
    %1926 = vmatpush1.msra.mxu0 0.0
    %1927 = vmatprep.subr.mxu0 0.0
    %1928 = vmatpush1.msra.mxu0 0.0
    %1929 = vmatprep.subr.mxu0 0.0
    %1930 = vmatpush1.msra.mxu0 0.0
    %1931 = vmatprep.subr.mxu0 0.0
    %1932 = vmatpush1.msra.mxu0 0.0
    %1933 = vmatprep.subr.mxu0 0.0
    %1934 = vmatpush1.msra.mxu0 0.0
    %1935 = vmatprep.subr.mxu0 0.0
    %1936 = vmatpush1.msra.mxu0 0.0
    %1937 = vmatprep.subr.mxu0 0.0
    %1938 = vmatpush1.msra.mxu0 0.0
    %1939 = vmatprep.subr.mxu0 0.0
    %1940 = vmatpush1.msra.mxu0 0.0
    %1941 = vmatprep.mubr.f32.mxu0 0.0
    %1942 = vmatmul.mubr.f32.gmra.mrb[0].mxu0 %v1872
    %v1943 = vpop.f32.mrb[0].mxu0
    %v1944 = vadd.f32 0.0, %v1943
    %v1945 = vpop.f32.mrb[0].mxu0
    %1946 = vmatprep.mubr.f32.mxu0 0.0
    %1947 = vmatmul.mubr.f32.gmra.mrb[0].mxu0 %v1875
    %v1948 = vpop.f32.mrb[0].mxu0
    %v1949 = vadd.f32 0.0, %v1948
    %v1950 = vpop.f32.mrb[0].mxu0
    %1951 = vdwg.mxu0
    %v1953 = vsel %vm934, %v1865, 0
    %v1956 = vsel %vm934, %v1866, 0
    %1958 = vmatprep.subr.mxu0 0.0
    %1959 = vmatpush1.msra.mxu0 %v1410
    %1960 = vmatprep.subr.mxu0 0.0
    %1961 = vmatpush1.msra.mxu0 %v1412
    %1962 = vmatprep.subr.mxu0 0.0
    %1963 = vmatpush1.msra.mxu0 0.0
    %1964 = vmatprep.subr.mxu0 0.0
    %1965 = vmatpush1.msra.mxu0 0.0
    %1966 = vmatprep.subr.mxu0 0.0
    %1967 = vmatpush1.msra.mxu0 0.0
    %1968 = vmatprep.subr.mxu0 0.0
    %1969 = vmatpush1.msra.mxu0 0.0
    %1970 = vmatprep.subr.mxu0 0.0
    %1971 = vmatpush1.msra.mxu0 0.0
    %1972 = vmatprep.subr.mxu0 0.0
    %1973 = vmatpush1.msra.mxu0 0.0
    %1974 = vmatprep.subr.mxu0 0.0
    %1975 = vmatpush1.msra.mxu0 0.0
    %1976 = vmatprep.subr.mxu0 0.0
    %1977 = vmatpush1.msra.mxu0 0.0
    %1978 = vmatprep.subr.mxu0 0.0
    %1979 = vmatpush1.msra.mxu0 0.0
    %1980 = vmatprep.subr.mxu0 0.0
    %1981 = vmatpush1.msra.mxu0 0.0
    %1982 = vmatprep.subr.mxu0 0.0
    %1983 = vmatpush1.msra.mxu0 0.0
    %1984 = vmatprep.subr.mxu0 0.0
    %1985 = vmatpush1.msra.mxu0 0.0
    %1986 = vmatprep.subr.mxu0 0.0
    %1987 = vmatpush1.msra.mxu0 0.0
    %1988 = vmatprep.subr.mxu0 0.0
    %1989 = vmatpush1.msra.mxu0 0.0
    %1990 = vmatprep.subr.mxu0 0.0
    %1991 = vmatpush1.msra.mxu0 0.0
    %1992 = vmatprep.subr.mxu0 0.0
    %1993 = vmatpush1.msra.mxu0 0.0
    %1994 = vmatprep.subr.mxu0 0.0
    %1995 = vmatpush1.msra.mxu0 0.0
    %1996 = vmatprep.subr.mxu0 0.0
    %1997 = vmatpush1.msra.mxu0 0.0
    %1998 = vmatprep.subr.mxu0 0.0
    %1999 = vmatpush1.msra.mxu0 0.0
    %2000 = vmatprep.subr.mxu0 0.0
    %2001 = vmatpush1.msra.mxu0 0.0
    %2002 = vmatprep.subr.mxu0 0.0
    %2003 = vmatpush1.msra.mxu0 0.0
    %2004 = vmatprep.subr.mxu0 0.0
    %2005 = vmatpush1.msra.mxu0 0.0
    %2006 = vmatprep.subr.mxu0 0.0
    %2007 = vmatpush1.msra.mxu0 0.0
    %2008 = vmatprep.subr.mxu0 0.0
    %2009 = vmatpush1.msra.mxu0 0.0
    %2010 = vmatprep.subr.mxu0 0.0
    %2011 = vmatpush1.msra.mxu0 0.0
    %2012 = vmatprep.subr.mxu0 0.0
    %2013 = vmatpush1.msra.mxu0 0.0
    %2014 = vmatprep.subr.mxu0 0.0
    %2015 = vmatpush1.msra.mxu0 0.0
    %2016 = vmatprep.subr.mxu0 0.0
    %2017 = vmatpush1.msra.mxu0 0.0
    %2018 = vmatprep.subr.mxu0 0.0
    %2019 = vmatpush1.msra.mxu0 0.0
    %2020 = vmatprep.subr.mxu0 0.0
    %2021 = vmatpush1.msra.mxu0 0.0
    %2022 = vmatprep.mubr.f32.mxu0 0.0
    %2023 = vmatmul.mubr.f32.gmra.mrb[0].mxu0 %v1953
    %v2024 = vpop.f32.mrb[0].mxu0
    %v2025 = vadd.f32 0.0, %v2024
    %v2026 = vpop.f32.mrb[0].mxu0
    %2027 = vmatprep.mubr.f32.mxu0 0.0
    %2028 = vmatmul.mubr.f32.gmra.mrb[0].mxu0 %v1956
    %v2029 = vpop.f32.mrb[0].mxu0
    %v2030 = vadd.f32 0.0, %v2029
    %v2031 = vpop.f32.mrb[0].mxu0
    %2032 = vdwg.mxu0
    %v2034 = vsel %vm934, %v1867, 0
    %v2037 = vsel %vm934, %v1868, 0
    %2039 = vmatprep.subr.mxu0 0.0
    %2040 = vmatpush1.msra.mxu0 %v1416
    %2041 = vmatprep.subr.mxu0 0.0
    %2042 = vmatpush1.msra.mxu0 %v1418
    %2043 = vmatprep.subr.mxu0 0.0
    %2044 = vmatpush1.msra.mxu0 0.0
    %2045 = vmatprep.subr.mxu0 0.0
    %2046 = vmatpush1.msra.mxu0 0.0
    %2047 = vmatprep.subr.mxu0 0.0
    %2048 = vmatpush1.msra.mxu0 0.0
    %2049 = vmatprep.subr.mxu0 0.0
    %2050 = vmatpush1.msra.mxu0 0.0
    %2051 = vmatprep.subr.mxu0 0.0
    %2052 = vmatpush1.msra.mxu0 0.0
    %2053 = vmatprep.subr.mxu0 0.0
    %2054 = vmatpush1.msra.mxu0 0.0
    %2055 = vmatprep.subr.mxu0 0.0
    %2056 = vmatpush1.msra.mxu0 0.0
    %2057 = vmatprep.subr.mxu0 0.0
    %2058 = vmatpush1.msra.mxu0 0.0
    %2059 = vmatprep.subr.mxu0 0.0
    %2060 = vmatpush1.msra.mxu0 0.0
    %2061 = vmatprep.subr.mxu0 0.0
    %2062 = vmatpush1.msra.mxu0 0.0
    %2063 = vmatprep.subr.mxu0 0.0
    %2064 = vmatpush1.msra.mxu0 0.0
    %2065 = vmatprep.subr.mxu0 0.0
    %2066 = vmatpush1.msra.mxu0 0.0
    %2067 = vmatprep.subr.mxu0 0.0
    %2068 = vmatpush1.msra.mxu0 0.0
    %2069 = vmatprep.subr.mxu0 0.0
    %2070 = vmatpush1.msra.mxu0 0.0
    %2071 = vmatprep.subr.mxu0 0.0
    %2072 = vmatpush1.msra.mxu0 0.0
    %2073 = vmatprep.subr.mxu0 0.0
    %2074 = vmatpush1.msra.mxu0 0.0
    %2075 = vmatprep.subr.mxu0 0.0
    %2076 = vmatpush1.msra.mxu0 0.0
    %2077 = vmatprep.subr.mxu0 0.0
    %2078 = vmatpush1.msra.mxu0 0.0
    %2079 = vmatprep.subr.mxu0 0.0
    %2080 = vmatpush1.msra.mxu0 0.0
    %2081 = vmatprep.subr.mxu0 0.0
    %2082 = vmatpush1.msra.mxu0 0.0
    %2083 = vmatprep.subr.mxu0 0.0
    %2084 = vmatpush1.msra.mxu0 0.0
    %2085 = vmatprep.subr.mxu0 0.0
    %2086 = vmatpush1.msra.mxu0 0.0
    %2087 = vmatprep.subr.mxu0 0.0
    %2088 = vmatpush1.msra.mxu0 0.0
    %2089 = vmatprep.subr.mxu0 0.0
    %2090 = vmatpush1.msra.mxu0 0.0
    %2091 = vmatprep.subr.mxu0 0.0
    %2092 = vmatpush1.msra.mxu0 0.0
    %2093 = vmatprep.subr.mxu0 0.0
    %2094 = vmatpush1.msra.mxu0 0.0
    %2095 = vmatprep.subr.mxu0 0.0
    %2096 = vmatpush1.msra.mxu0 0.0
    %2097 = vmatprep.subr.mxu0 0.0
    %2098 = vmatpush1.msra.mxu0 0.0
    %2099 = vmatprep.subr.mxu0 0.0
    %2100 = vmatpush1.msra.mxu0 0.0
    %2101 = vmatprep.subr.mxu0 0.0
    %2102 = vmatpush1.msra.mxu0 0.0
    %2103 = vmatprep.mubr.f32.mxu0 0.0
    %2104 = vmatmul.mubr.f32.gmra.mrb[0].mxu0 %v2034
    %v2105 = vpop.f32.mrb[0].mxu0
    %v2106 = vadd.f32 0.0, %v2105
    %v2107 = vpop.f32.mrb[0].mxu0
    %2108 = vmatprep.mubr.f32.mxu0 0.0
    %2109 = vmatmul.mubr.f32.gmra.mrb[0].mxu0 %v2037
    %v2110 = vpop.f32.mrb[0].mxu0
    %v2111 = vadd.f32 0.0, %v2110
    %v2112 = vpop.f32.mrb[0].mxu0
    %2113 = vdwg.mxu0
    %v2115 = vsel %vm934, %v1869, 0
    %v2118 = vsel %vm934, %v1870, 0
    %2120 = vmatprep.subr.mxu0 0.0
    %2121 = vmatpush1.msra.mxu0 %v1422
    %2122 = vmatprep.subr.mxu0 0.0
    %2123 = vmatpush1.msra.mxu0 %v1424
    %2124 = vmatprep.subr.mxu0 0.0
    %2125 = vmatpush1.msra.mxu0 0.0
    %2126 = vmatprep.subr.mxu0 0.0
    %2127 = vmatpush1.msra.mxu0 0.0
    %2128 = vmatprep.subr.mxu0 0.0
    %2129 = vmatpush1.msra.mxu0 0.0
    %2130 = vmatprep.subr.mxu0 0.0
    %2131 = vmatpush1.msra.mxu0 0.0
    %2132 = vmatprep.subr.mxu0 0.0
    %2133 = vmatpush1.msra.mxu0 0.0
    %2134 = vmatprep.subr.mxu0 0.0
    %2135 = vmatpush1.msra.mxu0 0.0
    %2136 = vmatprep.subr.mxu0 0.0
    %2137 = vmatpush1.msra.mxu0 0.0
    %2138 = vmatprep.subr.mxu0 0.0
    %2139 = vmatpush1.msra.mxu0 0.0
    %2140 = vmatprep.subr.mxu0 0.0
    %2141 = vmatpush1.msra.mxu0 0.0
    %2142 = vmatprep.subr.mxu0 0.0
    %2143 = vmatpush1.msra.mxu0 0.0
    %2144 = vmatprep.subr.mxu0 0.0
    %2145 = vmatpush1.msra.mxu0 0.0
    %2146 = vmatprep.subr.mxu0 0.0
    %2147 = vmatpush1.msra.mxu0 0.0
    %2148 = vmatprep.subr.mxu0 0.0
    %2149 = vmatpush1.msra.mxu0 0.0
    %2150 = vmatprep.subr.mxu0 0.0
    %2151 = vmatpush1.msra.mxu0 0.0
    %2152 = vmatprep.subr.mxu0 0.0
    %2153 = vmatpush1.msra.mxu0 0.0
    %2154 = vmatprep.subr.mxu0 0.0
    %2155 = vmatpush1.msra.mxu0 0.0
    %2156 = vmatprep.subr.mxu0 0.0
    %2157 = vmatpush1.msra.mxu0 0.0
    %2158 = vmatprep.subr.mxu0 0.0
    %2159 = vmatpush1.msra.mxu0 0.0
    %2160 = vmatprep.subr.mxu0 0.0
    %2161 = vmatpush1.msra.mxu0 0.0
    %2162 = vmatprep.subr.mxu0 0.0
    %2163 = vmatpush1.msra.mxu0 0.0
    %2164 = vmatprep.subr.mxu0 0.0
    %2165 = vmatpush1.msra.mxu0 0.0
    %2166 = vmatprep.subr.mxu0 0.0
    %2167 = vmatpush1.msra.mxu0 0.0
    %2168 = vmatprep.subr.mxu0 0.0
    %2169 = vmatpush1.msra.mxu0 0.0
    %2170 = vmatprep.subr.mxu0 0.0
    %2171 = vmatpush1.msra.mxu0 0.0
    %2172 = vmatprep.subr.mxu0 0.0
    %2173 = vmatpush1.msra.mxu0 0.0
    %2174 = vmatprep.subr.mxu0 0.0
    %2175 = vmatpush1.msra.mxu0 0.0
    %2176 = vmatprep.subr.mxu0 0.0
    %2177 = vmatpush1.msra.mxu0 0.0
    %2178 = vmatprep.subr.mxu0 0.0
    %2179 = vmatpush1.msra.mxu0 0.0
    %2180 = vmatprep.subr.mxu0 0.0
    %2181 = vmatpush1.msra.mxu0 0.0
    %2182 = vmatprep.subr.mxu0 0.0
    %2183 = vmatpush1.msra.mxu0 0.0
    %2184 = vmatprep.mubr.f32.mxu0 0.0
    %2185 = vmatmul.mubr.f32.gmra.mrb[0].mxu0 %v2115
    %v2186 = vpop.f32.mrb[0].mxu0
    %v2187 = vadd.f32 0.0, %v2186
    %v2188 = vpop.f32.mrb[0].mxu0
    %2189 = vmatprep.mubr.f32.mxu0 0.0
    %2190 = vmatmul.mubr.f32.gmra.mrb[0].mxu0 %v2118
    %v2191 = vpop.f32.mrb[0].mxu0
    %v2192 = vadd.f32 0.0, %v2191
    %v2193 = vpop.f32.mrb[0].mxu0
    %2194 = vdwg.mxu0
    %2197 = vrot.lane.b32.xlu0 %v2025, 32
    %v2198 = vpop.permute.xlu0 %2197
    %2199 = vrot.lane.b32.xlu0 %v2030, 32
    %v2200 = vpop.permute.xlu0 %2199
    %2205 = vrot.lane.b32.xlu0 %v2106, 64
    %v2206 = vpop.permute.xlu0 %2205
    %2207 = vrot.lane.b32.xlu0 %v2111, 64
    %v2208 = vpop.permute.xlu0 %2207
    %2213 = vrot.lane.b32.xlu0 %v2187, 96
    %v2214 = vpop.permute.xlu0 %2213
    %2215 = vrot.lane.b32.xlu0 %v2192, 96
    %v2216 = vpop.permute.xlu0 %2215
    %v2219 = vsel %vm172, %v1944, %v2198
    %v2220 = vsel %vm172, %v1949, %v2200
    %v2221 = vsel %vm1373, %v2219, %v2206
    %v2222 = vsel %vm1373, %v2220, %v2208
    %v2223 = vsel %vm1376, %v2221, %v2214
    %v2224 = vsel %vm1376, %v2222, %v2216
    %v2225 = vld [vmem:[#allocation10] sm:$0xff]
    %v2226 = vld [vmem:[#allocation10 + $0x8] sm:$0xff]
    %v2227 = vld [vmem:[#allocation10 + $0x10] sm:$0xff]
    %v2228 = vld [vmem:[#allocation10 + $0x18] sm:$0xff]
    %v2229 = vld [vmem:[#allocation10 + $0x20] sm:$0xff]
    %v2230 = vld [vmem:[#allocation10 + $0x28] sm:$0xff]
    %v2231 = vld [vmem:[#allocation10 + $0x30] sm:$0xff]
    %v2232 = vld [vmem:[#allocation10 + $0x38] sm:$0xff]
    %v2233 = vld [vmem:[#allocation10 + $0x40] sm:$0xff]
    %v2234 = vld [vmem:[#allocation10 + $0x48] sm:$0xff]
    %v2235 = vld [vmem:[#allocation10 + $0x50] sm:$0xff]
    %v2236 = vld [vmem:[#allocation10 + $0x58] sm:$0xff]
    %v2237 = vld [vmem:[#allocation10 + $0x60] sm:$0xff]
    %v2238 = vld [vmem:[#allocation10 + $0x68] sm:$0xff]
    %v2239 = vld [vmem:[#allocation10 + $0x70] sm:$0xff]
    %v2240 = vld [vmem:[#allocation10 + $0x78] sm:$0xff]
    %2241 = vmatprep.subr.mxu0 0.0
    %2242 = vmatpush1.msra.mxu0 %v2225
    %2243 = vmatprep.subr.mxu0 0.0
    %2244 = vmatpush1.msra.mxu0 %v2226
    %2245 = vmatprep.subr.mxu0 0.0
    %2246 = vmatpush1.msra.mxu0 %v2227
    %2247 = vmatprep.subr.mxu0 0.0
    %2248 = vmatpush1.msra.mxu0 %v2228
    %2249 = vmatprep.subr.mxu0 0.0
    %2250 = vmatpush1.msra.mxu0 %v2229
    %2251 = vmatprep.subr.mxu0 0.0
    %2252 = vmatpush1.msra.mxu0 %v2230
    %2253 = vmatprep.subr.mxu0 0.0
    %2254 = vmatpush1.msra.mxu0 %v2231
    %2255 = vmatprep.subr.mxu0 0.0
    %2256 = vmatpush1.msra.mxu0 %v2232
    %2257 = vmatprep.subr.mxu0 0.0
    %2258 = vmatpush1.msra.mxu0 %v2233
    %2259 = vmatprep.subr.mxu0 0.0
    %2260 = vmatpush1.msra.mxu0 %v2234
    %2261 = vmatprep.subr.mxu0 0.0
    %2262 = vmatpush1.msra.mxu0 %v2235
    %2263 = vmatprep.subr.mxu0 0.0
    %2264 = vmatpush1.msra.mxu0 %v2236
    %2265 = vmatprep.subr.mxu0 0.0
    %2266 = vmatpush1.msra.mxu0 %v2237
    %2267 = vmatprep.subr.mxu0 0.0
    %2268 = vmatpush1.msra.mxu0 %v2238
    %2269 = vmatprep.subr.mxu0 0.0
    %2270 = vmatpush1.msra.mxu0 %v2239
    %2271 = vmatprep.subr.mxu0 0.0
    %2272 = vmatpush1.msra.mxu0 %v2240
    %2273 = vmatprep.subr.mxu0 0.0
    %2274 = vmatpush1.msra.mxu0 0.0
    %2275 = vmatprep.subr.mxu0 0.0
    %2276 = vmatpush1.msra.mxu0 0.0
    %2277 = vmatprep.subr.mxu0 0.0
    %2278 = vmatpush1.msra.mxu0 0.0
    %2279 = vmatprep.subr.mxu0 0.0
    %2280 = vmatpush1.msra.mxu0 0.0
    %2281 = vmatprep.subr.mxu0 0.0
    %2282 = vmatpush1.msra.mxu0 0.0
    %2283 = vmatprep.subr.mxu0 0.0
    %2284 = vmatpush1.msra.mxu0 0.0
    %2285 = vmatprep.subr.mxu0 0.0
    %2286 = vmatpush1.msra.mxu0 0.0
    %2287 = vmatprep.subr.mxu0 0.0
    %2288 = vmatpush1.msra.mxu0 0.0
    %2289 = vmatprep.subr.mxu0 0.0
    %2290 = vmatpush1.msra.mxu0 0.0
    %2291 = vmatprep.subr.mxu0 0.0
    %2292 = vmatpush1.msra.mxu0 0.0
    %2293 = vmatprep.subr.mxu0 0.0
    %2294 = vmatpush1.msra.mxu0 0.0
    %2295 = vmatprep.subr.mxu0 0.0
    %2296 = vmatpush1.msra.mxu0 0.0
    %2297 = vmatprep.subr.mxu0 0.0
    %2298 = vmatpush1.msra.mxu0 0.0
    %2299 = vmatprep.subr.mxu0 0.0
    %2300 = vmatpush1.msra.mxu0 0.0
    %2301 = vmatprep.subr.mxu0 0.0
    %2302 = vmatpush1.msra.mxu0 0.0
    %2303 = vmatprep.subr.mxu0 0.0
    %2304 = vmatpush1.msra.mxu0 0.0
    %2305 = vmatprep.mubr.f32.mxu0 0.0
    %2306 = vmatmul.mubr.f32.gmra.mrb[0].mxu0 %v1377
    %v2307 = vpop.f32.mrb[0].mxu0
    %v2308 = vadd.f32 0.0, %v2307
    %v2309 = vpop.f32.mrb[0].mxu0
    %2310 = vmatprep.mubr.f32.mxu0 0.0
    %2311 = vmatmul.mubr.f32.gmra.mrb[0].mxu0 %v1378
    %v2312 = vpop.f32.mrb[0].mxu0
    %v2313 = vadd.f32 0.0, %v2312
    %v2314 = vpop.f32.mrb[0].mxu0
    %2315 = vmatprep.mubr.f32.mxu0 0.0
    %2316 = vmatmul.mubr.f32.gmra.mrb[0].mxu0 %v2223
    %v2317 = vpop.f32.mrb[0].mxu0
    %v2318 = vadd.f32 0.0, %v2317
    %v2319 = vpop.f32.mrb[0].mxu0
    %2320 = vmatprep.mubr.f32.mxu0 0.0
    %2321 = vmatmul.mubr.f32.gmra.mrb[0].mxu0 %v2224
    %v2322 = vpop.f32.mrb[0].mxu0
    %v2323 = vadd.f32 0.0, %v2322
    %v2324 = vpop.f32.mrb[0].mxu0
    %2325 = vdwg.mxu0
    %v2326 = vadd.f32 %v252, %v2308
    %v2327 = vadd.f32 %v257, %v2313
    %v2328 = vadd.f32 %v262, %v2318
    %v2329 = vadd.f32 %v267, %v2323
    %v2330 = vld [vmem:[%s7] sm:$0x1]
    %v2331 = vlaneseq
    %v2332 = vshrl.u32 %v2331, 7
    %v2333 = vsub.s32 0, %v2332
    %v2334 = vrot.slane %v2330, %v2333
    %v2335 = vmul.f32 %v2326, %v2334
    %v2336 = vmul.f32 %v2327, %v2334
    %v2337 = vmul.f32 %v2328, %v2334
    %v2338 = vmul.f32 %v2329, %v2334
    %v2339 = vld [vmem:[%s8] sm:$0x1]
    %v2340 = vlaneseq
    %v2341 = vshrl.u32 %v2340, 7
    %v2342 = vsub.s32 0, %v2341
    %v2343 = vrot.slane %v2339, %v2342
    %v2344 = vadd.f32 %v2335, %v2343
    %v2345 = vadd.f32 %v2336, %v2343
    %v2346 = vadd.f32 %v2337, %v2343
    %v2347 = vadd.f32 %v2338, %v2343
    %v2348 = vld [vmem:[#allocation11] sm:$0xff]
    %v2349 = vld [vmem:[#allocation11 + $0x8] sm:$0xff]
    %v2350 = vld [vmem:[#allocation11 + $0x10] sm:$0xff]
    %v2351 = vld [vmem:[#allocation11 + $0x18] sm:$0xff]
    %v2352 = vld [vmem:[#allocation11 + $0x20] sm:$0xff]
    %v2353 = vld [vmem:[#allocation11 + $0x28] sm:$0xff]
    %v2354 = vld [vmem:[#allocation11 + $0x30] sm:$0xff]
    %v2355 = vld [vmem:[#allocation11 + $0x38] sm:$0xff]
    %v2356 = vld [vmem:[#allocation11 + $0x40] sm:$0xff]
    %v2357 = vld [vmem:[#allocation11 + $0x48] sm:$0xff]
    %v2358 = vld [vmem:[#allocation11 + $0x50] sm:$0xff]
    %v2359 = vld [vmem:[#allocation11 + $0x58] sm:$0xff]
    %v2360 = vld [vmem:[#allocation11 + $0x60] sm:$0xff]
    %v2361 = vld [vmem:[#allocation11 + $0x68] sm:$0xff]
    %v2362 = vld [vmem:[#allocation11 + $0x70] sm:$0xff]
    %v2363 = vld [vmem:[#allocation11 + $0x78] sm:$0xff]
    %v2364 = vld [vmem:[#allocation11 + $0x80] sm:$0xff]
    %v2365 = vld [vmem:[#allocation11 + $0x88] sm:$0xff]
    %v2366 = vld [vmem:[#allocation11 + $0x90] sm:$0xff]
    %v2367 = vld [vmem:[#allocation11 + $0x98] sm:$0xff]
    %v2368 = vld [vmem:[#allocation11 + $0xa0] sm:$0xff]
    %v2369 = vld [vmem:[#allocation11 + $0xa8] sm:$0xff]
    %v2370 = vld [vmem:[#allocation11 + $0xb0] sm:$0xff]
    %v2371 = vld [vmem:[#allocation11 + $0xb8] sm:$0xff]
    %v2372 = vld [vmem:[#allocation11 + $0xc0] sm:$0xff]
    %v2373 = vld [vmem:[#allocation11 + $0xc8] sm:$0xff]
    %v2374 = vld [vmem:[#allocation11 + $0xd0] sm:$0xff]
    %v2375 = vld [vmem:[#allocation11 + $0xd8] sm:$0xff]
    %v2376 = vld [vmem:[#allocation11 + $0xe0] sm:$0xff]
    %v2377 = vld [vmem:[#allocation11 + $0xe8] sm:$0xff]
    %v2378 = vld [vmem:[#allocation11 + $0xf0] sm:$0xff]
    %v2379 = vld [vmem:[#allocation11 + $0xf8] sm:$0xff]
    %2380 = vmatprep.subr.mxu0 %v2349
    %2381 = vmatpush1.msra.mxu0 %v2348
    %2382 = vmatprep.subr.mxu0 %v2351
    %2383 = vmatpush1.msra.mxu0 %v2350
    %2384 = vmatprep.subr.mxu0 %v2353
    %2385 = vmatpush1.msra.mxu0 %v2352
    %2386 = vmatprep.subr.mxu0 %v2355
    %2387 = vmatpush1.msra.mxu0 %v2354
    %2388 = vmatprep.subr.mxu0 %v2357
    %2389 = vmatpush1.msra.mxu0 %v2356
    %2390 = vmatprep.subr.mxu0 %v2359
    %2391 = vmatpush1.msra.mxu0 %v2358
    %2392 = vmatprep.subr.mxu0 %v2361
    %2393 = vmatpush1.msra.mxu0 %v2360
    %2394 = vmatprep.subr.mxu0 %v2363
    %2395 = vmatpush1.msra.mxu0 %v2362
    %2396 = vmatprep.subr.mxu0 %v2365
    %2397 = vmatpush1.msra.mxu0 %v2364
    %2398 = vmatprep.subr.mxu0 %v2367
    %2399 = vmatpush1.msra.mxu0 %v2366
    %2400 = vmatprep.subr.mxu0 %v2369
    %2401 = vmatpush1.msra.mxu0 %v2368
    %2402 = vmatprep.subr.mxu0 %v2371
    %2403 = vmatpush1.msra.mxu0 %v2370
    %2404 = vmatprep.subr.mxu0 %v2373
    %2405 = vmatpush1.msra.mxu0 %v2372
    %2406 = vmatprep.subr.mxu0 %v2375
    %2407 = vmatpush1.msra.mxu0 %v2374
    %2408 = vmatprep.subr.mxu0 %v2377
    %2409 = vmatpush1.msra.mxu0 %v2376
    %2410 = vmatprep.subr.mxu0 %v2379
    %2411 = vmatpush1.msra.mxu0 %v2378
    %2412 = vmatprep.subr.mxu0 0.0
    %2413 = vmatpush1.msra.mxu0 0.0
    %2414 = vmatprep.subr.mxu0 0.0
    %2415 = vmatpush1.msra.mxu0 0.0
    %2416 = vmatprep.subr.mxu0 0.0
    %2417 = vmatpush1.msra.mxu0 0.0
    %2418 = vmatprep.subr.mxu0 0.0
    %2419 = vmatpush1.msra.mxu0 0.0
    %2420 = vmatprep.subr.mxu0 0.0
    %2421 = vmatpush1.msra.mxu0 0.0
    %2422 = vmatprep.subr.mxu0 0.0
    %2423 = vmatpush1.msra.mxu0 0.0
    %2424 = vmatprep.subr.mxu0 0.0
    %2425 = vmatpush1.msra.mxu0 0.0
    %2426 = vmatprep.subr.mxu0 0.0
    %2427 = vmatpush1.msra.mxu0 0.0
    %2428 = vmatprep.subr.mxu0 0.0
    %2429 = vmatpush1.msra.mxu0 0.0
    %2430 = vmatprep.subr.mxu0 0.0
    %2431 = vmatpush1.msra.mxu0 0.0
    %2432 = vmatprep.subr.mxu0 0.0
    %2433 = vmatpush1.msra.mxu0 0.0
    %2434 = vmatprep.subr.mxu0 0.0
    %2435 = vmatpush1.msra.mxu0 0.0
    %2436 = vmatprep.subr.mxu0 0.0
    %2437 = vmatpush1.msra.mxu0 0.0
    %2438 = vmatprep.subr.mxu0 0.0
    %2439 = vmatpush1.msra.mxu0 0.0
    %2440 = vmatprep.subr.mxu0 0.0
    %2441 = vmatpush1.msra.mxu0 0.0
    %2442 = vmatprep.subr.mxu0 0.0
    %2443 = vmatpush1.msra.mxu0 0.0
    %2444 = vmatprep.mubr.f32.mxu0 0.0
    %2445 = vmatmul.mubr.f32.gmra.mrb[0].mxu0 %v2344
    %v2446 = vpop.f32.mrb[0].mxu0
    %v2447 = vadd.f32 0.0, %v2446
    %v2448 = vpop.f32.mrb[0].mxu0
    %v2449 = vadd.f32 0.0, %v2448
    %2450 = vmatprep.mubr.f32.mxu0 0.0
    %2451 = vmatmul.mubr.f32.gmra.mrb[0].mxu0 %v2345
    %v2452 = vpop.f32.mrb[0].mxu0
    %v2453 = vadd.f32 0.0, %v2452
    %v2454 = vpop.f32.mrb[0].mxu0
    %v2455 = vadd.f32 0.0, %v2454
    %2456 = vmatprep.mubr.f32.mxu0 0.0
    %2457 = vmatmul.mubr.f32.gmra.mrb[0].mxu0 %v2346
    %v2458 = vpop.f32.mrb[0].mxu0
    %v2459 = vadd.f32 0.0, %v2458
    %v2460 = vpop.f32.mrb[0].mxu0
    %v2461 = vadd.f32 0.0, %v2460
    %2462 = vmatprep.mubr.f32.mxu0 0.0
    %2463 = vmatmul.mubr.f32.gmra.mrb[0].mxu0 %v2347
    %v2464 = vpop.f32.mrb[0].mxu0
    %v2465 = vadd.f32 0.0, %v2464
    %v2466 = vpop.f32.mrb[0].mxu0
    %v2467 = vadd.f32 0.0, %v2466
    %2468 = vdwg.mxu0
    %v2469 = vmul.f32 %v2449, 0.5
    %v2470 = vmul.f32 %v2455, 0.5
    %v2471 = vmul.f32 %v2461, 0.5
    %v2472 = vmul.f32 %v2467, 0.5
    %v2473 = vmul.f32 %v2449, 0.044715
    %v2474 = vmul.f32 %v2455, 0.044715
    %v2475 = vmul.f32 %v2461, 0.044715
    %v2476 = vmul.f32 %v2467, 0.044715
    %v2477 = vmul.f32 %v2473, %v2449
    %v2478 = vmul.f32 %v2474, %v2455
    %v2479 = vmul.f32 %v2475, %v2461
    %v2480 = vmul.f32 %v2476, %v2467
    %v2481 = vmul.f32 %v2477, %v2449
    %v2482 = vmul.f32 %v2478, %v2455
    %v2483 = vmul.f32 %v2479, %v2461
    %v2484 = vmul.f32 %v2480, %v2467
    %v2485 = vadd.f32 %v2449, %v2481
    %v2486 = vadd.f32 %v2455, %v2482
    %v2487 = vadd.f32 %v2461, %v2483
    %v2488 = vadd.f32 %v2467, %v2484
    %v2489 = vmul.f32 %v2485, 0.7978846
    %v2490 = vmul.f32 %v2486, 0.7978846
    %v2491 = vmul.f32 %v2487, 0.7978846
    %v2492 = vmul.f32 %v2488, 0.7978846
    %v2493 = vtanh.pop %v2489
    %v2494 = vtanh.pop %v2490
    %v2495 = vtanh.pop %v2491
    %v2496 = vtanh.pop %v2492
    %v2497 = vadd.f32 %v2493, 1.0
    %v2498 = vadd.f32 %v2494, 1.0
    %v2499 = vadd.f32 %v2495, 1.0
    %v2500 = vadd.f32 %v2496, 1.0
    %v2501 = vmul.f32 %v2469, %v2497
    %v2502 = vmul.f32 %v2470, %v2498
    %v2503 = vmul.f32 %v2471, %v2499
    %v2504 = vmul.f32 %v2472, %v2500
    %v2505 = vmul.f32 %v2447, %v2501
    %v2506 = vmul.f32 %v2453, %v2502
    %v2507 = vmul.f32 %v2459, %v2503
    %v2508 = vmul.f32 %v2465, %v2504
    %v2509 = vld [vmem:[#allocation13] sm:$0xff]
    %v2510 = vld [vmem:[#allocation13 + $0x8] sm:$0xff]
    %v2511 = vld [vmem:[#allocation13 + $0x10] sm:$0xff]
    %v2512 = vld [vmem:[#allocation13 + $0x18] sm:$0xff]
    %v2513 = vld [vmem:[#allocation13 + $0x20] sm:$0xff]
    %v2514 = vld [vmem:[#allocation13 + $0x28] sm:$0xff]
    %v2515 = vld [vmem:[#allocation13 + $0x30] sm:$0xff]
    %v2516 = vld [vmem:[#allocation13 + $0x38] sm:$0xff]
    %v2517 = vld [vmem:[#allocation13 + $0x40] sm:$0xff]
    %v2518 = vld [vmem:[#allocation13 + $0x48] sm:$0xff]
    %v2519 = vld [vmem:[#allocation13 + $0x50] sm:$0xff]
    %v2520 = vld [vmem:[#allocation13 + $0x58] sm:$0xff]
    %v2521 = vld [vmem:[#allocation13 + $0x60] sm:$0xff]
    %v2522 = vld [vmem:[#allocation13 + $0x68] sm:$0xff]
    %v2523 = vld [vmem:[#allocation13 + $0x70] sm:$0xff]
    %v2524 = vld [vmem:[#allocation13 + $0x78] sm:$0xff]
    %2525 = vmatprep.subr.mxu0 0.0
    %2526 = vmatpush1.msra.mxu0 %v2509
    %2527 = vmatprep.subr.mxu0 0.0
    %2528 = vmatpush1.msra.mxu0 %v2510
    %2529 = vmatprep.subr.mxu0 0.0
    %2530 = vmatpush1.msra.mxu0 %v2511
    %2531 = vmatprep.subr.mxu0 0.0
    %2532 = vmatpush1.msra.mxu0 %v2512
    %2533 = vmatprep.subr.mxu0 0.0
    %2534 = vmatpush1.msra.mxu0 %v2513
    %2535 = vmatprep.subr.mxu0 0.0
    %2536 = vmatpush1.msra.mxu0 %v2514
    %2537 = vmatprep.subr.mxu0 0.0
    %2538 = vmatpush1.msra.mxu0 %v2515
    %2539 = vmatprep.subr.mxu0 0.0
    %2540 = vmatpush1.msra.mxu0 %v2516
    %2541 = vmatprep.subr.mxu0 0.0
    %2542 = vmatpush1.msra.mxu0 %v2517
    %2543 = vmatprep.subr.mxu0 0.0
    %2544 = vmatpush1.msra.mxu0 %v2518
    %2545 = vmatprep.subr.mxu0 0.0
    %2546 = vmatpush1.msra.mxu0 %v2519
    %2547 = vmatprep.subr.mxu0 0.0
    %2548 = vmatpush1.msra.mxu0 %v2520
    %2549 = vmatprep.subr.mxu0 0.0
    %2550 = vmatpush1.msra.mxu0 %v2521
    %2551 = vmatprep.subr.mxu0 0.0
    %2552 = vmatpush1.msra.mxu0 %v2522
    %2553 = vmatprep.subr.mxu0 0.0
    %2554 = vmatpush1.msra.mxu0 %v2523
    %2555 = vmatprep.subr.mxu0 0.0
    %2556 = vmatpush1.msra.mxu0 %v2524
    %2557 = vmatprep.subr.mxu0 0.0
    %2558 = vmatpush1.msra.mxu0 0.0
    %2559 = vmatprep.subr.mxu0 0.0
    %2560 = vmatpush1.msra.mxu0 0.0
    %2561 = vmatprep.subr.mxu0 0.0
    %2562 = vmatpush1.msra.mxu0 0.0
    %2563 = vmatprep.subr.mxu0 0.0
    %2564 = vmatpush1.msra.mxu0 0.0
    %2565 = vmatprep.subr.mxu0 0.0
    %2566 = vmatpush1.msra.mxu0 0.0
    %2567 = vmatprep.subr.mxu0 0.0
    %2568 = vmatpush1.msra.mxu0 0.0
    %2569 = vmatprep.subr.mxu0 0.0
    %2570 = vmatpush1.msra.mxu0 0.0
    %2571 = vmatprep.subr.mxu0 0.0
    %2572 = vmatpush1.msra.mxu0 0.0
    %2573 = vmatprep.subr.mxu0 0.0
    %2574 = vmatpush1.msra.mxu0 0.0
    %2575 = vmatprep.subr.mxu0 0.0
    %2576 = vmatpush1.msra.mxu0 0.0
    %2577 = vmatprep.subr.mxu0 0.0
    %2578 = vmatpush1.msra.mxu0 0.0
    %2579 = vmatprep.subr.mxu0 0.0
    %2580 = vmatpush1.msra.mxu0 0.0
    %2581 = vmatprep.subr.mxu0 0.0
    %2582 = vmatpush1.msra.mxu0 0.0
    %2583 = vmatprep.subr.mxu0 0.0
    %2584 = vmatpush1.msra.mxu0 0.0
    %2585 = vmatprep.subr.mxu0 0.0
    %2586 = vmatpush1.msra.mxu0 0.0
    %2587 = vmatprep.subr.mxu0 0.0
    %2588 = vmatpush1.msra.mxu0 0.0
    %2589 = vmatprep.mubr.f32.mxu0 0.0
    %2590 = vmatmul.mubr.f32.gmra.mrb[0].mxu0 %v2505
    %v2591 = vpop.f32.mrb[0].mxu0
    %v2592 = vadd.f32 0.0, %v2591
    %v2593 = vpop.f32.mrb[0].mxu0
    %2594 = vmatprep.mubr.f32.mxu0 0.0
    %2595 = vmatmul.mubr.f32.gmra.mrb[0].mxu0 %v2506
    %v2596 = vpop.f32.mrb[0].mxu0
    %v2597 = vadd.f32 0.0, %v2596
    %v2598 = vpop.f32.mrb[0].mxu0
    %2599 = vmatprep.mubr.f32.mxu0 0.0
    %2600 = vmatmul.mubr.f32.gmra.mrb[0].mxu0 %v2507
    %v2601 = vpop.f32.mrb[0].mxu0
    %v2602 = vadd.f32 0.0, %v2601
    %v2603 = vpop.f32.mrb[0].mxu0
    %2604 = vmatprep.mubr.f32.mxu0 0.0
    %2605 = vmatmul.mubr.f32.gmra.mrb[0].mxu0 %v2508
    %v2606 = vpop.f32.mrb[0].mxu0
    %v2607 = vadd.f32 0.0, %v2606
    %v2608 = vpop.f32.mrb[0].mxu0
    %2609 = vdwg.mxu0
    %v2610 = vadd.f32 %v2344, %v2592
    %v2611 = vadd.f32 %v2345, %v2597
    %v2612 = vadd.f32 %v2346, %v2602
    %v2613 = vadd.f32 %v2347, %v2607
    %v2614 = vld [vmem:[%s4 + $0x1] sm:$0x1]
    %v2615 = vmul.f32 %v2610, %v2610
    %v2616 = vmul.f32 %v2611, %v2611
    %v2617 = vmul.f32 %v2612, %v2612
    %v2618 = vmul.f32 %v2613, %v2613
    %2619 = vadd.xlane.f32.xlu0 %v2615
    %v2620 = vpop.xlane.xlu0 %2619
    %2621 = vadd.xlane.f32.xlu0 %v2616
    %v2622 = vpop.xlane.xlu0 %2621
    %2623 = vadd.xlane.f32.xlu0 %v2617
    %v2624 = vpop.xlane.xlu0 %2623
    %2625 = vadd.xlane.f32.xlu0 %v2618
    %v2626 = vpop.xlane.xlu0 %2625
    %v2627 = vmul.f32 %v2620, %v283
    %v2628 = vmul.f32 %v2622, %v283
    %v2629 = vmul.f32 %v2624, %v283
    %v2630 = vmul.f32 %v2626, %v283
    %v2631 = vadd.f32 %v2627, 1e-05
    %v2632 = vadd.f32 %v2628, 1e-05
    %v2633 = vadd.f32 %v2629, 1e-05
    %v2634 = vadd.f32 %v2630, 1e-05
    %v2635 = vrsqrt.pop %v2631
    %v2636 = vrsqrt.pop %v2632
    %v2637 = vrsqrt.pop %v2633
    %v2638 = vrsqrt.pop %v2634
    %v2639 = vmul.f32 %v2610, %v2635
    %v2640 = vmul.f32 %v2611, %v2636
    %v2641 = vmul.f32 %v2612, %v2637
    %v2642 = vmul.f32 %v2613, %v2638
    %v2643 = vlaneseq
    %v2644 = vshrl.u32 %v2643, 7
    %v2645 = vsub.s32 0, %v2644
    %v2646 = vrot.slane %v2614, %v2645
    %v2647 = vmul.f32 %v2639, %v2646
    %v2648 = vmul.f32 %v2640, %v2646
    %v2649 = vmul.f32 %v2641, %v2646
    %v2650 = vmul.f32 %v2642, %v2646
    %s2651 = scalar_lea.vmem [#allocation8], 384
    %v2652 = vld [vmem:[%s2651] sm:$0xff]
    %v2653 = vld [vmem:[%s2651 + $0x8] sm:$0xff]
    %v2654 = vld [vmem:[%s2651 + $0x10] sm:$0xff]
    %v2655 = vld [vmem:[%s2651 + $0x18] sm:$0xff]
    %v2656 = vld [vmem:[%s2651 + $0x20] sm:$0xff]
    %v2657 = vld [vmem:[%s2651 + $0x28] sm:$0xff]
    %v2658 = vld [vmem:[%s2651 + $0x30] sm:$0xff]
    %v2659 = vld [vmem:[%s2651 + $0x38] sm:$0xff]
    %v2660 = vld [vmem:[%s2651 + $0x40] sm:$0xff]
    %v2661 = vld [vmem:[%s2651 + $0x48] sm:$0xff]
    %v2662 = vld [vmem:[%s2651 + $0x50] sm:$0xff]
    %v2663 = vld [vmem:[%s2651 + $0x58] sm:$0xff]
    %v2664 = vld [vmem:[%s2651 + $0x60] sm:$0xff]
    %v2665 = vld [vmem:[%s2651 + $0x68] sm:$0xff]
    %v2666 = vld [vmem:[%s2651 + $0x70] sm:$0xff]
    %v2667 = vld [vmem:[%s2651 + $0x78] sm:$0xff]
    %v2668 = vld [vmem:[%s2651 + $0x80] sm:$0xff]
    %v2669 = vld [vmem:[%s2651 + $0x88] sm:$0xff]
    %v2670 = vld [vmem:[%s2651 + $0x90] sm:$0xff]
    %v2671 = vld [vmem:[%s2651 + $0x98] sm:$0xff]
    %v2672 = vld [vmem:[%s2651 + $0xa0] sm:$0xff]
    %v2673 = vld [vmem:[%s2651 + $0xa8] sm:$0xff]
    %v2674 = vld [vmem:[%s2651 + $0xb0] sm:$0xff]
    %v2675 = vld [vmem:[%s2651 + $0xb8] sm:$0xff]
    %v2676 = vld [vmem:[%s2651 + $0xc0] sm:$0xff]
    %v2677 = vld [vmem:[%s2651 + $0xc8] sm:$0xff]
    %v2678 = vld [vmem:[%s2651 + $0xd0] sm:$0xff]
    %v2679 = vld [vmem:[%s2651 + $0xd8] sm:$0xff]
    %v2680 = vld [vmem:[%s2651 + $0xe0] sm:$0xff]
    %v2681 = vld [vmem:[%s2651 + $0xe8] sm:$0xff]
    %v2682 = vld [vmem:[%s2651 + $0xf0] sm:$0xff]
    %v2683 = vld [vmem:[%s2651 + $0xf8] sm:$0xff]
    %v2684 = vld [vmem:[%s2651 + $0x100] sm:$0xff]
    %v2685 = vld [vmem:[%s2651 + $0x108] sm:$0xff]
    %v2686 = vld [vmem:[%s2651 + $0x110] sm:$0xff]
    %v2687 = vld [vmem:[%s2651 + $0x118] sm:$0xff]
    %v2688 = vld [vmem:[%s2651 + $0x120] sm:$0xff]
    %v2689 = vld [vmem:[%s2651 + $0x128] sm:$0xff]
    %v2690 = vld [vmem:[%s2651 + $0x130] sm:$0xff]
    %v2691 = vld [vmem:[%s2651 + $0x138] sm:$0xff]
    %v2692 = vld [vmem:[%s2651 + $0x140] sm:$0xff]
    %v2693 = vld [vmem:[%s2651 + $0x148] sm:$0xff]
    %v2694 = vld [vmem:[%s2651 + $0x150] sm:$0xff]
    %v2695 = vld [vmem:[%s2651 + $0x158] sm:$0xff]
    %v2696 = vld [vmem:[%s2651 + $0x160] sm:$0xff]
    %v2697 = vld [vmem:[%s2651 + $0x168] sm:$0xff]
    %v2698 = vld [vmem:[%s2651 + $0x170] sm:$0xff]
    %v2699 = vld [vmem:[%s2651 + $0x178] sm:$0xff]
    %2700 = vmatprep.subr.mxu0 %v2653
    %2701 = vmatpush1.msra.mxu0 %v2652
    %2702 = vmatprep.subr.mxu0 %v2656
    %2703 = vmatpush1.msra.mxu0 %v2655
    %2704 = vmatprep.subr.mxu0 %v2659
    %2705 = vmatpush1.msra.mxu0 %v2658
    %2706 = vmatprep.subr.mxu0 %v2662
    %2707 = vmatpush1.msra.mxu0 %v2661
    %2708 = vmatprep.subr.mxu0 %v2665
    %2709 = vmatpush1.msra.mxu0 %v2664
    %2710 = vmatprep.subr.mxu0 %v2668
    %2711 = vmatpush1.msra.mxu0 %v2667
    %2712 = vmatprep.subr.mxu0 %v2671
    %2713 = vmatpush1.msra.mxu0 %v2670
    %2714 = vmatprep.subr.mxu0 %v2674
    %2715 = vmatpush1.msra.mxu0 %v2673
    %2716 = vmatprep.subr.mxu0 %v2677
    %2717 = vmatpush1.msra.mxu0 %v2676
    %2718 = vmatprep.subr.mxu0 %v2680
    %2719 = vmatpush1.msra.mxu0 %v2679
    %2720 = vmatprep.subr.mxu0 %v2683
    %2721 = vmatpush1.msra.mxu0 %v2682
    %2722 = vmatprep.subr.mxu0 %v2686
    %2723 = vmatpush1.msra.mxu0 %v2685
    %2724 = vmatprep.subr.mxu0 %v2689
    %2725 = vmatpush1.msra.mxu0 %v2688
    %2726 = vmatprep.subr.mxu0 %v2692
    %2727 = vmatpush1.msra.mxu0 %v2691
    %2728 = vmatprep.subr.mxu0 %v2695
    %2729 = vmatpush1.msra.mxu0 %v2694
    %2730 = vmatprep.subr.mxu0 %v2698
    %2731 = vmatpush1.msra.mxu0 %v2697
    %2732 = vmatprep.subr.mxu0 0.0
    %2733 = vmatpush1.msra.mxu0 0.0
    %2734 = vmatprep.subr.mxu0 0.0
    %2735 = vmatpush1.msra.mxu0 0.0
    %2736 = vmatprep.subr.mxu0 0.0
    %2737 = vmatpush1.msra.mxu0 0.0
    %2738 = vmatprep.subr.mxu0 0.0
    %2739 = vmatpush1.msra.mxu0 0.0
    %2740 = vmatprep.subr.mxu0 0.0
    %2741 = vmatpush1.msra.mxu0 0.0
    %2742 = vmatprep.subr.mxu0 0.0
    %2743 = vmatpush1.msra.mxu0 0.0
    %2744 = vmatprep.subr.mxu0 0.0
    %2745 = vmatpush1.msra.mxu0 0.0
    %2746 = vmatprep.subr.mxu0 0.0
    %2747 = vmatpush1.msra.mxu0 0.0
    %2748 = vmatprep.subr.mxu0 0.0
    %2749 = vmatpush1.msra.mxu0 0.0
    %2750 = vmatprep.subr.mxu0 0.0
    %2751 = vmatpush1.msra.mxu0 0.0
    %2752 = vmatprep.subr.mxu0 0.0
    %2753 = vmatpush1.msra.mxu0 0.0
    %2754 = vmatprep.subr.mxu0 0.0
    %2755 = vmatpush1.msra.mxu0 0.0
    %2756 = vmatprep.subr.mxu0 0.0
    %2757 = vmatpush1.msra.mxu0 0.0
    %2758 = vmatprep.subr.mxu0 0.0
    %2759 = vmatpush1.msra.mxu0 0.0
    %2760 = vmatprep.subr.mxu0 0.0
    %2761 = vmatpush1.msra.mxu0 0.0
    %2762 = vmatprep.subr.mxu0 0.0
    %2763 = vmatpush1.msra.mxu0 0.0
    %2764 = vmatprep.mubr.f32.mxu0 0.0
    %2765 = vmatmul.mubr.f32.gmra.mrb[0].mxu0 %v2647
    %v2766 = vpop.f32.mrb[0].mxu0
    %v2767 = vadd.f32 0.0, %v2766
    %v2768 = vpop.f32.mrb[0].mxu0
    %v2769 = vadd.f32 0.0, %v2768
    %2770 = vmatprep.mubr.f32.mxu0 0.0
    %2771 = vmatmul.mubr.f32.gmra.mrb[0].mxu0 %v2648
    %v2772 = vpop.f32.mrb[0].mxu0
    %v2773 = vadd.f32 0.0, %v2772
    %v2774 = vpop.f32.mrb[0].mxu0
    %v2775 = vadd.f32 0.0, %v2774
    %2776 = vmatprep.mubr.f32.mxu0 0.0
    %2777 = vmatmul.mubr.f32.gmra.mrb[0].mxu0 %v2649
    %v2778 = vpop.f32.mrb[0].mxu0
    %v2779 = vadd.f32 0.0, %v2778
    %v2780 = vpop.f32.mrb[0].mxu0
    %v2781 = vadd.f32 0.0, %v2780
    %2782 = vmatprep.mubr.f32.mxu0 0.0
    %2783 = vmatmul.mubr.f32.gmra.mrb[0].mxu0 %v2650
    %v2784 = vpop.f32.mrb[0].mxu0
    %v2785 = vadd.f32 0.0, %v2784
    %v2786 = vpop.f32.mrb[0].mxu0
    %v2787 = vadd.f32 0.0, %v2786
    %2788 = vdwg.mxu0
    %2789 = vmatprep.subr.mxu0 0.0
    %2790 = vmatpush1.msra.mxu0 %v2654
    %2791 = vmatprep.subr.mxu0 0.0
    %2792 = vmatpush1.msra.mxu0 %v2657
    %2793 = vmatprep.subr.mxu0 0.0
    %2794 = vmatpush1.msra.mxu0 %v2660
    %2795 = vmatprep.subr.mxu0 0.0
    %2796 = vmatpush1.msra.mxu0 %v2663
    %2797 = vmatprep.subr.mxu0 0.0
    %2798 = vmatpush1.msra.mxu0 %v2666
    %2799 = vmatprep.subr.mxu0 0.0
    %2800 = vmatpush1.msra.mxu0 %v2669
    %2801 = vmatprep.subr.mxu0 0.0
    %2802 = vmatpush1.msra.mxu0 %v2672
    %2803 = vmatprep.subr.mxu0 0.0
    %2804 = vmatpush1.msra.mxu0 %v2675
    %2805 = vmatprep.subr.mxu0 0.0
    %2806 = vmatpush1.msra.mxu0 %v2678
    %2807 = vmatprep.subr.mxu0 0.0
    %2808 = vmatpush1.msra.mxu0 %v2681
    %2809 = vmatprep.subr.mxu0 0.0
    %2810 = vmatpush1.msra.mxu0 %v2684
    %2811 = vmatprep.subr.mxu0 0.0
    %2812 = vmatpush1.msra.mxu0 %v2687
    %2813 = vmatprep.subr.mxu0 0.0
    %2814 = vmatpush1.msra.mxu0 %v2690
    %2815 = vmatprep.subr.mxu0 0.0
    %2816 = vmatpush1.msra.mxu0 %v2693
    %2817 = vmatprep.subr.mxu0 0.0
    %2818 = vmatpush1.msra.mxu0 %v2696
    %2819 = vmatprep.subr.mxu0 0.0
    %2820 = vmatpush1.msra.mxu0 %v2699
    %2821 = vmatprep.subr.mxu0 0.0
    %2822 = vmatpush1.msra.mxu0 0.0
    %2823 = vmatprep.subr.mxu0 0.0
    %2824 = vmatpush1.msra.mxu0 0.0
    %2825 = vmatprep.subr.mxu0 0.0
    %2826 = vmatpush1.msra.mxu0 0.0
    %2827 = vmatprep.subr.mxu0 0.0
    %2828 = vmatpush1.msra.mxu0 0.0
    %2829 = vmatprep.subr.mxu0 0.0
    %2830 = vmatpush1.msra.mxu0 0.0
    %2831 = vmatprep.subr.mxu0 0.0
    %2832 = vmatpush1.msra.mxu0 0.0
    %2833 = vmatprep.subr.mxu0 0.0
    %2834 = vmatpush1.msra.mxu0 0.0
    %2835 = vmatprep.subr.mxu0 0.0
    %2836 = vmatpush1.msra.mxu0 0.0
    %2837 = vmatprep.subr.mxu0 0.0
    %2838 = vmatpush1.msra.mxu0 0.0
    %2839 = vmatprep.subr.mxu0 0.0
    %2840 = vmatpush1.msra.mxu0 0.0
    %2841 = vmatprep.subr.mxu0 0.0
    %2842 = vmatpush1.msra.mxu0 0.0
    %2843 = vmatprep.subr.mxu0 0.0
    %2844 = vmatpush1.msra.mxu0 0.0
    %2845 = vmatprep.subr.mxu0 0.0
    %2846 = vmatpush1.msra.mxu0 0.0
    %2847 = vmatprep.subr.mxu0 0.0
    %2848 = vmatpush1.msra.mxu0 0.0
    %2849 = vmatprep.subr.mxu0 0.0
    %2850 = vmatpush1.msra.mxu0 0.0
    %2851 = vmatprep.subr.mxu0 0.0
    %2852 = vmatpush1.msra.mxu0 0.0
    %2853 = vmatprep.mubr.f32.mxu0 0.0
    %2854 = vmatmul.mubr.f32.gmra.mrb[0].mxu0 %v2647
    %v2855 = vpop.f32.mrb[0].mxu0
    %v2856 = vadd.f32 0.0, %v2855
    %v2857 = vpop.f32.mrb[0].mxu0
    %2858 = vmatprep.mubr.f32.mxu0 0.0
    %2859 = vmatmul.mubr.f32.gmra.mrb[0].mxu0 %v2648
    %v2860 = vpop.f32.mrb[0].mxu0
    %v2861 = vadd.f32 0.0, %v2860
    %v2862 = vpop.f32.mrb[0].mxu0
    %2863 = vmatprep.mubr.f32.mxu0 0.0
    %2864 = vmatmul.mubr.f32.gmra.mrb[0].mxu0 %v2649
    %v2865 = vpop.f32.mrb[0].mxu0
    %v2866 = vadd.f32 0.0, %v2865
    %v2867 = vpop.f32.mrb[0].mxu0
    %2868 = vmatprep.mubr.f32.mxu0 0.0
    %2869 = vmatmul.mubr.f32.gmra.mrb[0].mxu0 %v2650
    %v2870 = vpop.f32.mrb[0].mxu0
    %v2871 = vadd.f32 0.0, %v2870
    %v2872 = vpop.f32.mrb[0].mxu0
    %2873 = vdwg.mxu0
    %2876 = vrot.lane.b32.xlu0 %v2767, 96
    %v2877 = vpop.permute.xlu0 %2876
    %2878 = vrot.lane.b32.xlu0 %v2773, 96
    %v2879 = vpop.permute.xlu0 %2878
    %2880 = vrot.lane.b32.xlu0 %v2767, 64
    %v2881 = vpop.permute.xlu0 %2880
    %2882 = vrot.lane.b32.xlu0 %v2773, 64
    %v2883 = vpop.permute.xlu0 %2882
    %2884 = vrot.lane.b32.xlu0 %v2767, 32
    %v2885 = vpop.permute.xlu0 %2884
    %2886 = vrot.lane.b32.xlu0 %v2773, 32
    %v2887 = vpop.permute.xlu0 %2886
    %2890 = vrot.lane.b32.xlu0 %v2769, 96
    %v2891 = vpop.permute.xlu0 %2890
    %2892 = vrot.lane.b32.xlu0 %v2775, 96
    %v2893 = vpop.permute.xlu0 %2892
    %2894 = vrot.lane.b32.xlu0 %v2769, 64
    %v2895 = vpop.permute.xlu0 %2894
    %2896 = vrot.lane.b32.xlu0 %v2775, 64
    %v2897 = vpop.permute.xlu0 %2896
    %2898 = vrot.lane.b32.xlu0 %v2769, 32
    %v2899 = vpop.permute.xlu0 %2898
    %2900 = vrot.lane.b32.xlu0 %v2775, 32
    %v2901 = vpop.permute.xlu0 %2900
    %2904 = vrot.lane.b32.xlu0 %v2856, 96
    %v2905 = vpop.permute.xlu0 %2904
    %2906 = vrot.lane.b32.xlu0 %v2861, 96
    %v2907 = vpop.permute.xlu0 %2906
    %2910 = vrot.lane.b32.xlu0 %v2856, 64
    %v2911 = vpop.permute.xlu0 %2910
    %2912 = vrot.lane.b32.xlu0 %v2861, 64
    %v2913 = vpop.permute.xlu0 %2912
    %2916 = vrot.lane.b32.xlu0 %v2856, 32
    %v2917 = vpop.permute.xlu0 %2916
    %2918 = vrot.lane.b32.xlu0 %v2861, 32
    %v2919 = vpop.permute.xlu0 %2918
    %v2922 = vsel %vm172, %v2767, 0
    %v2924 = vsel %vm172, %v2773, 0
    %v2926 = vsel %vm172, %v2769, 0
    %v2928 = vsel %vm172, %v2775, 0
    %2930 = vmatprep.subr.mxu0 0.0
    %2931 = vmatpush1.xpose.msra.mxu0 %v2926
    %2932 = vmatprep.subr.mxu0 0.0
    %2933 = vmatpush1.xpose.msra.mxu0 %v2928
    %2934 = vmatprep.subr.mxu0 0.0
    %2935 = vmatpush1.xpose.msra.mxu0 0.0
    %2936 = vmatprep.subr.mxu0 0.0
    %2937 = vmatpush1.xpose.msra.mxu0 0.0
    %2938 = vmatprep.subr.mxu0 0.0
    %2939 = vmatpush1.xpose.msra.mxu0 0.0
    %2940 = vmatprep.subr.mxu0 0.0
    %2941 = vmatpush1.xpose.msra.mxu0 0.0
    %2942 = vmatprep.subr.mxu0 0.0
    %2943 = vmatpush1.xpose.msra.mxu0 0.0
    %2944 = vmatprep.subr.mxu0 0.0
    %2945 = vmatpush1.xpose.msra.mxu0 0.0
    %2946 = vmatprep.subr.mxu0 0.0
    %2947 = vmatpush1.xpose.msra.mxu0 0.0
    %2948 = vmatprep.subr.mxu0 0.0
    %2949 = vmatpush1.xpose.msra.mxu0 0.0
    %2950 = vmatprep.subr.mxu0 0.0
    %2951 = vmatpush1.xpose.msra.mxu0 0.0
    %2952 = vmatprep.subr.mxu0 0.0
    %2953 = vmatpush1.xpose.msra.mxu0 0.0
    %2954 = vmatprep.subr.mxu0 0.0
    %2955 = vmatpush1.xpose.msra.mxu0 0.0
    %2956 = vmatprep.subr.mxu0 0.0
    %2957 = vmatpush1.xpose.msra.mxu0 0.0
    %2958 = vmatprep.subr.mxu0 0.0
    %2959 = vmatpush1.xpose.msra.mxu0 0.0
    %2960 = vmatprep.subr.mxu0 0.0
    %2961 = vmatpush1.xpose.msra.mxu0 0.0
    %2962 = vmatprep.subr.mxu0 0.0
    %2963 = vmatpush1.xpose.msra.mxu0 0.0
    %2964 = vmatprep.subr.mxu0 0.0
    %2965 = vmatpush1.xpose.msra.mxu0 0.0
    %2966 = vmatprep.subr.mxu0 0.0
    %2967 = vmatpush1.xpose.msra.mxu0 0.0
    %2968 = vmatprep.subr.mxu0 0.0
    %2969 = vmatpush1.xpose.msra.mxu0 0.0
    %2970 = vmatprep.subr.mxu0 0.0
    %2971 = vmatpush1.xpose.msra.mxu0 0.0
    %2972 = vmatprep.subr.mxu0 0.0
    %2973 = vmatpush1.xpose.msra.mxu0 0.0
    %2974 = vmatprep.subr.mxu0 0.0
    %2975 = vmatpush1.xpose.msra.mxu0 0.0
    %2976 = vmatprep.subr.mxu0 0.0
    %2977 = vmatpush1.xpose.msra.mxu0 0.0
    %2978 = vmatprep.subr.mxu0 0.0
    %2979 = vmatpush1.xpose.msra.mxu0 0.0
    %2980 = vmatprep.subr.mxu0 0.0
    %2981 = vmatpush1.xpose.msra.mxu0 0.0
    %2982 = vmatprep.subr.mxu0 0.0
    %2983 = vmatpush1.xpose.msra.mxu0 0.0
    %2984 = vmatprep.subr.mxu0 0.0
    %2985 = vmatpush1.xpose.msra.mxu0 0.0
    %2986 = vmatprep.subr.mxu0 0.0
    %2987 = vmatpush1.xpose.msra.mxu0 0.0
    %2988 = vmatprep.subr.mxu0 0.0
    %2989 = vmatpush1.xpose.msra.mxu0 0.0
    %2990 = vmatprep.subr.mxu0 0.0
    %2991 = vmatpush1.xpose.msra.mxu0 0.0
    %2992 = vmatprep.subr.mxu0 0.0
    %2993 = vmatpush1.xpose.msra.mxu0 0.0
    %2994 = vmatprep.mubr.f32.mxu0 0.0
    %2995 = vmatmul.mubr.f32.gmra.mrb[0].mxu0 %v2922
    %v2996 = vpop.f32.mrb[0].mxu0
    %v2997 = vadd.f32 0.0, %v2996
    %v2998 = vpop.f32.mrb[0].mxu0
    %2999 = vmatprep.mubr.f32.mxu0 0.0
    %3000 = vmatmul.mubr.f32.gmra.mrb[0].mxu0 %v2924
    %v3001 = vpop.f32.mrb[0].mxu0
    %v3002 = vadd.f32 0.0, %v3001
    %v3003 = vpop.f32.mrb[0].mxu0
    %3004 = vdwg.mxu0
    %v3005 = vsel %vm172, %v2877, 0
    %v3007 = vsel %vm172, %v2879, 0
    %v3009 = vsel %vm172, %v2891, 0
    %v3011 = vsel %vm172, %v2893, 0
    %3013 = vmatprep.subr.mxu0 0.0
    %3014 = vmatpush1.xpose.msra.mxu0 %v3009
    %3015 = vmatprep.subr.mxu0 0.0
    %3016 = vmatpush1.xpose.msra.mxu0 %v3011
    %3017 = vmatprep.subr.mxu0 0.0
    %3018 = vmatpush1.xpose.msra.mxu0 0.0
    %3019 = vmatprep.subr.mxu0 0.0
    %3020 = vmatpush1.xpose.msra.mxu0 0.0
    %3021 = vmatprep.subr.mxu0 0.0
    %3022 = vmatpush1.xpose.msra.mxu0 0.0
    %3023 = vmatprep.subr.mxu0 0.0
    %3024 = vmatpush1.xpose.msra.mxu0 0.0
    %3025 = vmatprep.subr.mxu0 0.0
    %3026 = vmatpush1.xpose.msra.mxu0 0.0
    %3027 = vmatprep.subr.mxu0 0.0
    %3028 = vmatpush1.xpose.msra.mxu0 0.0
    %3029 = vmatprep.subr.mxu0 0.0
    %3030 = vmatpush1.xpose.msra.mxu0 0.0
    %3031 = vmatprep.subr.mxu0 0.0
    %3032 = vmatpush1.xpose.msra.mxu0 0.0
    %3033 = vmatprep.subr.mxu0 0.0
    %3034 = vmatpush1.xpose.msra.mxu0 0.0
    %3035 = vmatprep.subr.mxu0 0.0
    %3036 = vmatpush1.xpose.msra.mxu0 0.0
    %3037 = vmatprep.subr.mxu0 0.0
    %3038 = vmatpush1.xpose.msra.mxu0 0.0
    %3039 = vmatprep.subr.mxu0 0.0
    %3040 = vmatpush1.xpose.msra.mxu0 0.0
    %3041 = vmatprep.subr.mxu0 0.0
    %3042 = vmatpush1.xpose.msra.mxu0 0.0
    %3043 = vmatprep.subr.mxu0 0.0
    %3044 = vmatpush1.xpose.msra.mxu0 0.0
    %3045 = vmatprep.subr.mxu0 0.0
    %3046 = vmatpush1.xpose.msra.mxu0 0.0
    %3047 = vmatprep.subr.mxu0 0.0
    %3048 = vmatpush1.xpose.msra.mxu0 0.0
    %3049 = vmatprep.subr.mxu0 0.0
    %3050 = vmatpush1.xpose.msra.mxu0 0.0
    %3051 = vmatprep.subr.mxu0 0.0
    %3052 = vmatpush1.xpose.msra.mxu0 0.0
    %3053 = vmatprep.subr.mxu0 0.0
    %3054 = vmatpush1.xpose.msra.mxu0 0.0
    %3055 = vmatprep.subr.mxu0 0.0
    %3056 = vmatpush1.xpose.msra.mxu0 0.0
    %3057 = vmatprep.subr.mxu0 0.0
    %3058 = vmatpush1.xpose.msra.mxu0 0.0
    %3059 = vmatprep.subr.mxu0 0.0
    %3060 = vmatpush1.xpose.msra.mxu0 0.0
    %3061 = vmatprep.subr.mxu0 0.0
    %3062 = vmatpush1.xpose.msra.mxu0 0.0
    %3063 = vmatprep.subr.mxu0 0.0
    %3064 = vmatpush1.xpose.msra.mxu0 0.0
    %3065 = vmatprep.subr.mxu0 0.0
    %3066 = vmatpush1.xpose.msra.mxu0 0.0
    %3067 = vmatprep.subr.mxu0 0.0
    %3068 = vmatpush1.xpose.msra.mxu0 0.0
    %3069 = vmatprep.subr.mxu0 0.0
    %3070 = vmatpush1.xpose.msra.mxu0 0.0
    %3071 = vmatprep.subr.mxu0 0.0
    %3072 = vmatpush1.xpose.msra.mxu0 0.0
    %3073 = vmatprep.subr.mxu0 0.0
    %3074 = vmatpush1.xpose.msra.mxu0 0.0
    %3075 = vmatprep.subr.mxu0 0.0
    %3076 = vmatpush1.xpose.msra.mxu0 0.0
    %3077 = vmatprep.mubr.f32.mxu0 0.0
    %3078 = vmatmul.mubr.f32.gmra.mrb[0].mxu0 %v3005
    %v3079 = vpop.f32.mrb[0].mxu0
    %v3080 = vadd.f32 0.0, %v3079
    %v3081 = vpop.f32.mrb[0].mxu0
    %3082 = vmatprep.mubr.f32.mxu0 0.0
    %3083 = vmatmul.mubr.f32.gmra.mrb[0].mxu0 %v3007
    %v3084 = vpop.f32.mrb[0].mxu0
    %v3085 = vadd.f32 0.0, %v3084
    %v3086 = vpop.f32.mrb[0].mxu0
    %3087 = vdwg.mxu0
    %v3088 = vsel %vm172, %v2881, 0
    %v3090 = vsel %vm172, %v2883, 0
    %v3092 = vsel %vm172, %v2895, 0
    %v3094 = vsel %vm172, %v2897, 0
    %3096 = vmatprep.subr.mxu0 0.0
    %3097 = vmatpush1.xpose.msra.mxu0 %v3092
    %3098 = vmatprep.subr.mxu0 0.0
    %3099 = vmatpush1.xpose.msra.mxu0 %v3094
    %3100 = vmatprep.subr.mxu0 0.0
    %3101 = vmatpush1.xpose.msra.mxu0 0.0
    %3102 = vmatprep.subr.mxu0 0.0
    %3103 = vmatpush1.xpose.msra.mxu0 0.0
    %3104 = vmatprep.subr.mxu0 0.0
    %3105 = vmatpush1.xpose.msra.mxu0 0.0
    %3106 = vmatprep.subr.mxu0 0.0
    %3107 = vmatpush1.xpose.msra.mxu0 0.0
    %3108 = vmatprep.subr.mxu0 0.0
    %3109 = vmatpush1.xpose.msra.mxu0 0.0
    %3110 = vmatprep.subr.mxu0 0.0
    %3111 = vmatpush1.xpose.msra.mxu0 0.0
    %3112 = vmatprep.subr.mxu0 0.0
    %3113 = vmatpush1.xpose.msra.mxu0 0.0
    %3114 = vmatprep.subr.mxu0 0.0
    %3115 = vmatpush1.xpose.msra.mxu0 0.0
    %3116 = vmatprep.subr.mxu0 0.0
    %3117 = vmatpush1.xpose.msra.mxu0 0.0
    %3118 = vmatprep.subr.mxu0 0.0
    %3119 = vmatpush1.xpose.msra.mxu0 0.0
    %3120 = vmatprep.subr.mxu0 0.0
    %3121 = vmatpush1.xpose.msra.mxu0 0.0
    %3122 = vmatprep.subr.mxu0 0.0
    %3123 = vmatpush1.xpose.msra.mxu0 0.0
    %3124 = vmatprep.subr.mxu0 0.0
    %3125 = vmatpush1.xpose.msra.mxu0 0.0
    %3126 = vmatprep.subr.mxu0 0.0
    %3127 = vmatpush1.xpose.msra.mxu0 0.0
    %3128 = vmatprep.subr.mxu0 0.0
    %3129 = vmatpush1.xpose.msra.mxu0 0.0
    %3130 = vmatprep.subr.mxu0 0.0
    %3131 = vmatpush1.xpose.msra.mxu0 0.0
    %3132 = vmatprep.subr.mxu0 0.0
    %3133 = vmatpush1.xpose.msra.mxu0 0.0
    %3134 = vmatprep.subr.mxu0 0.0
    %3135 = vmatpush1.xpose.msra.mxu0 0.0
    %3136 = vmatprep.subr.mxu0 0.0
    %3137 = vmatpush1.xpose.msra.mxu0 0.0
    %3138 = vmatprep.subr.mxu0 0.0
    %3139 = vmatpush1.xpose.msra.mxu0 0.0
    %3140 = vmatprep.subr.mxu0 0.0
    %3141 = vmatpush1.xpose.msra.mxu0 0.0
    %3142 = vmatprep.subr.mxu0 0.0
    %3143 = vmatpush1.xpose.msra.mxu0 0.0
    %3144 = vmatprep.subr.mxu0 0.0
    %3145 = vmatpush1.xpose.msra.mxu0 0.0
    %3146 = vmatprep.subr.mxu0 0.0
    %3147 = vmatpush1.xpose.msra.mxu0 0.0
    %3148 = vmatprep.subr.mxu0 0.0
    %3149 = vmatpush1.xpose.msra.mxu0 0.0
    %3150 = vmatprep.subr.mxu0 0.0
    %3151 = vmatpush1.xpose.msra.mxu0 0.0
    %3152 = vmatprep.subr.mxu0 0.0
    %3153 = vmatpush1.xpose.msra.mxu0 0.0
    %3154 = vmatprep.subr.mxu0 0.0
    %3155 = vmatpush1.xpose.msra.mxu0 0.0
    %3156 = vmatprep.subr.mxu0 0.0
    %3157 = vmatpush1.xpose.msra.mxu0 0.0
    %3158 = vmatprep.subr.mxu0 0.0
    %3159 = vmatpush1.xpose.msra.mxu0 0.0
    %3160 = vmatprep.mubr.f32.mxu0 0.0
    %3161 = vmatmul.mubr.f32.gmra.mrb[0].mxu0 %v3088
    %v3162 = vpop.f32.mrb[0].mxu0
    %v3163 = vadd.f32 0.0, %v3162
    %v3164 = vpop.f32.mrb[0].mxu0
    %3165 = vmatprep.mubr.f32.mxu0 0.0
    %3166 = vmatmul.mubr.f32.gmra.mrb[0].mxu0 %v3090
    %v3167 = vpop.f32.mrb[0].mxu0
    %v3168 = vadd.f32 0.0, %v3167
    %v3169 = vpop.f32.mrb[0].mxu0
    %3170 = vdwg.mxu0
    %v3171 = vsel %vm172, %v2885, 0
    %v3173 = vsel %vm172, %v2887, 0
    %v3175 = vsel %vm172, %v2899, 0
    %v3177 = vsel %vm172, %v2901, 0
    %3179 = vmatprep.subr.mxu0 0.0
    %3180 = vmatpush1.xpose.msra.mxu0 %v3175
    %3181 = vmatprep.subr.mxu0 0.0
    %3182 = vmatpush1.xpose.msra.mxu0 %v3177
    %3183 = vmatprep.subr.mxu0 0.0
    %3184 = vmatpush1.xpose.msra.mxu0 0.0
    %3185 = vmatprep.subr.mxu0 0.0
    %3186 = vmatpush1.xpose.msra.mxu0 0.0
    %3187 = vmatprep.subr.mxu0 0.0
    %3188 = vmatpush1.xpose.msra.mxu0 0.0
    %3189 = vmatprep.subr.mxu0 0.0
    %3190 = vmatpush1.xpose.msra.mxu0 0.0
    %3191 = vmatprep.subr.mxu0 0.0
    %3192 = vmatpush1.xpose.msra.mxu0 0.0
    %3193 = vmatprep.subr.mxu0 0.0
    %3194 = vmatpush1.xpose.msra.mxu0 0.0
    %3195 = vmatprep.subr.mxu0 0.0
    %3196 = vmatpush1.xpose.msra.mxu0 0.0
    %3197 = vmatprep.subr.mxu0 0.0
    %3198 = vmatpush1.xpose.msra.mxu0 0.0
    %3199 = vmatprep.subr.mxu0 0.0
    %3200 = vmatpush1.xpose.msra.mxu0 0.0
    %3201 = vmatprep.subr.mxu0 0.0
    %3202 = vmatpush1.xpose.msra.mxu0 0.0
    %3203 = vmatprep.subr.mxu0 0.0
    %3204 = vmatpush1.xpose.msra.mxu0 0.0
    %3205 = vmatprep.subr.mxu0 0.0
    %3206 = vmatpush1.xpose.msra.mxu0 0.0
    %3207 = vmatprep.subr.mxu0 0.0
    %3208 = vmatpush1.xpose.msra.mxu0 0.0
    %3209 = vmatprep.subr.mxu0 0.0
    %3210 = vmatpush1.xpose.msra.mxu0 0.0
    %3211 = vmatprep.subr.mxu0 0.0
    %3212 = vmatpush1.xpose.msra.mxu0 0.0
    %3213 = vmatprep.subr.mxu0 0.0
    %3214 = vmatpush1.xpose.msra.mxu0 0.0
    %3215 = vmatprep.subr.mxu0 0.0
    %3216 = vmatpush1.xpose.msra.mxu0 0.0
    %3217 = vmatprep.subr.mxu0 0.0
    %3218 = vmatpush1.xpose.msra.mxu0 0.0
    %3219 = vmatprep.subr.mxu0 0.0
    %3220 = vmatpush1.xpose.msra.mxu0 0.0
    %3221 = vmatprep.subr.mxu0 0.0
    %3222 = vmatpush1.xpose.msra.mxu0 0.0
    %3223 = vmatprep.subr.mxu0 0.0
    %3224 = vmatpush1.xpose.msra.mxu0 0.0
    %3225 = vmatprep.subr.mxu0 0.0
    %3226 = vmatpush1.xpose.msra.mxu0 0.0
    %3227 = vmatprep.subr.mxu0 0.0
    %3228 = vmatpush1.xpose.msra.mxu0 0.0
    %3229 = vmatprep.subr.mxu0 0.0
    %3230 = vmatpush1.xpose.msra.mxu0 0.0
    %3231 = vmatprep.subr.mxu0 0.0
    %3232 = vmatpush1.xpose.msra.mxu0 0.0
    %3233 = vmatprep.subr.mxu0 0.0
    %3234 = vmatpush1.xpose.msra.mxu0 0.0
    %3235 = vmatprep.subr.mxu0 0.0
    %3236 = vmatpush1.xpose.msra.mxu0 0.0
    %3237 = vmatprep.subr.mxu0 0.0
    %3238 = vmatpush1.xpose.msra.mxu0 0.0
    %3239 = vmatprep.subr.mxu0 0.0
    %3240 = vmatpush1.xpose.msra.mxu0 0.0
    %3241 = vmatprep.subr.mxu0 0.0
    %3242 = vmatpush1.xpose.msra.mxu0 0.0
    %3243 = vmatprep.mubr.f32.mxu0 0.0
    %3244 = vmatmul.mubr.f32.gmra.mrb[0].mxu0 %v3171
    %v3245 = vpop.f32.mrb[0].mxu0
    %v3246 = vadd.f32 0.0, %v3245
    %v3247 = vpop.f32.mrb[0].mxu0
    %3248 = vmatprep.mubr.f32.mxu0 0.0
    %3249 = vmatmul.mubr.f32.gmra.mrb[0].mxu0 %v3173
    %v3250 = vpop.f32.mrb[0].mxu0
    %v3251 = vadd.f32 0.0, %v3250
    %v3252 = vpop.f32.mrb[0].mxu0
    %3253 = vdwg.mxu0
    %v3254 = vmul.f32 %v2997, 0.17677669
    %v3255 = vmul.f32 %v3002, 0.17677669
    %v3256 = vmul.f32 %v3080, 0.17677669
    %v3257 = vmul.f32 %v3085, 0.17677669
    %v3258 = vmul.f32 %v3163, 0.17677669
    %v3259 = vmul.f32 %v3168, 0.17677669
    %v3260 = vmul.f32 %v3246, 0.17677669
    %v3261 = vmul.f32 %v3251, 0.17677669
    %v3262 = vsel %vm934, %v3254, -inf
    %3263 = vmax.xlane.f32.xlu0 %v3262
    %v3264 = vpop.xlane.xlu0 %3263
    %v3265 = vsel %vm934, %v3255, -inf
    %3266 = vmax.xlane.f32.xlu0 %v3265
    %v3267 = vpop.xlane.xlu0 %3266
    %v3268 = vsel %vm934, %v3256, -inf
    %3269 = vmax.xlane.f32.xlu0 %v3268
    %v3270 = vpop.xlane.xlu0 %3269
    %v3271 = vsel %vm934, %v3257, -inf
    %3272 = vmax.xlane.f32.xlu0 %v3271
    %v3273 = vpop.xlane.xlu0 %3272
    %v3274 = vsel %vm934, %v3258, -inf
    %3275 = vmax.xlane.f32.xlu0 %v3274
    %v3276 = vpop.xlane.xlu0 %3275
    %v3277 = vsel %vm934, %v3259, -inf
    %3278 = vmax.xlane.f32.xlu0 %v3277
    %v3279 = vpop.xlane.xlu0 %3278
    %v3280 = vsel %vm934, %v3260, -inf
    %3281 = vmax.xlane.f32.xlu0 %v3280
    %v3282 = vpop.xlane.xlu0 %3281
    %v3283 = vsel %vm934, %v3261, -inf
    %3284 = vmax.xlane.f32.xlu0 %v3283
    %v3285 = vpop.xlane.xlu0 %3284
    %v3286 = vsub.f32 %v3254, %v3264
    %v3287 = vsub.f32 %v3255, %v3267
    %v3288 = vsub.f32 %v3256, %v3270
    %v3289 = vsub.f32 %v3257, %v3273
    %v3290 = vsub.f32 %v3258, %v3276
    %v3291 = vsub.f32 %v3259, %v3279
    %v3292 = vsub.f32 %v3260, %v3282
    %v3293 = vsub.f32 %v3261, %v3285
    %v3294 = vmul.f32 %v3286, 1.442695
    %v3295 = vpow.pop %v3294
    %v3296 = vmul.f32 %v3287, 1.442695
    %v3297 = vpow.pop %v3296
    %v3298 = vmul.f32 %v3288, 1.442695
    %v3299 = vpow.pop %v3298
    %v3300 = vmul.f32 %v3289, 1.442695
    %v3301 = vpow.pop %v3300
    %v3302 = vmul.f32 %v3290, 1.442695
    %v3303 = vpow.pop %v3302
    %v3304 = vmul.f32 %v3291, 1.442695
    %v3305 = vpow.pop %v3304
    %v3306 = vmul.f32 %v3292, 1.442695
    %v3307 = vpow.pop %v3306
    %v3308 = vmul.f32 %v3293, 1.442695
    %v3309 = vpow.pop %v3308
    %v3310 = vsel %vm934, %v3295, 0.0
    %3311 = vadd.xlane.f32.xlu0 %v3310
    %v3312 = vpop.xlane.xlu0 %3311
    %v3313 = vsel %vm934, %v3297, 0.0
    %3314 = vadd.xlane.f32.xlu0 %v3313
    %v3315 = vpop.xlane.xlu0 %3314
    %v3316 = vsel %vm934, %v3299, 0.0
    %3317 = vadd.xlane.f32.xlu0 %v3316
    %v3318 = vpop.xlane.xlu0 %3317
    %v3319 = vsel %vm934, %v3301, 0.0
    %3320 = vadd.xlane.f32.xlu0 %v3319
    %v3321 = vpop.xlane.xlu0 %3320
    %v3322 = vsel %vm934, %v3303, 0.0
    %3323 = vadd.xlane.f32.xlu0 %v3322
    %v3324 = vpop.xlane.xlu0 %3323
    %v3325 = vsel %vm934, %v3305, 0.0
    %3326 = vadd.xlane.f32.xlu0 %v3325
    %v3327 = vpop.xlane.xlu0 %3326
    %v3328 = vsel %vm934, %v3307, 0.0
    %3329 = vadd.xlane.f32.xlu0 %v3328
    %v3330 = vpop.xlane.xlu0 %3329
    %v3331 = vsel %vm934, %v3309, 0.0
    %3332 = vadd.xlane.f32.xlu0 %v3331
    %v3333 = vpop.xlane.xlu0 %3332
    %v3334 = vrcp.pop %v3312
    %v3335 = vrcp.pop %v3315
    %v3336 = vrcp.pop %v3318
    %v3337 = vrcp.pop %v3321
    %v3338 = vrcp.pop %v3324
    %v3339 = vrcp.pop %v3327
    %v3340 = vrcp.pop %v3330
    %v3341 = vrcp.pop %v3333
    %v3342 = vmul.f32 %v3295, %v3334
    %v3343 = vmul.f32 %v3297, %v3335
    %v3344 = vmul.f32 %v3299, %v3336
    %v3345 = vmul.f32 %v3301, %v3337
    %v3346 = vmul.f32 %v3303, %v3338
    %v3347 = vmul.f32 %v3305, %v3339
    %v3348 = vmul.f32 %v3307, %v3340
    %v3349 = vmul.f32 %v3309, %v3341
    %v3351 = vsel %vm934, %v3342, 0
    %v3354 = vsel %vm934, %v3343, 0
    %3356 = vmatprep.subr.mxu0 0.0
    %3357 = vmatpush1.msra.mxu0 %v2856
    %3358 = vmatprep.subr.mxu0 0.0
    %3359 = vmatpush1.msra.mxu0 %v2861
    %3360 = vmatprep.subr.mxu0 0.0
    %3361 = vmatpush1.msra.mxu0 0.0
    %3362 = vmatprep.subr.mxu0 0.0
    %3363 = vmatpush1.msra.mxu0 0.0
    %3364 = vmatprep.subr.mxu0 0.0
    %3365 = vmatpush1.msra.mxu0 0.0
    %3366 = vmatprep.subr.mxu0 0.0
    %3367 = vmatpush1.msra.mxu0 0.0
    %3368 = vmatprep.subr.mxu0 0.0
    %3369 = vmatpush1.msra.mxu0 0.0
    %3370 = vmatprep.subr.mxu0 0.0
    %3371 = vmatpush1.msra.mxu0 0.0
    %3372 = vmatprep.subr.mxu0 0.0
    %3373 = vmatpush1.msra.mxu0 0.0
    %3374 = vmatprep.subr.mxu0 0.0
    %3375 = vmatpush1.msra.mxu0 0.0
    %3376 = vmatprep.subr.mxu0 0.0
    %3377 = vmatpush1.msra.mxu0 0.0
    %3378 = vmatprep.subr.mxu0 0.0
    %3379 = vmatpush1.msra.mxu0 0.0
    %3380 = vmatprep.subr.mxu0 0.0
    %3381 = vmatpush1.msra.mxu0 0.0
    %3382 = vmatprep.subr.mxu0 0.0
    %3383 = vmatpush1.msra.mxu0 0.0
    %3384 = vmatprep.subr.mxu0 0.0
    %3385 = vmatpush1.msra.mxu0 0.0
    %3386 = vmatprep.subr.mxu0 0.0
    %3387 = vmatpush1.msra.mxu0 0.0
    %3388 = vmatprep.subr.mxu0 0.0
    %3389 = vmatpush1.msra.mxu0 0.0
    %3390 = vmatprep.subr.mxu0 0.0
    %3391 = vmatpush1.msra.mxu0 0.0
    %3392 = vmatprep.subr.mxu0 0.0
    %3393 = vmatpush1.msra.mxu0 0.0
    %3394 = vmatprep.subr.mxu0 0.0
    %3395 = vmatpush1.msra.mxu0 0.0
    %3396 = vmatprep.subr.mxu0 0.0
    %3397 = vmatpush1.msra.mxu0 0.0
    %3398 = vmatprep.subr.mxu0 0.0
    %3399 = vmatpush1.msra.mxu0 0.0
    %3400 = vmatprep.subr.mxu0 0.0
    %3401 = vmatpush1.msra.mxu0 0.0
    %3402 = vmatprep.subr.mxu0 0.0
    %3403 = vmatpush1.msra.mxu0 0.0
    %3404 = vmatprep.subr.mxu0 0.0
    %3405 = vmatpush1.msra.mxu0 0.0
    %3406 = vmatprep.subr.mxu0 0.0
    %3407 = vmatpush1.msra.mxu0 0.0
    %3408 = vmatprep.subr.mxu0 0.0
    %3409 = vmatpush1.msra.mxu0 0.0
    %3410 = vmatprep.subr.mxu0 0.0
    %3411 = vmatpush1.msra.mxu0 0.0
    %3412 = vmatprep.subr.mxu0 0.0
    %3413 = vmatpush1.msra.mxu0 0.0
    %3414 = vmatprep.subr.mxu0 0.0
    %3415 = vmatpush1.msra.mxu0 0.0
    %3416 = vmatprep.subr.mxu0 0.0
    %3417 = vmatpush1.msra.mxu0 0.0
    %3418 = vmatprep.subr.mxu0 0.0
    %3419 = vmatpush1.msra.mxu0 0.0
    %3420 = vmatprep.mubr.f32.mxu0 0.0
    %3421 = vmatmul.mubr.f32.gmra.mrb[0].mxu0 %v3351
    %v3422 = vpop.f32.mrb[0].mxu0
    %v3423 = vadd.f32 0.0, %v3422
    %v3424 = vpop.f32.mrb[0].mxu0
    %3425 = vmatprep.mubr.f32.mxu0 0.0
    %3426 = vmatmul.mubr.f32.gmra.mrb[0].mxu0 %v3354
    %v3427 = vpop.f32.mrb[0].mxu0
    %v3428 = vadd.f32 0.0, %v3427
    %v3429 = vpop.f32.mrb[0].mxu0
    %3430 = vdwg.mxu0
    %v3432 = vsel %vm934, %v3344, 0
    %v3435 = vsel %vm934, %v3345, 0
    %3437 = vmatprep.subr.mxu0 0.0
    %3438 = vmatpush1.msra.mxu0 %v2905
    %3439 = vmatprep.subr.mxu0 0.0
    %3440 = vmatpush1.msra.mxu0 %v2907
    %3441 = vmatprep.subr.mxu0 0.0
    %3442 = vmatpush1.msra.mxu0 0.0
    %3443 = vmatprep.subr.mxu0 0.0
    %3444 = vmatpush1.msra.mxu0 0.0
    %3445 = vmatprep.subr.mxu0 0.0
    %3446 = vmatpush1.msra.mxu0 0.0
    %3447 = vmatprep.subr.mxu0 0.0
    %3448 = vmatpush1.msra.mxu0 0.0
    %3449 = vmatprep.subr.mxu0 0.0
    %3450 = vmatpush1.msra.mxu0 0.0
    %3451 = vmatprep.subr.mxu0 0.0
    %3452 = vmatpush1.msra.mxu0 0.0
    %3453 = vmatprep.subr.mxu0 0.0
    %3454 = vmatpush1.msra.mxu0 0.0
    %3455 = vmatprep.subr.mxu0 0.0
    %3456 = vmatpush1.msra.mxu0 0.0
    %3457 = vmatprep.subr.mxu0 0.0
    %3458 = vmatpush1.msra.mxu0 0.0
    %3459 = vmatprep.subr.mxu0 0.0
    %3460 = vmatpush1.msra.mxu0 0.0
    %3461 = vmatprep.subr.mxu0 0.0
    %3462 = vmatpush1.msra.mxu0 0.0
    %3463 = vmatprep.subr.mxu0 0.0
    %3464 = vmatpush1.msra.mxu0 0.0
    %3465 = vmatprep.subr.mxu0 0.0
    %3466 = vmatpush1.msra.mxu0 0.0
    %3467 = vmatprep.subr.mxu0 0.0
    %3468 = vmatpush1.msra.mxu0 0.0
    %3469 = vmatprep.subr.mxu0 0.0
    %3470 = vmatpush1.msra.mxu0 0.0
    %3471 = vmatprep.subr.mxu0 0.0
    %3472 = vmatpush1.msra.mxu0 0.0
    %3473 = vmatprep.subr.mxu0 0.0
    %3474 = vmatpush1.msra.mxu0 0.0
    %3475 = vmatprep.subr.mxu0 0.0
    %3476 = vmatpush1.msra.mxu0 0.0
    %3477 = vmatprep.subr.mxu0 0.0
    %3478 = vmatpush1.msra.mxu0 0.0
    %3479 = vmatprep.subr.mxu0 0.0
    %3480 = vmatpush1.msra.mxu0 0.0
    %3481 = vmatprep.subr.mxu0 0.0
    %3482 = vmatpush1.msra.mxu0 0.0
    %3483 = vmatprep.subr.mxu0 0.0
    %3484 = vmatpush1.msra.mxu0 0.0
    %3485 = vmatprep.subr.mxu0 0.0
    %3486 = vmatpush1.msra.mxu0 0.0
    %3487 = vmatprep.subr.mxu0 0.0
    %3488 = vmatpush1.msra.mxu0 0.0
    %3489 = vmatprep.subr.mxu0 0.0
    %3490 = vmatpush1.msra.mxu0 0.0
    %3491 = vmatprep.subr.mxu0 0.0
    %3492 = vmatpush1.msra.mxu0 0.0
    %3493 = vmatprep.subr.mxu0 0.0
    %3494 = vmatpush1.msra.mxu0 0.0
    %3495 = vmatprep.subr.mxu0 0.0
    %3496 = vmatpush1.msra.mxu0 0.0
    %3497 = vmatprep.subr.mxu0 0.0
    %3498 = vmatpush1.msra.mxu0 0.0
    %3499 = vmatprep.subr.mxu0 0.0
    %3500 = vmatpush1.msra.mxu0 0.0
    %3501 = vmatprep.mubr.f32.mxu0 0.0
    %3502 = vmatmul.mubr.f32.gmra.mrb[0].mxu0 %v3432
    %v3503 = vpop.f32.mrb[0].mxu0
    %v3504 = vadd.f32 0.0, %v3503
    %v3505 = vpop.f32.mrb[0].mxu0
    %3506 = vmatprep.mubr.f32.mxu0 0.0
    %3507 = vmatmul.mubr.f32.gmra.mrb[0].mxu0 %v3435
    %v3508 = vpop.f32.mrb[0].mxu0
    %v3509 = vadd.f32 0.0, %v3508
    %v3510 = vpop.f32.mrb[0].mxu0
    %3511 = vdwg.mxu0
    %v3513 = vsel %vm934, %v3346, 0
    %v3516 = vsel %vm934, %v3347, 0
    %3518 = vmatprep.subr.mxu0 0.0
    %3519 = vmatpush1.msra.mxu0 %v2911
    %3520 = vmatprep.subr.mxu0 0.0
    %3521 = vmatpush1.msra.mxu0 %v2913
    %3522 = vmatprep.subr.mxu0 0.0
    %3523 = vmatpush1.msra.mxu0 0.0
    %3524 = vmatprep.subr.mxu0 0.0
    %3525 = vmatpush1.msra.mxu0 0.0
    %3526 = vmatprep.subr.mxu0 0.0
    %3527 = vmatpush1.msra.mxu0 0.0
    %3528 = vmatprep.subr.mxu0 0.0
    %3529 = vmatpush1.msra.mxu0 0.0
    %3530 = vmatprep.subr.mxu0 0.0
    %3531 = vmatpush1.msra.mxu0 0.0
    %3532 = vmatprep.subr.mxu0 0.0
    %3533 = vmatpush1.msra.mxu0 0.0
    %3534 = vmatprep.subr.mxu0 0.0
    %3535 = vmatpush1.msra.mxu0 0.0
    %3536 = vmatprep.subr.mxu0 0.0
    %3537 = vmatpush1.msra.mxu0 0.0
    %3538 = vmatprep.subr.mxu0 0.0
    %3539 = vmatpush1.msra.mxu0 0.0
    %3540 = vmatprep.subr.mxu0 0.0
    %3541 = vmatpush1.msra.mxu0 0.0
    %3542 = vmatprep.subr.mxu0 0.0
    %3543 = vmatpush1.msra.mxu0 0.0
    %3544 = vmatprep.subr.mxu0 0.0
    %3545 = vmatpush1.msra.mxu0 0.0
    %3546 = vmatprep.subr.mxu0 0.0
    %3547 = vmatpush1.msra.mxu0 0.0
    %3548 = vmatprep.subr.mxu0 0.0
    %3549 = vmatpush1.msra.mxu0 0.0
    %3550 = vmatprep.subr.mxu0 0.0
    %3551 = vmatpush1.msra.mxu0 0.0
    %3552 = vmatprep.subr.mxu0 0.0
    %3553 = vmatpush1.msra.mxu0 0.0
    %3554 = vmatprep.subr.mxu0 0.0
    %3555 = vmatpush1.msra.mxu0 0.0
    %3556 = vmatprep.subr.mxu0 0.0
    %3557 = vmatpush1.msra.mxu0 0.0
    %3558 = vmatprep.subr.mxu0 0.0
    %3559 = vmatpush1.msra.mxu0 0.0
    %3560 = vmatprep.subr.mxu0 0.0
    %3561 = vmatpush1.msra.mxu0 0.0
    %3562 = vmatprep.subr.mxu0 0.0
    %3563 = vmatpush1.msra.mxu0 0.0
    %3564 = vmatprep.subr.mxu0 0.0
    %3565 = vmatpush1.msra.mxu0 0.0
    %3566 = vmatprep.subr.mxu0 0.0
    %3567 = vmatpush1.msra.mxu0 0.0
    %3568 = vmatprep.subr.mxu0 0.0
    %3569 = vmatpush1.msra.mxu0 0.0
    %3570 = vmatprep.subr.mxu0 0.0
    %3571 = vmatpush1.msra.mxu0 0.0
    %3572 = vmatprep.subr.mxu0 0.0
    %3573 = vmatpush1.msra.mxu0 0.0
    %3574 = vmatprep.subr.mxu0 0.0
    %3575 = vmatpush1.msra.mxu0 0.0
    %3576 = vmatprep.subr.mxu0 0.0
    %3577 = vmatpush1.msra.mxu0 0.0
    %3578 = vmatprep.subr.mxu0 0.0
    %3579 = vmatpush1.msra.mxu0 0.0
    %3580 = vmatprep.subr.mxu0 0.0
    %3581 = vmatpush1.msra.mxu0 0.0
    %3582 = vmatprep.mubr.f32.mxu0 0.0
    %3583 = vmatmul.mubr.f32.gmra.mrb[0].mxu0 %v3513
    %v3584 = vpop.f32.mrb[0].mxu0
    %v3585 = vadd.f32 0.0, %v3584
    %v3586 = vpop.f32.mrb[0].mxu0
    %3587 = vmatprep.mubr.f32.mxu0 0.0
    %3588 = vmatmul.mubr.f32.gmra.mrb[0].mxu0 %v3516
    %v3589 = vpop.f32.mrb[0].mxu0
    %v3590 = vadd.f32 0.0, %v3589
    %v3591 = vpop.f32.mrb[0].mxu0
    %3592 = vdwg.mxu0
    %v3594 = vsel %vm934, %v3348, 0
    %v3597 = vsel %vm934, %v3349, 0
    %3599 = vmatprep.subr.mxu0 0.0
    %3600 = vmatpush1.msra.mxu0 %v2917
    %3601 = vmatprep.subr.mxu0 0.0
    %3602 = vmatpush1.msra.mxu0 %v2919
    %3603 = vmatprep.subr.mxu0 0.0
    %3604 = vmatpush1.msra.mxu0 0.0
    %3605 = vmatprep.subr.mxu0 0.0
    %3606 = vmatpush1.msra.mxu0 0.0
    %3607 = vmatprep.subr.mxu0 0.0
    %3608 = vmatpush1.msra.mxu0 0.0
    %3609 = vmatprep.subr.mxu0 0.0
    %3610 = vmatpush1.msra.mxu0 0.0
    %3611 = vmatprep.subr.mxu0 0.0
    %3612 = vmatpush1.msra.mxu0 0.0
    %3613 = vmatprep.subr.mxu0 0.0
    %3614 = vmatpush1.msra.mxu0 0.0
    %3615 = vmatprep.subr.mxu0 0.0
    %3616 = vmatpush1.msra.mxu0 0.0
    %3617 = vmatprep.subr.mxu0 0.0
    %3618 = vmatpush1.msra.mxu0 0.0
    %3619 = vmatprep.subr.mxu0 0.0
    %3620 = vmatpush1.msra.mxu0 0.0
    %3621 = vmatprep.subr.mxu0 0.0
    %3622 = vmatpush1.msra.mxu0 0.0
    %3623 = vmatprep.subr.mxu0 0.0
    %3624 = vmatpush1.msra.mxu0 0.0
    %3625 = vmatprep.subr.mxu0 0.0
    %3626 = vmatpush1.msra.mxu0 0.0
    %3627 = vmatprep.subr.mxu0 0.0
    %3628 = vmatpush1.msra.mxu0 0.0
    %3629 = vmatprep.subr.mxu0 0.0
    %3630 = vmatpush1.msra.mxu0 0.0
    %3631 = vmatprep.subr.mxu0 0.0
    %3632 = vmatpush1.msra.mxu0 0.0
    %3633 = vmatprep.subr.mxu0 0.0
    %3634 = vmatpush1.msra.mxu0 0.0
    %3635 = vmatprep.subr.mxu0 0.0
    %3636 = vmatpush1.msra.mxu0 0.0
    %3637 = vmatprep.subr.mxu0 0.0
    %3638 = vmatpush1.msra.mxu0 0.0
    %3639 = vmatprep.subr.mxu0 0.0
    %3640 = vmatpush1.msra.mxu0 0.0
    %3641 = vmatprep.subr.mxu0 0.0
    %3642 = vmatpush1.msra.mxu0 0.0
    %3643 = vmatprep.subr.mxu0 0.0
    %3644 = vmatpush1.msra.mxu0 0.0
    %3645 = vmatprep.subr.mxu0 0.0
    %3646 = vmatpush1.msra.mxu0 0.0
    %3647 = vmatprep.subr.mxu0 0.0
    %3648 = vmatpush1.msra.mxu0 0.0
    %3649 = vmatprep.subr.mxu0 0.0
    %3650 = vmatpush1.msra.mxu0 0.0
    %3651 = vmatprep.subr.mxu0 0.0
    %3652 = vmatpush1.msra.mxu0 0.0
    %3653 = vmatprep.subr.mxu0 0.0
    %3654 = vmatpush1.msra.mxu0 0.0
    %3655 = vmatprep.subr.mxu0 0.0
    %3656 = vmatpush1.msra.mxu0 0.0
    %3657 = vmatprep.subr.mxu0 0.0
    %3658 = vmatpush1.msra.mxu0 0.0
    %3659 = vmatprep.subr.mxu0 0.0
    %3660 = vmatpush1.msra.mxu0 0.0
    %3661 = vmatprep.subr.mxu0 0.0
    %3662 = vmatpush1.msra.mxu0 0.0
    %3663 = vmatprep.mubr.f32.mxu0 0.0
    %3664 = vmatmul.mubr.f32.gmra.mrb[0].mxu0 %v3594
    %v3665 = vpop.f32.mrb[0].mxu0
    %v3666 = vadd.f32 0.0, %v3665
    %v3667 = vpop.f32.mrb[0].mxu0
    %3668 = vmatprep.mubr.f32.mxu0 0.0
    %3669 = vmatmul.mubr.f32.gmra.mrb[0].mxu0 %v3597
    %v3670 = vpop.f32.mrb[0].mxu0
    %v3671 = vadd.f32 0.0, %v3670
    %v3672 = vpop.f32.mrb[0].mxu0
    %3673 = vdwg.mxu0
    %3676 = vrot.lane.b32.xlu0 %v3504, 32
    %v3677 = vpop.permute.xlu0 %3676
    %3678 = vrot.lane.b32.xlu0 %v3509, 32
    %v3679 = vpop.permute.xlu0 %3678
    %3684 = vrot.lane.b32.xlu0 %v3585, 64
    %v3685 = vpop.permute.xlu0 %3684
    %3686 = vrot.lane.b32.xlu0 %v3590, 64
    %v3687 = vpop.permute.xlu0 %3686
    %3692 = vrot.lane.b32.xlu0 %v3666, 96
    %v3693 = vpop.permute.xlu0 %3692
    %3694 = vrot.lane.b32.xlu0 %v3671, 96
    %v3695 = vpop.permute.xlu0 %3694
    %v3698 = vsel %vm172, %v3423, %v3677
    %v3699 = vsel %vm172, %v3428, %v3679
    %v3700 = vsel %vm1373, %v3698, %v3685
    %v3701 = vsel %vm1373, %v3699, %v3687
    %v3702 = vsel %vm1376, %v3700, %v3693
    %v3703 = vsel %vm1376, %v3701, %v3695
    %3706 = vrot.lane.b32.xlu0 %v2779, 96
    %v3707 = vpop.permute.xlu0 %3706
    %3708 = vrot.lane.b32.xlu0 %v2785, 96
    %v3709 = vpop.permute.xlu0 %3708
    %3710 = vrot.lane.b32.xlu0 %v2779, 64
    %v3711 = vpop.permute.xlu0 %3710
    %3712 = vrot.lane.b32.xlu0 %v2785, 64
    %v3713 = vpop.permute.xlu0 %3712
    %3714 = vrot.lane.b32.xlu0 %v2779, 32
    %v3715 = vpop.permute.xlu0 %3714
    %3716 = vrot.lane.b32.xlu0 %v2785, 32
    %v3717 = vpop.permute.xlu0 %3716
    %3720 = vrot.lane.b32.xlu0 %v2781, 96
    %v3721 = vpop.permute.xlu0 %3720
    %3722 = vrot.lane.b32.xlu0 %v2787, 96
    %v3723 = vpop.permute.xlu0 %3722
    %3724 = vrot.lane.b32.xlu0 %v2781, 64
    %v3725 = vpop.permute.xlu0 %3724
    %3726 = vrot.lane.b32.xlu0 %v2787, 64
    %v3727 = vpop.permute.xlu0 %3726
    %3728 = vrot.lane.b32.xlu0 %v2781, 32
    %v3729 = vpop.permute.xlu0 %3728
    %3730 = vrot.lane.b32.xlu0 %v2787, 32
    %v3731 = vpop.permute.xlu0 %3730
    %3734 = vrot.lane.b32.xlu0 %v2866, 96
    %v3735 = vpop.permute.xlu0 %3734
    %3736 = vrot.lane.b32.xlu0 %v2871, 96
    %v3737 = vpop.permute.xlu0 %3736
    %3740 = vrot.lane.b32.xlu0 %v2866, 64
    %v3741 = vpop.permute.xlu0 %3740
    %3742 = vrot.lane.b32.xlu0 %v2871, 64
    %v3743 = vpop.permute.xlu0 %3742
    %3746 = vrot.lane.b32.xlu0 %v2866, 32
    %v3747 = vpop.permute.xlu0 %3746
    %3748 = vrot.lane.b32.xlu0 %v2871, 32
    %v3749 = vpop.permute.xlu0 %3748
    %v3752 = vsel %vm172, %v2779, 0
    %v3754 = vsel %vm172, %v2785, 0
    %v3756 = vsel %vm172, %v2781, 0
    %v3758 = vsel %vm172, %v2787, 0
    %3760 = vmatprep.subr.mxu0 0.0
    %3761 = vmatpush1.xpose.msra.mxu0 %v3756
    %3762 = vmatprep.subr.mxu0 0.0
    %3763 = vmatpush1.xpose.msra.mxu0 %v3758
    %3764 = vmatprep.subr.mxu0 0.0
    %3765 = vmatpush1.xpose.msra.mxu0 0.0
    %3766 = vmatprep.subr.mxu0 0.0
    %3767 = vmatpush1.xpose.msra.mxu0 0.0
    %3768 = vmatprep.subr.mxu0 0.0
    %3769 = vmatpush1.xpose.msra.mxu0 0.0
    %3770 = vmatprep.subr.mxu0 0.0
    %3771 = vmatpush1.xpose.msra.mxu0 0.0
    %3772 = vmatprep.subr.mxu0 0.0
    %3773 = vmatpush1.xpose.msra.mxu0 0.0
    %3774 = vmatprep.subr.mxu0 0.0
    %3775 = vmatpush1.xpose.msra.mxu0 0.0
    %3776 = vmatprep.subr.mxu0 0.0
    %3777 = vmatpush1.xpose.msra.mxu0 0.0
    %3778 = vmatprep.subr.mxu0 0.0
    %3779 = vmatpush1.xpose.msra.mxu0 0.0
    %3780 = vmatprep.subr.mxu0 0.0
    %3781 = vmatpush1.xpose.msra.mxu0 0.0
    %3782 = vmatprep.subr.mxu0 0.0
    %3783 = vmatpush1.xpose.msra.mxu0 0.0
    %3784 = vmatprep.subr.mxu0 0.0
    %3785 = vmatpush1.xpose.msra.mxu0 0.0
    %3786 = vmatprep.subr.mxu0 0.0
    %3787 = vmatpush1.xpose.msra.mxu0 0.0
    %3788 = vmatprep.subr.mxu0 0.0
    %3789 = vmatpush1.xpose.msra.mxu0 0.0
    %3790 = vmatprep.subr.mxu0 0.0
    %3791 = vmatpush1.xpose.msra.mxu0 0.0
    %3792 = vmatprep.subr.mxu0 0.0
    %3793 = vmatpush1.xpose.msra.mxu0 0.0
    %3794 = vmatprep.subr.mxu0 0.0
    %3795 = vmatpush1.xpose.msra.mxu0 0.0
    %3796 = vmatprep.subr.mxu0 0.0
    %3797 = vmatpush1.xpose.msra.mxu0 0.0
    %3798 = vmatprep.subr.mxu0 0.0
    %3799 = vmatpush1.xpose.msra.mxu0 0.0
    %3800 = vmatprep.subr.mxu0 0.0
    %3801 = vmatpush1.xpose.msra.mxu0 0.0
    %3802 = vmatprep.subr.mxu0 0.0
    %3803 = vmatpush1.xpose.msra.mxu0 0.0
    %3804 = vmatprep.subr.mxu0 0.0
    %3805 = vmatpush1.xpose.msra.mxu0 0.0
    %3806 = vmatprep.subr.mxu0 0.0
    %3807 = vmatpush1.xpose.msra.mxu0 0.0
    %3808 = vmatprep.subr.mxu0 0.0
    %3809 = vmatpush1.xpose.msra.mxu0 0.0
    %3810 = vmatprep.subr.mxu0 0.0
    %3811 = vmatpush1.xpose.msra.mxu0 0.0
    %3812 = vmatprep.subr.mxu0 0.0
    %3813 = vmatpush1.xpose.msra.mxu0 0.0
    %3814 = vmatprep.subr.mxu0 0.0
    %3815 = vmatpush1.xpose.msra.mxu0 0.0
    %3816 = vmatprep.subr.mxu0 0.0
    %3817 = vmatpush1.xpose.msra.mxu0 0.0
    %3818 = vmatprep.subr.mxu0 0.0
    %3819 = vmatpush1.xpose.msra.mxu0 0.0
    %3820 = vmatprep.subr.mxu0 0.0
    %3821 = vmatpush1.xpose.msra.mxu0 0.0
    %3822 = vmatprep.subr.mxu0 0.0
    %3823 = vmatpush1.xpose.msra.mxu0 0.0
    %3824 = vmatprep.mubr.f32.mxu0 0.0
    %3825 = vmatmul.mubr.f32.gmra.mrb[0].mxu0 %v3752
    %v3826 = vpop.f32.mrb[0].mxu0
    %v3827 = vadd.f32 0.0, %v3826
    %v3828 = vpop.f32.mrb[0].mxu0
    %3829 = vmatprep.mubr.f32.mxu0 0.0
    %3830 = vmatmul.mubr.f32.gmra.mrb[0].mxu0 %v3754
    %v3831 = vpop.f32.mrb[0].mxu0
    %v3832 = vadd.f32 0.0, %v3831
    %v3833 = vpop.f32.mrb[0].mxu0
    %3834 = vdwg.mxu0
    %v3835 = vsel %vm172, %v3707, 0
    %v3837 = vsel %vm172, %v3709, 0
    %v3839 = vsel %vm172, %v3721, 0
    %v3841 = vsel %vm172, %v3723, 0
    %3843 = vmatprep.subr.mxu0 0.0
    %3844 = vmatpush1.xpose.msra.mxu0 %v3839
    %3845 = vmatprep.subr.mxu0 0.0
    %3846 = vmatpush1.xpose.msra.mxu0 %v3841
    %3847 = vmatprep.subr.mxu0 0.0
    %3848 = vmatpush1.xpose.msra.mxu0 0.0
    %3849 = vmatprep.subr.mxu0 0.0
    %3850 = vmatpush1.xpose.msra.mxu0 0.0
    %3851 = vmatprep.subr.mxu0 0.0
    %3852 = vmatpush1.xpose.msra.mxu0 0.0
    %3853 = vmatprep.subr.mxu0 0.0
    %3854 = vmatpush1.xpose.msra.mxu0 0.0
    %3855 = vmatprep.subr.mxu0 0.0
    %3856 = vmatpush1.xpose.msra.mxu0 0.0
    %3857 = vmatprep.subr.mxu0 0.0
    %3858 = vmatpush1.xpose.msra.mxu0 0.0
    %3859 = vmatprep.subr.mxu0 0.0
    %3860 = vmatpush1.xpose.msra.mxu0 0.0
    %3861 = vmatprep.subr.mxu0 0.0
    %3862 = vmatpush1.xpose.msra.mxu0 0.0
    %3863 = vmatprep.subr.mxu0 0.0
    %3864 = vmatpush1.xpose.msra.mxu0 0.0
    %3865 = vmatprep.subr.mxu0 0.0
    %3866 = vmatpush1.xpose.msra.mxu0 0.0
    %3867 = vmatprep.subr.mxu0 0.0
    %3868 = vmatpush1.xpose.msra.mxu0 0.0
    %3869 = vmatprep.subr.mxu0 0.0
    %3870 = vmatpush1.xpose.msra.mxu0 0.0
    %3871 = vmatprep.subr.mxu0 0.0
    %3872 = vmatpush1.xpose.msra.mxu0 0.0
    %3873 = vmatprep.subr.mxu0 0.0
    %3874 = vmatpush1.xpose.msra.mxu0 0.0
    %3875 = vmatprep.subr.mxu0 0.0
    %3876 = vmatpush1.xpose.msra.mxu0 0.0
    %3877 = vmatprep.subr.mxu0 0.0
    %3878 = vmatpush1.xpose.msra.mxu0 0.0
    %3879 = vmatprep.subr.mxu0 0.0
    %3880 = vmatpush1.xpose.msra.mxu0 0.0
    %3881 = vmatprep.subr.mxu0 0.0
    %3882 = vmatpush1.xpose.msra.mxu0 0.0
    %3883 = vmatprep.subr.mxu0 0.0
    %3884 = vmatpush1.xpose.msra.mxu0 0.0
    %3885 = vmatprep.subr.mxu0 0.0
    %3886 = vmatpush1.xpose.msra.mxu0 0.0
    %3887 = vmatprep.subr.mxu0 0.0
    %3888 = vmatpush1.xpose.msra.mxu0 0.0
    %3889 = vmatprep.subr.mxu0 0.0
    %3890 = vmatpush1.xpose.msra.mxu0 0.0
    %3891 = vmatprep.subr.mxu0 0.0
    %3892 = vmatpush1.xpose.msra.mxu0 0.0
    %3893 = vmatprep.subr.mxu0 0.0
    %3894 = vmatpush1.xpose.msra.mxu0 0.0
    %3895 = vmatprep.subr.mxu0 0.0
    %3896 = vmatpush1.xpose.msra.mxu0 0.0
    %3897 = vmatprep.subr.mxu0 0.0
    %3898 = vmatpush1.xpose.msra.mxu0 0.0
    %3899 = vmatprep.subr.mxu0 0.0
    %3900 = vmatpush1.xpose.msra.mxu0 0.0
    %3901 = vmatprep.subr.mxu0 0.0
    %3902 = vmatpush1.xpose.msra.mxu0 0.0
    %3903 = vmatprep.subr.mxu0 0.0
    %3904 = vmatpush1.xpose.msra.mxu0 0.0
    %3905 = vmatprep.subr.mxu0 0.0
    %3906 = vmatpush1.xpose.msra.mxu0 0.0
    %3907 = vmatprep.mubr.f32.mxu0 0.0
    %3908 = vmatmul.mubr.f32.gmra.mrb[0].mxu0 %v3835
    %v3909 = vpop.f32.mrb[0].mxu0
    %v3910 = vadd.f32 0.0, %v3909
    %v3911 = vpop.f32.mrb[0].mxu0
    %3912 = vmatprep.mubr.f32.mxu0 0.0
    %3913 = vmatmul.mubr.f32.gmra.mrb[0].mxu0 %v3837
    %v3914 = vpop.f32.mrb[0].mxu0
    %v3915 = vadd.f32 0.0, %v3914
    %v3916 = vpop.f32.mrb[0].mxu0
    %3917 = vdwg.mxu0
    %v3918 = vsel %vm172, %v3711, 0
    %v3920 = vsel %vm172, %v3713, 0
    %v3922 = vsel %vm172, %v3725, 0
    %v3924 = vsel %vm172, %v3727, 0
    %3926 = vmatprep.subr.mxu0 0.0
    %3927 = vmatpush1.xpose.msra.mxu0 %v3922
    %3928 = vmatprep.subr.mxu0 0.0
    %3929 = vmatpush1.xpose.msra.mxu0 %v3924
    %3930 = vmatprep.subr.mxu0 0.0
    %3931 = vmatpush1.xpose.msra.mxu0 0.0
    %3932 = vmatprep.subr.mxu0 0.0
    %3933 = vmatpush1.xpose.msra.mxu0 0.0
    %3934 = vmatprep.subr.mxu0 0.0
    %3935 = vmatpush1.xpose.msra.mxu0 0.0
    %3936 = vmatprep.subr.mxu0 0.0
    %3937 = vmatpush1.xpose.msra.mxu0 0.0
    %3938 = vmatprep.subr.mxu0 0.0
    %3939 = vmatpush1.xpose.msra.mxu0 0.0
    %3940 = vmatprep.subr.mxu0 0.0
    %3941 = vmatpush1.xpose.msra.mxu0 0.0
    %3942 = vmatprep.subr.mxu0 0.0
    %3943 = vmatpush1.xpose.msra.mxu0 0.0
    %3944 = vmatprep.subr.mxu0 0.0
    %3945 = vmatpush1.xpose.msra.mxu0 0.0
    %3946 = vmatprep.subr.mxu0 0.0
    %3947 = vmatpush1.xpose.msra.mxu0 0.0
    %3948 = vmatprep.subr.mxu0 0.0
    %3949 = vmatpush1.xpose.msra.mxu0 0.0
    %3950 = vmatprep.subr.mxu0 0.0
    %3951 = vmatpush1.xpose.msra.mxu0 0.0
    %3952 = vmatprep.subr.mxu0 0.0
    %3953 = vmatpush1.xpose.msra.mxu0 0.0
    %3954 = vmatprep.subr.mxu0 0.0
    %3955 = vmatpush1.xpose.msra.mxu0 0.0
    %3956 = vmatprep.subr.mxu0 0.0
    %3957 = vmatpush1.xpose.msra.mxu0 0.0
    %3958 = vmatprep.subr.mxu0 0.0
    %3959 = vmatpush1.xpose.msra.mxu0 0.0
    %3960 = vmatprep.subr.mxu0 0.0
    %3961 = vmatpush1.xpose.msra.mxu0 0.0
    %3962 = vmatprep.subr.mxu0 0.0
    %3963 = vmatpush1.xpose.msra.mxu0 0.0
    %3964 = vmatprep.subr.mxu0 0.0
    %3965 = vmatpush1.xpose.msra.mxu0 0.0
    %3966 = vmatprep.subr.mxu0 0.0
    %3967 = vmatpush1.xpose.msra.mxu0 0.0
    %3968 = vmatprep.subr.mxu0 0.0
    %3969 = vmatpush1.xpose.msra.mxu0 0.0
    %3970 = vmatprep.subr.mxu0 0.0
    %3971 = vmatpush1.xpose.msra.mxu0 0.0
    %3972 = vmatprep.subr.mxu0 0.0
    %3973 = vmatpush1.xpose.msra.mxu0 0.0
    %3974 = vmatprep.subr.mxu0 0.0
    %3975 = vmatpush1.xpose.msra.mxu0 0.0
    %3976 = vmatprep.subr.mxu0 0.0
    %3977 = vmatpush1.xpose.msra.mxu0 0.0
    %3978 = vmatprep.subr.mxu0 0.0
    %3979 = vmatpush1.xpose.msra.mxu0 0.0
    %3980 = vmatprep.subr.mxu0 0.0
    %3981 = vmatpush1.xpose.msra.mxu0 0.0
    %3982 = vmatprep.subr.mxu0 0.0
    %3983 = vmatpush1.xpose.msra.mxu0 0.0
    %3984 = vmatprep.subr.mxu0 0.0
    %3985 = vmatpush1.xpose.msra.mxu0 0.0
    %3986 = vmatprep.subr.mxu0 0.0
    %3987 = vmatpush1.xpose.msra.mxu0 0.0
    %3988 = vmatprep.subr.mxu0 0.0
    %3989 = vmatpush1.xpose.msra.mxu0 0.0
    %3990 = vmatprep.mubr.f32.mxu0 0.0
    %3991 = vmatmul.mubr.f32.gmra.mrb[0].mxu0 %v3918
    %v3992 = vpop.f32.mrb[0].mxu0
    %v3993 = vadd.f32 0.0, %v3992
    %v3994 = vpop.f32.mrb[0].mxu0
    %3995 = vmatprep.mubr.f32.mxu0 0.0
    %3996 = vmatmul.mubr.f32.gmra.mrb[0].mxu0 %v3920
    %v3997 = vpop.f32.mrb[0].mxu0
    %v3998 = vadd.f32 0.0, %v3997
    %v3999 = vpop.f32.mrb[0].mxu0
    %4000 = vdwg.mxu0
    %v4001 = vsel %vm172, %v3715, 0
    %v4003 = vsel %vm172, %v3717, 0
    %v4005 = vsel %vm172, %v3729, 0
    %v4007 = vsel %vm172, %v3731, 0
    %4009 = vmatprep.subr.mxu0 0.0
    %4010 = vmatpush1.xpose.msra.mxu0 %v4005
    %4011 = vmatprep.subr.mxu0 0.0
    %4012 = vmatpush1.xpose.msra.mxu0 %v4007
    %4013 = vmatprep.subr.mxu0 0.0
    %4014 = vmatpush1.xpose.msra.mxu0 0.0
    %4015 = vmatprep.subr.mxu0 0.0
    %4016 = vmatpush1.xpose.msra.mxu0 0.0
    %4017 = vmatprep.subr.mxu0 0.0
    %4018 = vmatpush1.xpose.msra.mxu0 0.0
    %4019 = vmatprep.subr.mxu0 0.0
    %4020 = vmatpush1.xpose.msra.mxu0 0.0
    %4021 = vmatprep.subr.mxu0 0.0
    %4022 = vmatpush1.xpose.msra.mxu0 0.0
    %4023 = vmatprep.subr.mxu0 0.0
    %4024 = vmatpush1.xpose.msra.mxu0 0.0
    %4025 = vmatprep.subr.mxu0 0.0
    %4026 = vmatpush1.xpose.msra.mxu0 0.0
    %4027 = vmatprep.subr.mxu0 0.0
    %4028 = vmatpush1.xpose.msra.mxu0 0.0
    %4029 = vmatprep.subr.mxu0 0.0
    %4030 = vmatpush1.xpose.msra.mxu0 0.0
    %4031 = vmatprep.subr.mxu0 0.0
    %4032 = vmatpush1.xpose.msra.mxu0 0.0
    %4033 = vmatprep.subr.mxu0 0.0
    %4034 = vmatpush1.xpose.msra.mxu0 0.0
    %4035 = vmatprep.subr.mxu0 0.0
    %4036 = vmatpush1.xpose.msra.mxu0 0.0
    %4037 = vmatprep.subr.mxu0 0.0
    %4038 = vmatpush1.xpose.msra.mxu0 0.0
    %4039 = vmatprep.subr.mxu0 0.0
    %4040 = vmatpush1.xpose.msra.mxu0 0.0
    %4041 = vmatprep.subr.mxu0 0.0
    %4042 = vmatpush1.xpose.msra.mxu0 0.0
    %4043 = vmatprep.subr.mxu0 0.0
    %4044 = vmatpush1.xpose.msra.mxu0 0.0
    %4045 = vmatprep.subr.mxu0 0.0
    %4046 = vmatpush1.xpose.msra.mxu0 0.0
    %4047 = vmatprep.subr.mxu0 0.0
    %4048 = vmatpush1.xpose.msra.mxu0 0.0
    %4049 = vmatprep.subr.mxu0 0.0
    %4050 = vmatpush1.xpose.msra.mxu0 0.0
    %4051 = vmatprep.subr.mxu0 0.0
    %4052 = vmatpush1.xpose.msra.mxu0 0.0
    %4053 = vmatprep.subr.mxu0 0.0
    %4054 = vmatpush1.xpose.msra.mxu0 0.0
    %4055 = vmatprep.subr.mxu0 0.0
    %4056 = vmatpush1.xpose.msra.mxu0 0.0
    %4057 = vmatprep.subr.mxu0 0.0
    %4058 = vmatpush1.xpose.msra.mxu0 0.0
    %4059 = vmatprep.subr.mxu0 0.0
    %4060 = vmatpush1.xpose.msra.mxu0 0.0
    %4061 = vmatprep.subr.mxu0 0.0
    %4062 = vmatpush1.xpose.msra.mxu0 0.0
    %4063 = vmatprep.subr.mxu0 0.0
    %4064 = vmatpush1.xpose.msra.mxu0 0.0
    %4065 = vmatprep.subr.mxu0 0.0
    %4066 = vmatpush1.xpose.msra.mxu0 0.0
    %4067 = vmatprep.subr.mxu0 0.0
    %4068 = vmatpush1.xpose.msra.mxu0 0.0
    %4069 = vmatprep.subr.mxu0 0.0
    %4070 = vmatpush1.xpose.msra.mxu0 0.0
    %4071 = vmatprep.subr.mxu0 0.0
    %4072 = vmatpush1.xpose.msra.mxu0 0.0
    %4073 = vmatprep.mubr.f32.mxu0 0.0
    %4074 = vmatmul.mubr.f32.gmra.mrb[0].mxu0 %v4001
    %v4075 = vpop.f32.mrb[0].mxu0
    %v4076 = vadd.f32 0.0, %v4075
    %v4077 = vpop.f32.mrb[0].mxu0
    %4078 = vmatprep.mubr.f32.mxu0 0.0
    %4079 = vmatmul.mubr.f32.gmra.mrb[0].mxu0 %v4003
    %v4080 = vpop.f32.mrb[0].mxu0
    %v4081 = vadd.f32 0.0, %v4080
    %v4082 = vpop.f32.mrb[0].mxu0
    %4083 = vdwg.mxu0
    %v4084 = vmul.f32 %v3827, 0.17677669
    %v4085 = vmul.f32 %v3832, 0.17677669
    %v4086 = vmul.f32 %v3910, 0.17677669
    %v4087 = vmul.f32 %v3915, 0.17677669
    %v4088 = vmul.f32 %v3993, 0.17677669
    %v4089 = vmul.f32 %v3998, 0.17677669
    %v4090 = vmul.f32 %v4076, 0.17677669
    %v4091 = vmul.f32 %v4081, 0.17677669
    %v4092 = vsel %vm934, %v4084, -inf
    %4093 = vmax.xlane.f32.xlu0 %v4092
    %v4094 = vpop.xlane.xlu0 %4093
    %v4095 = vsel %vm934, %v4085, -inf
    %4096 = vmax.xlane.f32.xlu0 %v4095
    %v4097 = vpop.xlane.xlu0 %4096
    %v4098 = vsel %vm934, %v4086, -inf
    %4099 = vmax.xlane.f32.xlu0 %v4098
    %v4100 = vpop.xlane.xlu0 %4099
    %v4101 = vsel %vm934, %v4087, -inf
    %4102 = vmax.xlane.f32.xlu0 %v4101
    %v4103 = vpop.xlane.xlu0 %4102
    %v4104 = vsel %vm934, %v4088, -inf
    %4105 = vmax.xlane.f32.xlu0 %v4104
    %v4106 = vpop.xlane.xlu0 %4105
    %v4107 = vsel %vm934, %v4089, -inf
    %4108 = vmax.xlane.f32.xlu0 %v4107
    %v4109 = vpop.xlane.xlu0 %4108
    %v4110 = vsel %vm934, %v4090, -inf
    %4111 = vmax.xlane.f32.xlu0 %v4110
    %v4112 = vpop.xlane.xlu0 %4111
    %v4113 = vsel %vm934, %v4091, -inf
    %4114 = vmax.xlane.f32.xlu0 %v4113
    %v4115 = vpop.xlane.xlu0 %4114
    %v4116 = vsub.f32 %v4084, %v4094
    %v4117 = vsub.f32 %v4085, %v4097
    %v4118 = vsub.f32 %v4086, %v4100
    %v4119 = vsub.f32 %v4087, %v4103
    %v4120 = vsub.f32 %v4088, %v4106
    %v4121 = vsub.f32 %v4089, %v4109
    %v4122 = vsub.f32 %v4090, %v4112
    %v4123 = vsub.f32 %v4091, %v4115
    %v4124 = vmul.f32 %v4116, 1.442695
    %v4125 = vpow.pop %v4124
    %v4126 = vmul.f32 %v4117, 1.442695
    %v4127 = vpow.pop %v4126
    %v4128 = vmul.f32 %v4118, 1.442695
    %v4129 = vpow.pop %v4128
    %v4130 = vmul.f32 %v4119, 1.442695
    %v4131 = vpow.pop %v4130
    %v4132 = vmul.f32 %v4120, 1.442695
    %v4133 = vpow.pop %v4132
    %v4134 = vmul.f32 %v4121, 1.442695
    %v4135 = vpow.pop %v4134
    %v4136 = vmul.f32 %v4122, 1.442695
    %v4137 = vpow.pop %v4136
    %v4138 = vmul.f32 %v4123, 1.442695
    %v4139 = vpow.pop %v4138
    %v4140 = vsel %vm934, %v4125, 0.0
    %4141 = vadd.xlane.f32.xlu0 %v4140
    %v4142 = vpop.xlane.xlu0 %4141
    %v4143 = vsel %vm934, %v4127, 0.0
    %4144 = vadd.xlane.f32.xlu0 %v4143
    %v4145 = vpop.xlane.xlu0 %4144
    %v4146 = vsel %vm934, %v4129, 0.0
    %4147 = vadd.xlane.f32.xlu0 %v4146
    %v4148 = vpop.xlane.xlu0 %4147
    %v4149 = vsel %vm934, %v4131, 0.0
    %4150 = vadd.xlane.f32.xlu0 %v4149
    %v4151 = vpop.xlane.xlu0 %4150
    %v4152 = vsel %vm934, %v4133, 0.0
    %4153 = vadd.xlane.f32.xlu0 %v4152
    %v4154 = vpop.xlane.xlu0 %4153
    %v4155 = vsel %vm934, %v4135, 0.0
    %4156 = vadd.xlane.f32.xlu0 %v4155
    %v4157 = vpop.xlane.xlu0 %4156
    %v4158 = vsel %vm934, %v4137, 0.0
    %4159 = vadd.xlane.f32.xlu0 %v4158
    %v4160 = vpop.xlane.xlu0 %4159
    %v4161 = vsel %vm934, %v4139, 0.0
    %4162 = vadd.xlane.f32.xlu0 %v4161
    %v4163 = vpop.xlane.xlu0 %4162
    %v4164 = vrcp.pop %v4142
    %v4165 = vrcp.pop %v4145
    %v4166 = vrcp.pop %v4148
    %v4167 = vrcp.pop %v4151
    %v4168 = vrcp.pop %v4154
    %v4169 = vrcp.pop %v4157
    %v4170 = vrcp.pop %v4160
    %v4171 = vrcp.pop %v4163
    %v4172 = vmul.f32 %v4125, %v4164
    %v4173 = vmul.f32 %v4127, %v4165
    %v4174 = vmul.f32 %v4129, %v4166
    %v4175 = vmul.f32 %v4131, %v4167
    %v4176 = vmul.f32 %v4133, %v4168
    %v4177 = vmul.f32 %v4135, %v4169
    %v4178 = vmul.f32 %v4137, %v4170
    %v4179 = vmul.f32 %v4139, %v4171
    %v4181 = vsel %vm934, %v4172, 0
    %v4184 = vsel %vm934, %v4173, 0
    %4186 = vmatprep.subr.mxu0 0.0
    %4187 = vmatpush1.msra.mxu0 %v2866
    %4188 = vmatprep.subr.mxu0 0.0
    %4189 = vmatpush1.msra.mxu0 %v2871
    %4190 = vmatprep.subr.mxu0 0.0
    %4191 = vmatpush1.msra.mxu0 0.0
    %4192 = vmatprep.subr.mxu0 0.0
    %4193 = vmatpush1.msra.mxu0 0.0
    %4194 = vmatprep.subr.mxu0 0.0
    %4195 = vmatpush1.msra.mxu0 0.0
    %4196 = vmatprep.subr.mxu0 0.0
    %4197 = vmatpush1.msra.mxu0 0.0
    %4198 = vmatprep.subr.mxu0 0.0
    %4199 = vmatpush1.msra.mxu0 0.0
    %4200 = vmatprep.subr.mxu0 0.0
    %4201 = vmatpush1.msra.mxu0 0.0
    %4202 = vmatprep.subr.mxu0 0.0
    %4203 = vmatpush1.msra.mxu0 0.0
    %4204 = vmatprep.subr.mxu0 0.0
    %4205 = vmatpush1.msra.mxu0 0.0
    %4206 = vmatprep.subr.mxu0 0.0
    %4207 = vmatpush1.msra.mxu0 0.0
    %4208 = vmatprep.subr.mxu0 0.0
    %4209 = vmatpush1.msra.mxu0 0.0
    %4210 = vmatprep.subr.mxu0 0.0
    %4211 = vmatpush1.msra.mxu0 0.0
    %4212 = vmatprep.subr.mxu0 0.0
    %4213 = vmatpush1.msra.mxu0 0.0
    %4214 = vmatprep.subr.mxu0 0.0
    %4215 = vmatpush1.msra.mxu0 0.0
    %4216 = vmatprep.subr.mxu0 0.0
    %4217 = vmatpush1.msra.mxu0 0.0
    %4218 = vmatprep.subr.mxu0 0.0
    %4219 = vmatpush1.msra.mxu0 0.0
    %4220 = vmatprep.subr.mxu0 0.0
    %4221 = vmatpush1.msra.mxu0 0.0
    %4222 = vmatprep.subr.mxu0 0.0
    %4223 = vmatpush1.msra.mxu0 0.0
    %4224 = vmatprep.subr.mxu0 0.0
    %4225 = vmatpush1.msra.mxu0 0.0
    %4226 = vmatprep.subr.mxu0 0.0
    %4227 = vmatpush1.msra.mxu0 0.0
    %4228 = vmatprep.subr.mxu0 0.0
    %4229 = vmatpush1.msra.mxu0 0.0
    %4230 = vmatprep.subr.mxu0 0.0
    %4231 = vmatpush1.msra.mxu0 0.0
    %4232 = vmatprep.subr.mxu0 0.0
    %4233 = vmatpush1.msra.mxu0 0.0
    %4234 = vmatprep.subr.mxu0 0.0
    %4235 = vmatpush1.msra.mxu0 0.0
    %4236 = vmatprep.subr.mxu0 0.0
    %4237 = vmatpush1.msra.mxu0 0.0
    %4238 = vmatprep.subr.mxu0 0.0
    %4239 = vmatpush1.msra.mxu0 0.0
    %4240 = vmatprep.subr.mxu0 0.0
    %4241 = vmatpush1.msra.mxu0 0.0
    %4242 = vmatprep.subr.mxu0 0.0
    %4243 = vmatpush1.msra.mxu0 0.0
    %4244 = vmatprep.subr.mxu0 0.0
    %4245 = vmatpush1.msra.mxu0 0.0
    %4246 = vmatprep.subr.mxu0 0.0
    %4247 = vmatpush1.msra.mxu0 0.0
    %4248 = vmatprep.subr.mxu0 0.0
    %4249 = vmatpush1.msra.mxu0 0.0
    %4250 = vmatprep.mubr.f32.mxu0 0.0
    %4251 = vmatmul.mubr.f32.gmra.mrb[0].mxu0 %v4181
    %v4252 = vpop.f32.mrb[0].mxu0
    %v4253 = vadd.f32 0.0, %v4252
    %v4254 = vpop.f32.mrb[0].mxu0
    %4255 = vmatprep.mubr.f32.mxu0 0.0
    %4256 = vmatmul.mubr.f32.gmra.mrb[0].mxu0 %v4184
    %v4257 = vpop.f32.mrb[0].mxu0
    %v4258 = vadd.f32 0.0, %v4257
    %v4259 = vpop.f32.mrb[0].mxu0
    %4260 = vdwg.mxu0
    %v4262 = vsel %vm934, %v4174, 0
    %v4265 = vsel %vm934, %v4175, 0
    %4267 = vmatprep.subr.mxu0 0.0
    %4268 = vmatpush1.msra.mxu0 %v3735
    %4269 = vmatprep.subr.mxu0 0.0
    %4270 = vmatpush1.msra.mxu0 %v3737
    %4271 = vmatprep.subr.mxu0 0.0
    %4272 = vmatpush1.msra.mxu0 0.0
    %4273 = vmatprep.subr.mxu0 0.0
    %4274 = vmatpush1.msra.mxu0 0.0
    %4275 = vmatprep.subr.mxu0 0.0
    %4276 = vmatpush1.msra.mxu0 0.0
    %4277 = vmatprep.subr.mxu0 0.0
    %4278 = vmatpush1.msra.mxu0 0.0
    %4279 = vmatprep.subr.mxu0 0.0
    %4280 = vmatpush1.msra.mxu0 0.0
    %4281 = vmatprep.subr.mxu0 0.0
    %4282 = vmatpush1.msra.mxu0 0.0
    %4283 = vmatprep.subr.mxu0 0.0
    %4284 = vmatpush1.msra.mxu0 0.0
    %4285 = vmatprep.subr.mxu0 0.0
    %4286 = vmatpush1.msra.mxu0 0.0
    %4287 = vmatprep.subr.mxu0 0.0
    %4288 = vmatpush1.msra.mxu0 0.0
    %4289 = vmatprep.subr.mxu0 0.0
    %4290 = vmatpush1.msra.mxu0 0.0
    %4291 = vmatprep.subr.mxu0 0.0
    %4292 = vmatpush1.msra.mxu0 0.0
    %4293 = vmatprep.subr.mxu0 0.0
    %4294 = vmatpush1.msra.mxu0 0.0
    %4295 = vmatprep.subr.mxu0 0.0
    %4296 = vmatpush1.msra.mxu0 0.0
    %4297 = vmatprep.subr.mxu0 0.0
    %4298 = vmatpush1.msra.mxu0 0.0
    %4299 = vmatprep.subr.mxu0 0.0
    %4300 = vmatpush1.msra.mxu0 0.0
    %4301 = vmatprep.subr.mxu0 0.0
    %4302 = vmatpush1.msra.mxu0 0.0
    %4303 = vmatprep.subr.mxu0 0.0
    %4304 = vmatpush1.msra.mxu0 0.0
    %4305 = vmatprep.subr.mxu0 0.0
    %4306 = vmatpush1.msra.mxu0 0.0
    %4307 = vmatprep.subr.mxu0 0.0
    %4308 = vmatpush1.msra.mxu0 0.0
    %4309 = vmatprep.subr.mxu0 0.0
    %4310 = vmatpush1.msra.mxu0 0.0
    %4311 = vmatprep.subr.mxu0 0.0
    %4312 = vmatpush1.msra.mxu0 0.0
    %4313 = vmatprep.subr.mxu0 0.0
    %4314 = vmatpush1.msra.mxu0 0.0
    %4315 = vmatprep.subr.mxu0 0.0
    %4316 = vmatpush1.msra.mxu0 0.0
    %4317 = vmatprep.subr.mxu0 0.0
    %4318 = vmatpush1.msra.mxu0 0.0
    %4319 = vmatprep.subr.mxu0 0.0
    %4320 = vmatpush1.msra.mxu0 0.0
    %4321 = vmatprep.subr.mxu0 0.0
    %4322 = vmatpush1.msra.mxu0 0.0
    %4323 = vmatprep.subr.mxu0 0.0
    %4324 = vmatpush1.msra.mxu0 0.0
    %4325 = vmatprep.subr.mxu0 0.0
    %4326 = vmatpush1.msra.mxu0 0.0
    %4327 = vmatprep.subr.mxu0 0.0
    %4328 = vmatpush1.msra.mxu0 0.0
    %4329 = vmatprep.subr.mxu0 0.0
    %4330 = vmatpush1.msra.mxu0 0.0
    %4331 = vmatprep.mubr.f32.mxu0 0.0
    %4332 = vmatmul.mubr.f32.gmra.mrb[0].mxu0 %v4262
    %v4333 = vpop.f32.mrb[0].mxu0
    %v4334 = vadd.f32 0.0, %v4333
    %v4335 = vpop.f32.mrb[0].mxu0
    %4336 = vmatprep.mubr.f32.mxu0 0.0
    %4337 = vmatmul.mubr.f32.gmra.mrb[0].mxu0 %v4265
    %v4338 = vpop.f32.mrb[0].mxu0
    %v4339 = vadd.f32 0.0, %v4338
    %v4340 = vpop.f32.mrb[0].mxu0
    %4341 = vdwg.mxu0
    %v4343 = vsel %vm934, %v4176, 0
    %v4346 = vsel %vm934, %v4177, 0
    %4348 = vmatprep.subr.mxu0 0.0
    %4349 = vmatpush1.msra.mxu0 %v3741
    %4350 = vmatprep.subr.mxu0 0.0
    %4351 = vmatpush1.msra.mxu0 %v3743
    %4352 = vmatprep.subr.mxu0 0.0
    %4353 = vmatpush1.msra.mxu0 0.0
    %4354 = vmatprep.subr.mxu0 0.0
    %4355 = vmatpush1.msra.mxu0 0.0
    %4356 = vmatprep.subr.mxu0 0.0
    %4357 = vmatpush1.msra.mxu0 0.0
    %4358 = vmatprep.subr.mxu0 0.0
    %4359 = vmatpush1.msra.mxu0 0.0
    %4360 = vmatprep.subr.mxu0 0.0
    %4361 = vmatpush1.msra.mxu0 0.0
    %4362 = vmatprep.subr.mxu0 0.0
    %4363 = vmatpush1.msra.mxu0 0.0
    %4364 = vmatprep.subr.mxu0 0.0
    %4365 = vmatpush1.msra.mxu0 0.0
    %4366 = vmatprep.subr.mxu0 0.0
    %4367 = vmatpush1.msra.mxu0 0.0
    %4368 = vmatprep.subr.mxu0 0.0
    %4369 = vmatpush1.msra.mxu0 0.0
    %4370 = vmatprep.subr.mxu0 0.0
    %4371 = vmatpush1.msra.mxu0 0.0
    %4372 = vmatprep.subr.mxu0 0.0
    %4373 = vmatpush1.msra.mxu0 0.0
    %4374 = vmatprep.subr.mxu0 0.0
    %4375 = vmatpush1.msra.mxu0 0.0
    %4376 = vmatprep.subr.mxu0 0.0
    %4377 = vmatpush1.msra.mxu0 0.0
    %4378 = vmatprep.subr.mxu0 0.0
    %4379 = vmatpush1.msra.mxu0 0.0
    %4380 = vmatprep.subr.mxu0 0.0
    %4381 = vmatpush1.msra.mxu0 0.0
    %4382 = vmatprep.subr.mxu0 0.0
    %4383 = vmatpush1.msra.mxu0 0.0
    %4384 = vmatprep.subr.mxu0 0.0
    %4385 = vmatpush1.msra.mxu0 0.0
    %4386 = vmatprep.subr.mxu0 0.0
    %4387 = vmatpush1.msra.mxu0 0.0
    %4388 = vmatprep.subr.mxu0 0.0
    %4389 = vmatpush1.msra.mxu0 0.0
    %4390 = vmatprep.subr.mxu0 0.0
    %4391 = vmatpush1.msra.mxu0 0.0
    %4392 = vmatprep.subr.mxu0 0.0
    %4393 = vmatpush1.msra.mxu0 0.0
    %4394 = vmatprep.subr.mxu0 0.0
    %4395 = vmatpush1.msra.mxu0 0.0
    %4396 = vmatprep.subr.mxu0 0.0
    %4397 = vmatpush1.msra.mxu0 0.0
    %4398 = vmatprep.subr.mxu0 0.0
    %4399 = vmatpush1.msra.mxu0 0.0
    %4400 = vmatprep.subr.mxu0 0.0
    %4401 = vmatpush1.msra.mxu0 0.0
    %4402 = vmatprep.subr.mxu0 0.0
    %4403 = vmatpush1.msra.mxu0 0.0
    %4404 = vmatprep.subr.mxu0 0.0
    %4405 = vmatpush1.msra.mxu0 0.0
    %4406 = vmatprep.subr.mxu0 0.0
    %4407 = vmatpush1.msra.mxu0 0.0
    %4408 = vmatprep.subr.mxu0 0.0
    %4409 = vmatpush1.msra.mxu0 0.0
    %4410 = vmatprep.subr.mxu0 0.0
    %4411 = vmatpush1.msra.mxu0 0.0
    %4412 = vmatprep.mubr.f32.mxu0 0.0
    %4413 = vmatmul.mubr.f32.gmra.mrb[0].mxu0 %v4343
    %v4414 = vpop.f32.mrb[0].mxu0
    %v4415 = vadd.f32 0.0, %v4414
    %v4416 = vpop.f32.mrb[0].mxu0
    %4417 = vmatprep.mubr.f32.mxu0 0.0
    %4418 = vmatmul.mubr.f32.gmra.mrb[0].mxu0 %v4346
    %v4419 = vpop.f32.mrb[0].mxu0
    %v4420 = vadd.f32 0.0, %v4419
    %v4421 = vpop.f32.mrb[0].mxu0
    %4422 = vdwg.mxu0
    %v4424 = vsel %vm934, %v4178, 0
    %v4427 = vsel %vm934, %v4179, 0
    %4429 = vmatprep.subr.mxu0 0.0
    %4430 = vmatpush1.msra.mxu0 %v3747
    %4431 = vmatprep.subr.mxu0 0.0
    %4432 = vmatpush1.msra.mxu0 %v3749
    %4433 = vmatprep.subr.mxu0 0.0
    %4434 = vmatpush1.msra.mxu0 0.0
    %4435 = vmatprep.subr.mxu0 0.0
    %4436 = vmatpush1.msra.mxu0 0.0
    %4437 = vmatprep.subr.mxu0 0.0
    %4438 = vmatpush1.msra.mxu0 0.0
    %4439 = vmatprep.subr.mxu0 0.0
    %4440 = vmatpush1.msra.mxu0 0.0
    %4441 = vmatprep.subr.mxu0 0.0
    %4442 = vmatpush1.msra.mxu0 0.0
    %4443 = vmatprep.subr.mxu0 0.0
    %4444 = vmatpush1.msra.mxu0 0.0
    %4445 = vmatprep.subr.mxu0 0.0
    %4446 = vmatpush1.msra.mxu0 0.0
    %4447 = vmatprep.subr.mxu0 0.0
    %4448 = vmatpush1.msra.mxu0 0.0
    %4449 = vmatprep.subr.mxu0 0.0
    %4450 = vmatpush1.msra.mxu0 0.0
    %4451 = vmatprep.subr.mxu0 0.0
    %4452 = vmatpush1.msra.mxu0 0.0
    %4453 = vmatprep.subr.mxu0 0.0
    %4454 = vmatpush1.msra.mxu0 0.0
    %4455 = vmatprep.subr.mxu0 0.0
    %4456 = vmatpush1.msra.mxu0 0.0
    %4457 = vmatprep.subr.mxu0 0.0
    %4458 = vmatpush1.msra.mxu0 0.0
    %4459 = vmatprep.subr.mxu0 0.0
    %4460 = vmatpush1.msra.mxu0 0.0
    %4461 = vmatprep.subr.mxu0 0.0
    %4462 = vmatpush1.msra.mxu0 0.0
    %4463 = vmatprep.subr.mxu0 0.0
    %4464 = vmatpush1.msra.mxu0 0.0
    %4465 = vmatprep.subr.mxu0 0.0
    %4466 = vmatpush1.msra.mxu0 0.0
    %4467 = vmatprep.subr.mxu0 0.0
    %4468 = vmatpush1.msra.mxu0 0.0
    %4469 = vmatprep.subr.mxu0 0.0
    %4470 = vmatpush1.msra.mxu0 0.0
    %4471 = vmatprep.subr.mxu0 0.0
    %4472 = vmatpush1.msra.mxu0 0.0
    %4473 = vmatprep.subr.mxu0 0.0
    %4474 = vmatpush1.msra.mxu0 0.0
    %4475 = vmatprep.subr.mxu0 0.0
    %4476 = vmatpush1.msra.mxu0 0.0
    %4477 = vmatprep.subr.mxu0 0.0
    %4478 = vmatpush1.msra.mxu0 0.0
    %4479 = vmatprep.subr.mxu0 0.0
    %4480 = vmatpush1.msra.mxu0 0.0
    %4481 = vmatprep.subr.mxu0 0.0
    %4482 = vmatpush1.msra.mxu0 0.0
    %4483 = vmatprep.subr.mxu0 0.0
    %4484 = vmatpush1.msra.mxu0 0.0
    %4485 = vmatprep.subr.mxu0 0.0
    %4486 = vmatpush1.msra.mxu0 0.0
    %4487 = vmatprep.subr.mxu0 0.0
    %4488 = vmatpush1.msra.mxu0 0.0
    %4489 = vmatprep.subr.mxu0 0.0
    %4490 = vmatpush1.msra.mxu0 0.0
    %4491 = vmatprep.subr.mxu0 0.0
    %4492 = vmatpush1.msra.mxu0 0.0
    %4493 = vmatprep.mubr.f32.mxu0 0.0
    %4494 = vmatmul.mubr.f32.gmra.mrb[0].mxu0 %v4424
    %v4495 = vpop.f32.mrb[0].mxu0
    %v4496 = vadd.f32 0.0, %v4495
    %v4497 = vpop.f32.mrb[0].mxu0
    %4498 = vmatprep.mubr.f32.mxu0 0.0
    %4499 = vmatmul.mubr.f32.gmra.mrb[0].mxu0 %v4427
    %v4500 = vpop.f32.mrb[0].mxu0
    %v4501 = vadd.f32 0.0, %v4500
    %v4502 = vpop.f32.mrb[0].mxu0
    %4503 = vdwg.mxu0
    %4506 = vrot.lane.b32.xlu0 %v4334, 32
    %v4507 = vpop.permute.xlu0 %4506
    %4508 = vrot.lane.b32.xlu0 %v4339, 32
    %v4509 = vpop.permute.xlu0 %4508
    %4514 = vrot.lane.b32.xlu0 %v4415, 64
    %v4515 = vpop.permute.xlu0 %4514
    %4516 = vrot.lane.b32.xlu0 %v4420, 64
    %v4517 = vpop.permute.xlu0 %4516
    %4522 = vrot.lane.b32.xlu0 %v4496, 96
    %v4523 = vpop.permute.xlu0 %4522
    %4524 = vrot.lane.b32.xlu0 %v4501, 96
    %v4525 = vpop.permute.xlu0 %4524
    %v4528 = vsel %vm172, %v4253, %v4507
    %v4529 = vsel %vm172, %v4258, %v4509
    %v4530 = vsel %vm1373, %v4528, %v4515
    %v4531 = vsel %vm1373, %v4529, %v4517
    %v4532 = vsel %vm1376, %v4530, %v4523
    %v4533 = vsel %vm1376, %v4531, %v4525
    %s4534 = scalar_lea.vmem [#allocation10], 128
    %v4535 = vld [vmem:[%s4534] sm:$0xff]
    %v4536 = vld [vmem:[%s4534 + $0x8] sm:$0xff]
    %v4537 = vld [vmem:[%s4534 + $0x10] sm:$0xff]
    %v4538 = vld [vmem:[%s4534 + $0x18] sm:$0xff]
    %v4539 = vld [vmem:[%s4534 + $0x20] sm:$0xff]
    %v4540 = vld [vmem:[%s4534 + $0x28] sm:$0xff]
    %v4541 = vld [vmem:[%s4534 + $0x30] sm:$0xff]
    %v4542 = vld [vmem:[%s4534 + $0x38] sm:$0xff]
    %v4543 = vld [vmem:[%s4534 + $0x40] sm:$0xff]
    %v4544 = vld [vmem:[%s4534 + $0x48] sm:$0xff]
    %v4545 = vld [vmem:[%s4534 + $0x50] sm:$0xff]
    %v4546 = vld [vmem:[%s4534 + $0x58] sm:$0xff]
    %v4547 = vld [vmem:[%s4534 + $0x60] sm:$0xff]
    %v4548 = vld [vmem:[%s4534 + $0x68] sm:$0xff]
    %v4549 = vld [vmem:[%s4534 + $0x70] sm:$0xff]
    %v4550 = vld [vmem:[%s4534 + $0x78] sm:$0xff]
    %4551 = vmatprep.subr.mxu0 0.0
    %4552 = vmatpush1.msra.mxu0 %v4535
    %4553 = vmatprep.subr.mxu0 0.0
    %4554 = vmatpush1.msra.mxu0 %v4536
    %4555 = vmatprep.subr.mxu0 0.0
    %4556 = vmatpush1.msra.mxu0 %v4537
    %4557 = vmatprep.subr.mxu0 0.0
    %4558 = vmatpush1.msra.mxu0 %v4538
    %4559 = vmatprep.subr.mxu0 0.0
    %4560 = vmatpush1.msra.mxu0 %v4539
    %4561 = vmatprep.subr.mxu0 0.0
    %4562 = vmatpush1.msra.mxu0 %v4540
    %4563 = vmatprep.subr.mxu0 0.0
    %4564 = vmatpush1.msra.mxu0 %v4541
    %4565 = vmatprep.subr.mxu0 0.0
    %4566 = vmatpush1.msra.mxu0 %v4542
    %4567 = vmatprep.subr.mxu0 0.0
    %4568 = vmatpush1.msra.mxu0 %v4543
    %4569 = vmatprep.subr.mxu0 0.0
    %4570 = vmatpush1.msra.mxu0 %v4544
    %4571 = vmatprep.subr.mxu0 0.0
    %4572 = vmatpush1.msra.mxu0 %v4545
    %4573 = vmatprep.subr.mxu0 0.0
    %4574 = vmatpush1.msra.mxu0 %v4546
    %4575 = vmatprep.subr.mxu0 0.0
    %4576 = vmatpush1.msra.mxu0 %v4547
    %4577 = vmatprep.subr.mxu0 0.0
    %4578 = vmatpush1.msra.mxu0 %v4548
    %4579 = vmatprep.subr.mxu0 0.0
    %4580 = vmatpush1.msra.mxu0 %v4549
    %4581 = vmatprep.subr.mxu0 0.0
    %4582 = vmatpush1.msra.mxu0 %v4550
    %4583 = vmatprep.subr.mxu0 0.0
    %4584 = vmatpush1.msra.mxu0 0.0
    %4585 = vmatprep.subr.mxu0 0.0
    %4586 = vmatpush1.msra.mxu0 0.0
    %4587 = vmatprep.subr.mxu0 0.0
    %4588 = vmatpush1.msra.mxu0 0.0
    %4589 = vmatprep.subr.mxu0 0.0
    %4590 = vmatpush1.msra.mxu0 0.0
    %4591 = vmatprep.subr.mxu0 0.0
    %4592 = vmatpush1.msra.mxu0 0.0
    %4593 = vmatprep.subr.mxu0 0.0
    %4594 = vmatpush1.msra.mxu0 0.0
    %4595 = vmatprep.subr.mxu0 0.0
    %4596 = vmatpush1.msra.mxu0 0.0
    %4597 = vmatprep.subr.mxu0 0.0
    %4598 = vmatpush1.msra.mxu0 0.0
    %4599 = vmatprep.subr.mxu0 0.0
    %4600 = vmatpush1.msra.mxu0 0.0
    %4601 = vmatprep.subr.mxu0 0.0
    %4602 = vmatpush1.msra.mxu0 0.0
    %4603 = vmatprep.subr.mxu0 0.0
    %4604 = vmatpush1.msra.mxu0 0.0
    %4605 = vmatprep.subr.mxu0 0.0
    %4606 = vmatpush1.msra.mxu0 0.0
    %4607 = vmatprep.subr.mxu0 0.0
    %4608 = vmatpush1.msra.mxu0 0.0
    %4609 = vmatprep.subr.mxu0 0.0
    %4610 = vmatpush1.msra.mxu0 0.0
    %4611 = vmatprep.subr.mxu0 0.0
    %4612 = vmatpush1.msra.mxu0 0.0
    %4613 = vmatprep.subr.mxu0 0.0
    %4614 = vmatpush1.msra.mxu0 0.0
    %4615 = vmatprep.mubr.f32.mxu0 0.0
    %4616 = vmatmul.mubr.f32.gmra.mrb[0].mxu0 %v3702
    %v4617 = vpop.f32.mrb[0].mxu0
    %v4618 = vadd.f32 0.0, %v4617
    %v4619 = vpop.f32.mrb[0].mxu0
    %4620 = vmatprep.mubr.f32.mxu0 0.0
    %4621 = vmatmul.mubr.f32.gmra.mrb[0].mxu0 %v3703
    %v4622 = vpop.f32.mrb[0].mxu0
    %v4623 = vadd.f32 0.0, %v4622
    %v4624 = vpop.f32.mrb[0].mxu0
    %4625 = vmatprep.mubr.f32.mxu0 0.0
    %4626 = vmatmul.mubr.f32.gmra.mrb[0].mxu0 %v4532
    %v4627 = vpop.f32.mrb[0].mxu0
    %v4628 = vadd.f32 0.0, %v4627
    %v4629 = vpop.f32.mrb[0].mxu0
    %4630 = vmatprep.mubr.f32.mxu0 0.0
    %4631 = vmatmul.mubr.f32.gmra.mrb[0].mxu0 %v4533
    %v4632 = vpop.f32.mrb[0].mxu0
    %v4633 = vadd.f32 0.0, %v4632
    %v4634 = vpop.f32.mrb[0].mxu0
    %4635 = vdwg.mxu0
    %v4636 = vadd.f32 %v2610, %v4618
    %v4637 = vadd.f32 %v2611, %v4623
    %v4638 = vadd.f32 %v2612, %v4628
    %v4639 = vadd.f32 %v2613, %v4633
    %v4640 = vld [vmem:[%s7 + $0x1] sm:$0x1]
    %v4641 = vlaneseq
    %v4642 = vshrl.u32 %v4641, 7
    %v4643 = vsub.s32 0, %v4642
    %v4644 = vrot.slane %v4640, %v4643
    %v4645 = vmul.f32 %v4636, %v4644
    %v4646 = vmul.f32 %v4637, %v4644
    %v4647 = vmul.f32 %v4638, %v4644
    %v4648 = vmul.f32 %v4639, %v4644
    %v4649 = vld [vmem:[%s8 + $0x1] sm:$0x1]
    %v4650 = vlaneseq
    %v4651 = vshrl.u32 %v4650, 7
    %v4652 = vsub.s32 0, %v4651
    %v4653 = vrot.slane %v4649, %v4652
    %v4654 = vadd.f32 %v4645, %v4653
    %v4655 = vadd.f32 %v4646, %v4653
    %v4656 = vadd.f32 %v4647, %v4653
    %v4657 = vadd.f32 %v4648, %v4653
    %s4658 = scalar_lea.vmem [#allocation11], 256
    %v4659 = vld [vmem:[%s4658] sm:$0xff]
    %v4660 = vld [vmem:[%s4658 + $0x8] sm:$0xff]
    %v4661 = vld [vmem:[%s4658 + $0x10] sm:$0xff]
    %v4662 = vld [vmem:[%s4658 + $0x18] sm:$0xff]
    %v4663 = vld [vmem:[%s4658 + $0x20] sm:$0xff]
    %v4664 = vld [vmem:[%s4658 + $0x28] sm:$0xff]
    %v4665 = vld [vmem:[%s4658 + $0x30] sm:$0xff]
    %v4666 = vld [vmem:[%s4658 + $0x38] sm:$0xff]
    %v4667 = vld [vmem:[%s4658 + $0x40] sm:$0xff]
    %v4668 = vld [vmem:[%s4658 + $0x48] sm:$0xff]
    %v4669 = vld [vmem:[%s4658 + $0x50] sm:$0xff]
    %v4670 = vld [vmem:[%s4658 + $0x58] sm:$0xff]
    %v4671 = vld [vmem:[%s4658 + $0x60] sm:$0xff]
    %v4672 = vld [vmem:[%s4658 + $0x68] sm:$0xff]
    %v4673 = vld [vmem:[%s4658 + $0x70] sm:$0xff]
    %v4674 = vld [vmem:[%s4658 + $0x78] sm:$0xff]
    %v4675 = vld [vmem:[%s4658 + $0x80] sm:$0xff]
    %v4676 = vld [vmem:[%s4658 + $0x88] sm:$0xff]
    %v4677 = vld [vmem:[%s4658 + $0x90] sm:$0xff]
    %v4678 = vld [vmem:[%s4658 + $0x98] sm:$0xff]
    %v4679 = vld [vmem:[%s4658 + $0xa0] sm:$0xff]
    %v4680 = vld [vmem:[%s4658 + $0xa8] sm:$0xff]
    %v4681 = vld [vmem:[%s4658 + $0xb0] sm:$0xff]
    %v4682 = vld [vmem:[%s4658 + $0xb8] sm:$0xff]
    %v4683 = vld [vmem:[%s4658 + $0xc0] sm:$0xff]
    %v4684 = vld [vmem:[%s4658 + $0xc8] sm:$0xff]
    %v4685 = vld [vmem:[%s4658 + $0xd0] sm:$0xff]
    %v4686 = vld [vmem:[%s4658 + $0xd8] sm:$0xff]
    %v4687 = vld [vmem:[%s4658 + $0xe0] sm:$0xff]
    %v4688 = vld [vmem:[%s4658 + $0xe8] sm:$0xff]
    %v4689 = vld [vmem:[%s4658 + $0xf0] sm:$0xff]
    %v4690 = vld [vmem:[%s4658 + $0xf8] sm:$0xff]
    %4691 = vmatprep.subr.mxu0 %v4660
    %4692 = vmatpush1.msra.mxu0 %v4659
    %4693 = vmatprep.subr.mxu0 %v4662
    %4694 = vmatpush1.msra.mxu0 %v4661
    %4695 = vmatprep.subr.mxu0 %v4664
    %4696 = vmatpush1.msra.mxu0 %v4663
    %4697 = vmatprep.subr.mxu0 %v4666
    %4698 = vmatpush1.msra.mxu0 %v4665
    %4699 = vmatprep.subr.mxu0 %v4668
    %4700 = vmatpush1.msra.mxu0 %v4667
    %4701 = vmatprep.subr.mxu0 %v4670
    %4702 = vmatpush1.msra.mxu0 %v4669
    %4703 = vmatprep.subr.mxu0 %v4672
    %4704 = vmatpush1.msra.mxu0 %v4671
    %4705 = vmatprep.subr.mxu0 %v4674
    %4706 = vmatpush1.msra.mxu0 %v4673
    %4707 = vmatprep.subr.mxu0 %v4676
    %4708 = vmatpush1.msra.mxu0 %v4675
    %4709 = vmatprep.subr.mxu0 %v4678
    %4710 = vmatpush1.msra.mxu0 %v4677
    %4711 = vmatprep.subr.mxu0 %v4680
    %4712 = vmatpush1.msra.mxu0 %v4679
    %4713 = vmatprep.subr.mxu0 %v4682
    %4714 = vmatpush1.msra.mxu0 %v4681
    %4715 = vmatprep.subr.mxu0 %v4684
    %4716 = vmatpush1.msra.mxu0 %v4683
    %4717 = vmatprep.subr.mxu0 %v4686
    %4718 = vmatpush1.msra.mxu0 %v4685
    %4719 = vmatprep.subr.mxu0 %v4688
    %4720 = vmatpush1.msra.mxu0 %v4687
    %4721 = vmatprep.subr.mxu0 %v4690
    %4722 = vmatpush1.msra.mxu0 %v4689
    %4723 = vmatprep.subr.mxu0 0.0
    %4724 = vmatpush1.msra.mxu0 0.0
    %4725 = vmatprep.subr.mxu0 0.0
    %4726 = vmatpush1.msra.mxu0 0.0
    %4727 = vmatprep.subr.mxu0 0.0
    %4728 = vmatpush1.msra.mxu0 0.0
    %4729 = vmatprep.subr.mxu0 0.0
    %4730 = vmatpush1.msra.mxu0 0.0
    %4731 = vmatprep.subr.mxu0 0.0
    %4732 = vmatpush1.msra.mxu0 0.0
    %4733 = vmatprep.subr.mxu0 0.0
    %4734 = vmatpush1.msra.mxu0 0.0
    %4735 = vmatprep.subr.mxu0 0.0
    %4736 = vmatpush1.msra.mxu0 0.0
    %4737 = vmatprep.subr.mxu0 0.0
    %4738 = vmatpush1.msra.mxu0 0.0
    %4739 = vmatprep.subr.mxu0 0.0
    %4740 = vmatpush1.msra.mxu0 0.0
    %4741 = vmatprep.subr.mxu0 0.0
    %4742 = vmatpush1.msra.mxu0 0.0
    %4743 = vmatprep.subr.mxu0 0.0
    %4744 = vmatpush1.msra.mxu0 0.0
    %4745 = vmatprep.subr.mxu0 0.0
    %4746 = vmatpush1.msra.mxu0 0.0
    %4747 = vmatprep.subr.mxu0 0.0
    %4748 = vmatpush1.msra.mxu0 0.0
    %4749 = vmatprep.subr.mxu0 0.0
    %4750 = vmatpush1.msra.mxu0 0.0
    %4751 = vmatprep.subr.mxu0 0.0
    %4752 = vmatpush1.msra.mxu0 0.0
    %4753 = vmatprep.subr.mxu0 0.0
    %4754 = vmatpush1.msra.mxu0 0.0
    %4755 = vmatprep.mubr.f32.mxu0 0.0
    %4756 = vmatmul.mubr.f32.gmra.mrb[0].mxu0 %v4654
    %v4757 = vpop.f32.mrb[0].mxu0
    %v4758 = vadd.f32 0.0, %v4757
    %v4759 = vpop.f32.mrb[0].mxu0
    %v4760 = vadd.f32 0.0, %v4759
    %4761 = vmatprep.mubr.f32.mxu0 0.0
    %4762 = vmatmul.mubr.f32.gmra.mrb[0].mxu0 %v4655
    %v4763 = vpop.f32.mrb[0].mxu0
    %v4764 = vadd.f32 0.0, %v4763
    %v4765 = vpop.f32.mrb[0].mxu0
    %v4766 = vadd.f32 0.0, %v4765
    %4767 = vmatprep.mubr.f32.mxu0 0.0
    %4768 = vmatmul.mubr.f32.gmra.mrb[0].mxu0 %v4656
    %v4769 = vpop.f32.mrb[0].mxu0
    %v4770 = vadd.f32 0.0, %v4769
    %v4771 = vpop.f32.mrb[0].mxu0
    %v4772 = vadd.f32 0.0, %v4771
    %4773 = vmatprep.mubr.f32.mxu0 0.0
    %4774 = vmatmul.mubr.f32.gmra.mrb[0].mxu0 %v4657
    %v4775 = vpop.f32.mrb[0].mxu0
    %v4776 = vadd.f32 0.0, %v4775
    %v4777 = vpop.f32.mrb[0].mxu0
    %v4778 = vadd.f32 0.0, %v4777
    %4779 = vdwg.mxu0
    %v4780 = vmul.f32 %v4760, 0.5
    %v4781 = vmul.f32 %v4766, 0.5
    %v4782 = vmul.f32 %v4772, 0.5
    %v4783 = vmul.f32 %v4778, 0.5
    %v4784 = vmul.f32 %v4760, 0.044715
    %v4785 = vmul.f32 %v4766, 0.044715
    %v4786 = vmul.f32 %v4772, 0.044715
    %v4787 = vmul.f32 %v4778, 0.044715
    %v4788 = vmul.f32 %v4784, %v4760
    %v4789 = vmul.f32 %v4785, %v4766
    %v4790 = vmul.f32 %v4786, %v4772
    %v4791 = vmul.f32 %v4787, %v4778
    %v4792 = vmul.f32 %v4788, %v4760
    %v4793 = vmul.f32 %v4789, %v4766
    %v4794 = vmul.f32 %v4790, %v4772
    %v4795 = vmul.f32 %v4791, %v4778
    %v4796 = vadd.f32 %v4760, %v4792
    %v4797 = vadd.f32 %v4766, %v4793
    %v4798 = vadd.f32 %v4772, %v4794
    %v4799 = vadd.f32 %v4778, %v4795
    %v4800 = vmul.f32 %v4796, 0.7978846
    %v4801 = vmul.f32 %v4797, 0.7978846
    %v4802 = vmul.f32 %v4798, 0.7978846
    %v4803 = vmul.f32 %v4799, 0.7978846
    %v4804 = vtanh.pop %v4800
    %v4805 = vtanh.pop %v4801
    %v4806 = vtanh.pop %v4802
    %v4807 = vtanh.pop %v4803
    %v4808 = vadd.f32 %v4804, 1.0
    %v4809 = vadd.f32 %v4805, 1.0
    %v4810 = vadd.f32 %v4806, 1.0
    %v4811 = vadd.f32 %v4807, 1.0
    %v4812 = vmul.f32 %v4780, %v4808
    %v4813 = vmul.f32 %v4781, %v4809
    %v4814 = vmul.f32 %v4782, %v4810
    %v4815 = vmul.f32 %v4783, %v4811
    %v4816 = vmul.f32 %v4758, %v4812
    %v4817 = vmul.f32 %v4764, %v4813
    %v4818 = vmul.f32 %v4770, %v4814
    %v4819 = vmul.f32 %v4776, %v4815
    %s4820 = scalar_lea.vmem [#allocation13], 128
    %v4821 = vld [vmem:[%s4820] sm:$0xff]
    %v4822 = vld [vmem:[%s4820 + $0x8] sm:$0xff]
    %v4823 = vld [vmem:[%s4820 + $0x10] sm:$0xff]
    %v4824 = vld [vmem:[%s4820 + $0x18] sm:$0xff]
    %v4825 = vld [vmem:[%s4820 + $0x20] sm:$0xff]
    %v4826 = vld [vmem:[%s4820 + $0x28] sm:$0xff]
    %v4827 = vld [vmem:[%s4820 + $0x30] sm:$0xff]
    %v4828 = vld [vmem:[%s4820 + $0x38] sm:$0xff]
    %v4829 = vld [vmem:[%s4820 + $0x40] sm:$0xff]
    %v4830 = vld [vmem:[%s4820 + $0x48] sm:$0xff]
    %v4831 = vld [vmem:[%s4820 + $0x50] sm:$0xff]
    %v4832 = vld [vmem:[%s4820 + $0x58] sm:$0xff]
    %v4833 = vld [vmem:[%s4820 + $0x60] sm:$0xff]
    %v4834 = vld [vmem:[%s4820 + $0x68] sm:$0xff]
    %v4835 = vld [vmem:[%s4820 + $0x70] sm:$0xff]
    %v4836 = vld [vmem:[%s4820 + $0x78] sm:$0xff]
    %4837 = vmatprep.subr.mxu0 0.0
    %4838 = vmatpush1.msra.mxu0 %v4821
    %4839 = vmatprep.subr.mxu0 0.0
    %4840 = vmatpush1.msra.mxu0 %v4822
    %4841 = vmatprep.subr.mxu0 0.0
    %4842 = vmatpush1.msra.mxu0 %v4823
    %4843 = vmatprep.subr.mxu0 0.0
    %4844 = vmatpush1.msra.mxu0 %v4824
    %4845 = vmatprep.subr.mxu0 0.0
    %4846 = vmatpush1.msra.mxu0 %v4825
    %4847 = vmatprep.subr.mxu0 0.0
    %4848 = vmatpush1.msra.mxu0 %v4826
    %4849 = vmatprep.subr.mxu0 0.0
    %4850 = vmatpush1.msra.mxu0 %v4827
    %4851 = vmatprep.subr.mxu0 0.0
    %4852 = vmatpush1.msra.mxu0 %v4828
    %4853 = vmatprep.subr.mxu0 0.0
    %4854 = vmatpush1.msra.mxu0 %v4829
    %4855 = vmatprep.subr.mxu0 0.0
    %4856 = vmatpush1.msra.mxu0 %v4830
    %4857 = vmatprep.subr.mxu0 0.0
    %4858 = vmatpush1.msra.mxu0 %v4831
    %4859 = vmatprep.subr.mxu0 0.0
    %4860 = vmatpush1.msra.mxu0 %v4832
    %4861 = vmatprep.subr.mxu0 0.0
    %4862 = vmatpush1.msra.mxu0 %v4833
    %4863 = vmatprep.subr.mxu0 0.0
    %4864 = vmatpush1.msra.mxu0 %v4834
    %4865 = vmatprep.subr.mxu0 0.0
    %4866 = vmatpush1.msra.mxu0 %v4835
    %4867 = vmatprep.subr.mxu0 0.0
    %4868 = vmatpush1.msra.mxu0 %v4836
    %4869 = vmatprep.subr.mxu0 0.0
    %4870 = vmatpush1.msra.mxu0 0.0
    %4871 = vmatprep.subr.mxu0 0.0
    %4872 = vmatpush1.msra.mxu0 0.0
    %4873 = vmatprep.subr.mxu0 0.0
    %4874 = vmatpush1.msra.mxu0 0.0
    %4875 = vmatprep.subr.mxu0 0.0
    %4876 = vmatpush1.msra.mxu0 0.0
    %4877 = vmatprep.subr.mxu0 0.0
    %4878 = vmatpush1.msra.mxu0 0.0
    %4879 = vmatprep.subr.mxu0 0.0
    %4880 = vmatpush1.msra.mxu0 0.0
    %4881 = vmatprep.subr.mxu0 0.0
    %4882 = vmatpush1.msra.mxu0 0.0
    %4883 = vmatprep.subr.mxu0 0.0
    %4884 = vmatpush1.msra.mxu0 0.0
    %4885 = vmatprep.subr.mxu0 0.0
    %4886 = vmatpush1.msra.mxu0 0.0
    %4887 = vmatprep.subr.mxu0 0.0
    %4888 = vmatpush1.msra.mxu0 0.0
    %4889 = vmatprep.subr.mxu0 0.0
    %4890 = vmatpush1.msra.mxu0 0.0
    %4891 = vmatprep.subr.mxu0 0.0
    %4892 = vmatpush1.msra.mxu0 0.0
    %4893 = vmatprep.subr.mxu0 0.0
    %4894 = vmatpush1.msra.mxu0 0.0
    %4895 = vmatprep.subr.mxu0 0.0
    %4896 = vmatpush1.msra.mxu0 0.0
    %4897 = vmatprep.subr.mxu0 0.0
    %4898 = vmatpush1.msra.mxu0 0.0
    %4899 = vmatprep.subr.mxu0 0.0
    %4900 = vmatpush1.msra.mxu0 0.0
    %4901 = vmatprep.mubr.f32.mxu0 0.0
    %4902 = vmatmul.mubr.f32.gmra.mrb[0].mxu0 %v4816
    %v4903 = vpop.f32.mrb[0].mxu0
    %v4904 = vadd.f32 0.0, %v4903
    %v4905 = vpop.f32.mrb[0].mxu0
    %4906 = vmatprep.mubr.f32.mxu0 0.0
    %4907 = vmatmul.mubr.f32.gmra.mrb[0].mxu0 %v4817
    %v4908 = vpop.f32.mrb[0].mxu0
    %v4909 = vadd.f32 0.0, %v4908
    %v4910 = vpop.f32.mrb[0].mxu0
    %4911 = vmatprep.mubr.f32.mxu0 0.0
    %4912 = vmatmul.mubr.f32.gmra.mrb[0].mxu0 %v4818
    %v4913 = vpop.f32.mrb[0].mxu0
    %v4914 = vadd.f32 0.0, %v4913
    %v4915 = vpop.f32.mrb[0].mxu0
    %4916 = vmatprep.mubr.f32.mxu0 0.0
    %4917 = vmatmul.mubr.f32.gmra.mrb[0].mxu0 %v4819
    %v4918 = vpop.f32.mrb[0].mxu0
    %v4919 = vadd.f32 0.0, %v4918
    %v4920 = vpop.f32.mrb[0].mxu0
    %4921 = vdwg.mxu0
    %v4922 = vadd.f32 %v4654, %v4904
    %v4923 = vadd.f32 %v4655, %v4909
    %v4924 = vadd.f32 %v4656, %v4914
    %v4925 = vadd.f32 %v4657, %v4919
    %v4926 = vld [vmem:[%s11] sm:$0x1]
    %v4927 = vmul.f32 %v4922, %v4922
    %v4928 = vmul.f32 %v4923, %v4923
    %v4929 = vmul.f32 %v4924, %v4924
    %v4930 = vmul.f32 %v4925, %v4925
    %4931 = vadd.xlane.f32.xlu0 %v4927
    %v4932 = vpop.xlane.xlu0 %4931
    %4933 = vadd.xlane.f32.xlu0 %v4928
    %v4934 = vpop.xlane.xlu0 %4933
    %4935 = vadd.xlane.f32.xlu0 %v4929
    %v4936 = vpop.xlane.xlu0 %4935
    %4937 = vadd.xlane.f32.xlu0 %v4930
    %v4938 = vpop.xlane.xlu0 %4937
    %v4939 = vmul.f32 %v4932, %v283
    %v4940 = vmul.f32 %v4934, %v283
    %v4941 = vmul.f32 %v4936, %v283
    %v4942 = vmul.f32 %v4938, %v283
    %v4943 = vadd.f32 %v4939, 1e-05
    %v4944 = vadd.f32 %v4940, 1e-05
    %v4945 = vadd.f32 %v4941, 1e-05
    %v4946 = vadd.f32 %v4942, 1e-05
    %v4947 = vrsqrt.pop %v4943
    %v4948 = vrsqrt.pop %v4944
    %v4949 = vrsqrt.pop %v4945
    %v4950 = vrsqrt.pop %v4946
    %v4951 = vmul.f32 %v4922, %v4947
    %v4952 = vmul.f32 %v4923, %v4948
    %v4953 = vmul.f32 %v4924, %v4949
    %v4954 = vmul.f32 %v4925, %v4950
    %v4956 = vlaneseq
    %v4957 = vshrl.u32 %v4956, 7
    %v4958 = vsub.s32 0, %v4957
    %v4959 = vrot.slane %v4926, %v4958
    %v4961 = vmul.f32 %v4951, %v4959
    %v4962 = vmul.f32 %v4952, %v4959
    %v4963 = vmul.f32 %v4953, %v4959
    %v4964 = vmul.f32 %v4954, %v4959
    %v4965 = vld [vmem:[#allocation14] sm:$0xff]
    %v4966 = vld [vmem:[#allocation14 + $0x8] sm:$0xff]
    %v4967 = vld [vmem:[#allocation14 + $0x10] sm:$0xff]
    %v4968 = vld [vmem:[#allocation14 + $0x18] sm:$0xff]
    %v4969 = vld [vmem:[#allocation14 + $0x20] sm:$0xff]
    %v4970 = vld [vmem:[#allocation14 + $0x28] sm:$0xff]
    %v4971 = vld [vmem:[#allocation14 + $0x30] sm:$0xff]
    %v4972 = vld [vmem:[#allocation14 + $0x38] sm:$0xff]
    %v4973 = vld [vmem:[#allocation14 + $0x40] sm:$0xff]
    %v4974 = vld [vmem:[#allocation14 + $0x48] sm:$0xff]
    %v4975 = vld [vmem:[#allocation14 + $0x50] sm:$0xff]
    %v4976 = vld [vmem:[#allocation14 + $0x58] sm:$0xff]
    %v4977 = vld [vmem:[#allocation14 + $0x60] sm:$0xff]
    %v4978 = vld [vmem:[#allocation14 + $0x68] sm:$0xff]
    %v4979 = vld [vmem:[#allocation14 + $0x70] sm:$0xff]
    %v4980 = vld [vmem:[#allocation14 + $0x78] sm:$0xff]
    %v4981 = vld [vmem:[#allocation14 + $0x80] sm:$0xff]
    %v4982 = vld [vmem:[#allocation14 + $0x88] sm:$0xff]
    %v4983 = vld [vmem:[#allocation14 + $0x90] sm:$0xff]
    %v4984 = vld [vmem:[#allocation14 + $0x98] sm:$0xff]
    %v4985 = vld [vmem:[#allocation14 + $0xa0] sm:$0xff]
    %v4986 = vld [vmem:[#allocation14 + $0xa8] sm:$0xff]
    %v4987 = vld [vmem:[#allocation14 + $0xb0] sm:$0xff]
    %v4988 = vld [vmem:[#allocation14 + $0xb8] sm:$0xff]
    %v4989 = vld [vmem:[#allocation14 + $0xc0] sm:$0xff]
    %v4990 = vld [vmem:[#allocation14 + $0xc8] sm:$0xff]
    %v4991 = vld [vmem:[#allocation14 + $0xd0] sm:$0xff]
    %v4992 = vld [vmem:[#allocation14 + $0xd8] sm:$0xff]
    %v4993 = vld [vmem:[#allocation14 + $0xe0] sm:$0xff]
    %v4994 = vld [vmem:[#allocation14 + $0xe8] sm:$0xff]
    %v4995 = vld [vmem:[#allocation14 + $0xf0] sm:$0xff]
    %v4996 = vld [vmem:[#allocation14 + $0xf8] sm:$0xff]
    %v4997 = vld [vmem:[#allocation14 + $0x100] sm:$0xff]
    %v4998 = vld [vmem:[#allocation14 + $0x108] sm:$0xff]
    %v4999 = vld [vmem:[#allocation14 + $0x110] sm:$0xff]
    %v5000 = vld [vmem:[#allocation14 + $0x118] sm:$0xff]
    %v5001 = vld [vmem:[#allocation14 + $0x120] sm:$0xff]
    %v5002 = vld [vmem:[#allocation14 + $0x128] sm:$0xff]
    %v5003 = vld [vmem:[#allocation14 + $0x130] sm:$0xff]
    %v5004 = vld [vmem:[#allocation14 + $0x138] sm:$0xff]
    %v5005 = vld [vmem:[#allocation14 + $0x140] sm:$0xff]
    %v5006 = vld [vmem:[#allocation14 + $0x148] sm:$0xff]
    %v5007 = vld [vmem:[#allocation14 + $0x150] sm:$0xff]
    %v5008 = vld [vmem:[#allocation14 + $0x158] sm:$0xff]
    %v5009 = vld [vmem:[#allocation14 + $0x160] sm:$0xff]
    %v5010 = vld [vmem:[#allocation14 + $0x168] sm:$0xff]
    %v5011 = vld [vmem:[#allocation14 + $0x170] sm:$0xff]
    %v5012 = vld [vmem:[#allocation14 + $0x178] sm:$0xff]
    %5013 = vmatprep.subr.mxu0 %v4966
    %5014 = vmatpush1.msra.mxu0 %v4965
    %5015 = vmatprep.subr.mxu0 %v4969
    %5016 = vmatpush1.msra.mxu0 %v4968
    %5017 = vmatprep.subr.mxu0 %v4972
    %5018 = vmatpush1.msra.mxu0 %v4971
    %5019 = vmatprep.subr.mxu0 %v4975
    %5020 = vmatpush1.msra.mxu0 %v4974
    %5021 = vmatprep.subr.mxu0 %v4978
    %5022 = vmatpush1.msra.mxu0 %v4977
    %5023 = vmatprep.subr.mxu0 %v4981
    %5024 = vmatpush1.msra.mxu0 %v4980
    %5025 = vmatprep.subr.mxu0 %v4984
    %5026 = vmatpush1.msra.mxu0 %v4983
    %5027 = vmatprep.subr.mxu0 %v4987
    %5028 = vmatpush1.msra.mxu0 %v4986
    %5029 = vmatprep.subr.mxu0 %v4990
    %5030 = vmatpush1.msra.mxu0 %v4989
    %5031 = vmatprep.subr.mxu0 %v4993
    %5032 = vmatpush1.msra.mxu0 %v4992
    %5033 = vmatprep.subr.mxu0 %v4996
    %5034 = vmatpush1.msra.mxu0 %v4995
    %5035 = vmatprep.subr.mxu0 %v4999
    %5036 = vmatpush1.msra.mxu0 %v4998
    %5037 = vmatprep.subr.mxu0 %v5002
    %5038 = vmatpush1.msra.mxu0 %v5001
    %5039 = vmatprep.subr.mxu0 %v5005
    %5040 = vmatpush1.msra.mxu0 %v5004
    %5041 = vmatprep.subr.mxu0 %v5008
    %5042 = vmatpush1.msra.mxu0 %v5007
    %5043 = vmatprep.subr.mxu0 %v5011
    %5044 = vmatpush1.msra.mxu0 %v5010
    %5045 = vmatprep.subr.mxu0 0.0
    %5046 = vmatpush1.msra.mxu0 0.0
    %5047 = vmatprep.subr.mxu0 0.0
    %5048 = vmatpush1.msra.mxu0 0.0
    %5049 = vmatprep.subr.mxu0 0.0
    %5050 = vmatpush1.msra.mxu0 0.0
    %5051 = vmatprep.subr.mxu0 0.0
    %5052 = vmatpush1.msra.mxu0 0.0
    %5053 = vmatprep.subr.mxu0 0.0
    %5054 = vmatpush1.msra.mxu0 0.0
    %5055 = vmatprep.subr.mxu0 0.0
    %5056 = vmatpush1.msra.mxu0 0.0
    %5057 = vmatprep.subr.mxu0 0.0
    %5058 = vmatpush1.msra.mxu0 0.0
    %5059 = vmatprep.subr.mxu0 0.0
    %5060 = vmatpush1.msra.mxu0 0.0
    %5061 = vmatprep.subr.mxu0 0.0
    %5062 = vmatpush1.msra.mxu0 0.0
    %5063 = vmatprep.subr.mxu0 0.0
    %5064 = vmatpush1.msra.mxu0 0.0
    %5065 = vmatprep.subr.mxu0 0.0
    %5066 = vmatpush1.msra.mxu0 0.0
    %5067 = vmatprep.subr.mxu0 0.0
    %5068 = vmatpush1.msra.mxu0 0.0
    %5069 = vmatprep.subr.mxu0 0.0
    %5070 = vmatpush1.msra.mxu0 0.0
    %5071 = vmatprep.subr.mxu0 0.0
    %5072 = vmatpush1.msra.mxu0 0.0
    %5073 = vmatprep.subr.mxu0 0.0
    %5074 = vmatpush1.msra.mxu0 0.0
    %5075 = vmatprep.subr.mxu0 0.0
    %5076 = vmatpush1.msra.mxu0 0.0
    %5077 = vmatprep.mubr.f32.mxu0 0.0
    %5078 = vmatmul.mubr.f32.gmra.mrb[0].mxu0 %v4961
    %v5079 = vpop.f32.mrb[0].mxu0
    %v5080 = vadd.f32 0.0, %v5079
    %v5081 = vpop.f32.mrb[0].mxu0
    %v5082 = vadd.f32 0.0, %v5081
    %5083 = vmatprep.mubr.f32.mxu0 0.0
    %5084 = vmatmul.mubr.f32.gmra.mrb[0].mxu0 %v4962
    %v5085 = vpop.f32.mrb[0].mxu0
    %v5086 = vadd.f32 0.0, %v5085
    %v5087 = vpop.f32.mrb[0].mxu0
    %v5088 = vadd.f32 0.0, %v5087
    %5089 = vmatprep.mubr.f32.mxu0 0.0
    %5090 = vmatmul.mubr.f32.gmra.mrb[0].mxu0 %v4963
    %v5091 = vpop.f32.mrb[0].mxu0
    %v5092 = vadd.f32 0.0, %v5091
    %v5093 = vpop.f32.mrb[0].mxu0
    %v5094 = vadd.f32 0.0, %v5093
    %5095 = vmatprep.mubr.f32.mxu0 0.0
    %5096 = vmatmul.mubr.f32.gmra.mrb[0].mxu0 %v4964
    %v5097 = vpop.f32.mrb[0].mxu0
    %v5098 = vadd.f32 0.0, %v5097
    %v5099 = vpop.f32.mrb[0].mxu0
    %v5100 = vadd.f32 0.0, %v5099
    %5101 = vdwg.mxu0
    %5102 = vmatprep.subr.mxu0 0.0
    %5103 = vmatpush1.msra.mxu0 %v4967
    %5104 = vmatprep.subr.mxu0 0.0
    %5105 = vmatpush1.msra.mxu0 %v4970
    %5106 = vmatprep.subr.mxu0 0.0
    %5107 = vmatpush1.msra.mxu0 %v4973
    %5108 = vmatprep.subr.mxu0 0.0
    %5109 = vmatpush1.msra.mxu0 %v4976
    %5110 = vmatprep.subr.mxu0 0.0
    %5111 = vmatpush1.msra.mxu0 %v4979
    %5112 = vmatprep.subr.mxu0 0.0
    %5113 = vmatpush1.msra.mxu0 %v4982
    %5114 = vmatprep.subr.mxu0 0.0
    %5115 = vmatpush1.msra.mxu0 %v4985
    %5116 = vmatprep.subr.mxu0 0.0
    %5117 = vmatpush1.msra.mxu0 %v4988
    %5118 = vmatprep.subr.mxu0 0.0
    %5119 = vmatpush1.msra.mxu0 %v4991
    %5120 = vmatprep.subr.mxu0 0.0
    %5121 = vmatpush1.msra.mxu0 %v4994
    %5122 = vmatprep.subr.mxu0 0.0
    %5123 = vmatpush1.msra.mxu0 %v4997
    %5124 = vmatprep.subr.mxu0 0.0
    %5125 = vmatpush1.msra.mxu0 %v5000
    %5126 = vmatprep.subr.mxu0 0.0
    %5127 = vmatpush1.msra.mxu0 %v5003
    %5128 = vmatprep.subr.mxu0 0.0
    %5129 = vmatpush1.msra.mxu0 %v5006
    %5130 = vmatprep.subr.mxu0 0.0
    %5131 = vmatpush1.msra.mxu0 %v5009
    %5132 = vmatprep.subr.mxu0 0.0
    %5133 = vmatpush1.msra.mxu0 %v5012
    %5134 = vmatprep.subr.mxu0 0.0
    %5135 = vmatpush1.msra.mxu0 0.0
    %5136 = vmatprep.subr.mxu0 0.0
    %5137 = vmatpush1.msra.mxu0 0.0
    %5138 = vmatprep.subr.mxu0 0.0
    %5139 = vmatpush1.msra.mxu0 0.0
    %5140 = vmatprep.subr.mxu0 0.0
    %5141 = vmatpush1.msra.mxu0 0.0
    %5142 = vmatprep.subr.mxu0 0.0
    %5143 = vmatpush1.msra.mxu0 0.0
    %5144 = vmatprep.subr.mxu0 0.0
    %5145 = vmatpush1.msra.mxu0 0.0
    %5146 = vmatprep.subr.mxu0 0.0
    %5147 = vmatpush1.msra.mxu0 0.0
    %5148 = vmatprep.subr.mxu0 0.0
    %5149 = vmatpush1.msra.mxu0 0.0
    %5150 = vmatprep.subr.mxu0 0.0
    %5151 = vmatpush1.msra.mxu0 0.0
    %5152 = vmatprep.subr.mxu0 0.0
    %5153 = vmatpush1.msra.mxu0 0.0
    %5154 = vmatprep.subr.mxu0 0.0
    %5155 = vmatpush1.msra.mxu0 0.0
    %5156 = vmatprep.subr.mxu0 0.0
    %5157 = vmatpush1.msra.mxu0 0.0
    %5158 = vmatprep.subr.mxu0 0.0
    %5159 = vmatpush1.msra.mxu0 0.0
    %5160 = vmatprep.subr.mxu0 0.0
    %5161 = vmatpush1.msra.mxu0 0.0
    %5162 = vmatprep.subr.mxu0 0.0
    %5163 = vmatpush1.msra.mxu0 0.0
    %5164 = vmatprep.subr.mxu0 0.0
    %5165 = vmatpush1.msra.mxu0 0.0
    %5166 = vmatprep.mubr.f32.mxu0 0.0
    %5167 = vmatmul.mubr.f32.gmra.mrb[0].mxu0 %v4961
    %v5168 = vpop.f32.mrb[0].mxu0
    %v5169 = vadd.f32 0.0, %v5168
    %v5170 = vpop.f32.mrb[0].mxu0
    %5171 = vmatprep.mubr.f32.mxu0 0.0
    %5172 = vmatmul.mubr.f32.gmra.mrb[0].mxu0 %v4962
    %v5173 = vpop.f32.mrb[0].mxu0
    %v5174 = vadd.f32 0.0, %v5173
    %v5175 = vpop.f32.mrb[0].mxu0
    %5176 = vmatprep.mubr.f32.mxu0 0.0
    %5177 = vmatmul.mubr.f32.gmra.mrb[0].mxu0 %v4963
    %v5178 = vpop.f32.mrb[0].mxu0
    %v5179 = vadd.f32 0.0, %v5178
    %v5180 = vpop.f32.mrb[0].mxu0
    %5181 = vmatprep.mubr.f32.mxu0 0.0
    %5182 = vmatmul.mubr.f32.gmra.mrb[0].mxu0 %v4964
    %v5183 = vpop.f32.mrb[0].mxu0
    %v5184 = vadd.f32 0.0, %v5183
    %v5185 = vpop.f32.mrb[0].mxu0
    %5186 = vdwg.mxu0
    %v5187 = vld [vmem:[%s13] sm:$0x1]
    %v5188 = vlaneseq
    %v5189 = vshrl.u32 %v5188, 7
    %v5190 = vsub.s32 0, %v5189
    %v5191 = vrot.slane %v5187, %v5190
    %v5192 = vadd.f32 %v5080, %v5191
    %v5193 = vadd.f32 %v5086, %v5191
    %5194 = vst [vmem:[#allocation16] sm:$0xff] %v5192
    %5195 = vst [vmem:[#allocation16 + $0x8] sm:$0xff] %v5193
    %v5196 = vld [vmem:[%s13 + $0x1] sm:$0x1]
    %v5197 = vlaneseq
    %v5198 = vshrl.u32 %v5197, 7
    %v5199 = vsub.s32 0, %v5198
    %v5200 = vrot.slane %v5196, %v5199
    %v5201 = vadd.f32 %v5082, %v5200
    %v5202 = vadd.f32 %v5088, %v5200
    %s5203 = scalar_lea.vmem [#allocation16], 16
    %5204 = vst [vmem:[%s5203] sm:$0xff] %v5201
    %5205 = vst [vmem:[%s5203 + $0x8] sm:$0xff] %v5202
    %v5206 = vld [vmem:[%s13 + $0x2] sm:$0x1]
    %v5207 = vlaneseq
    %v5208 = vshrl.u32 %v5207, 7
    %v5209 = vsub.s32 0, %v5208
    %v5210 = vrot.slane %v5206, %v5209
    %v5211 = vadd.f32 %v5169, %v5210
    %v5212 = vadd.f32 %v5174, %v5210
    %s5213 = scalar_lea.vmem [#allocation16], 32
    %5214 = vst [vmem:[%s5213] sm:$0xff] %v5211
    %5215 = vst [vmem:[%s5213 + $0x8] sm:$0xff] %v5212
    %v5216 = vld [vmem:[%s13] sm:$0x1]
    %v5217 = vlaneseq
    %v5218 = vshrl.u32 %v5217, 7
    %v5219 = vsub.s32 0, %v5218
    %v5220 = vrot.slane %v5216, %v5219
    %v5221 = vadd.f32 %v5092, %v5220
    %v5222 = vadd.f32 %v5098, %v5220
    %s5223 = scalar_lea.vmem [#allocation16], 48
    %5224 = vst [vmem:[%s5223] sm:$0xff] %v5221
    %5225 = vst [vmem:[%s5223 + $0x8] sm:$0xff] %v5222
    %v5226 = vld [vmem:[%s13 + $0x1] sm:$0x1]
    %v5227 = vlaneseq
    %v5228 = vshrl.u32 %v5227, 7
    %v5229 = vsub.s32 0, %v5228
    %v5230 = vrot.slane %v5226, %v5229
    %v5231 = vadd.f32 %v5094, %v5230
    %v5232 = vadd.f32 %v5100, %v5230
    %s5233 = scalar_lea.vmem [#allocation16], 64
    %5234 = vst [vmem:[%s5233] sm:$0xff] %v5231
    %5235 = vst [vmem:[%s5233 + $0x8] sm:$0xff] %v5232
    %v5236 = vld [vmem:[%s13 + $0x2] sm:$0x1]
    %v5237 = vlaneseq
    %v5238 = vshrl.u32 %v5237, 7
    %v5239 = vsub.s32 0, %v5238
    %v5240 = vrot.slane %v5236, %v5239
    %v5241 = vadd.f32 %v5179, %v5240
    %v5242 = vadd.f32 %v5184, %v5240
    %s5243 = scalar_lea.vmem [#allocation16], 80
    %5244 = vst [vmem:[%s5243] sm:$0xff] %v5241
    %5245 = vst [vmem:[%s5243 + $0x8] sm:$0xff] %v5242
    // Predicated region
    $region90: #{tpu_custom_call.1} parent=1 // pred_check
      _
    $region91: #{tpu_custom_call.1} parent=1 // pred_check_branch
      %5247 = sbr.rel (0) target = $region93
    $region92: #{tpu_custom_call.1} parent=1 // pred_region
      %s5249 = ssub.s32 1536, 1536
      %5250 = vsyncadd [#allocation4], %s5249
      %s5251 = sshll.u32 [#allocation16], 4
      %s5252 = int_to_ptr.vmem [resolvable:$true] %s5251
      %5257 = dma.vmem_to_hbm [thread:$0]  %s5252, 1536, %s14, [#allocation4], 128, 128, 8
    $region93: #{tpu_custom_call.1} parent=1 // pred_fallthru
      _
    // Predicated region
    $region94: #{tpu_custom_call.1} parent=1 // pred_check
      _
    $region95: #{tpu_custom_call.1} parent=1 // pred_check_branch
      %5259 = sbr.rel (0) target = $region97
    $region96: #{tpu_custom_call.1} parent=1 // pred_region
      %5260 = dma.done [#allocation4], 1536
    $region97: #{tpu_custom_call.1} parent=1 // pred_fallthru
      _
    %5261 = vsyncpa [#allocation3], 1
    %5262 = vsyncpa [#allocation6], 1
    %5263 = vsyncpa [#allocation9], 1
    %5264 = vsyncpa [#allocation12], 1
    %5265 = vsyncpa [#allocation15], 1
    %5266 = vsyncpa [#allocation4], 1

</llo_original>
